<compile_context>
chip_gen: v7x
topology: tpu7x:2x2x1
jax: 0.10.0
libtpu: 0.0.40
codegen_flags: <defaults>
</compile_context>

<pallas_src>
import jax
import jax.numpy as jnp
from jax import lax
from jax.experimental import pallas as pl
from jax.experimental.pallas import tpu as pltpu


# ---------------------------------------------------------------------------
# small helpers
# ---------------------------------------------------------------------------
def _lrelu(x, slope=0.1):           # nn.LeakyReLU(0.1) in the original module
    return jnp.where(x > 0, x, slope * x)


def _conv_sum(slabs, wb_ref, base):
    """sum_i slabs[i] @ wb_ref[base + i], accumulated in f32 on the MXU."""
    acc = None
    for i, s in enumerate(slabs):
        t = jnp.dot(s, wb_ref[base + i], preferred_element_type=jnp.float32)
        acc = t if acc is None else acc + t
    return acc


# ---------------------------------------------------------------------------
# The single fused kernel (processes one image per grid step)
# ---------------------------------------------------------------------------
def _convnet_kernel(x_ref, wb1, b1, wb2, b2, wb3, b3, wb4, b4, wb5, b5,
                    wf1, bf1, wf2, bf2, o_ref, a1_ref, p2_ref, p3_ref):
    # ---- conv1 (3x3, 1->4) + LeakyReLU: (32, 32) -> (30, 30*4) -------------
    xv = x_ref[0]                                                # (32, 32)
    y1 = _conv_sum([xv[di:di + 30, :] for di in range(3)], wb1, 0)
    a1_ref[...] = _lrelu(y1 + b1[...])                           # (30, 120)

    # ---- conv (3x3) + LeakyReLU + fused 2x2 max-pool ------------------------
    def conv3x3_pool(src_ref, wb_ref, b_ref, ho2):
        m = None
        for r in (0, 1):                       # row parity of the pool window
            slabs = [src_ref[pl.ds(di + r, ho2, stride=2), :] for di in range(3)]
            for par in (0, 1):                 # column parity (folded into wb)
                acc = _conv_sum(slabs, wb_ref, par * 3)
                m = acc if m is None else jnp.maximum(m, acc)
        # bias-add & LeakyReLU commute with max -> apply once after pooling
        return _lrelu(m + b_ref[...])

    p2_ref[...] = conv3x3_pool(a1_ref, wb2, b2, 14)              # (14, 14*8)
    p3_ref[...] = conv3x3_pool(p2_ref, wb3, b3, 6)               # (6, 6*16)
    p4 = conv3x3_pool(p3_ref, wb4, b4, 2)                        # (2, 2*32)

    # ---- conv5 (2x2, 32->64) + LeakyReLU: (2, 64) -> (1, 64) == flatten -----
    y5 = _conv_sum([p4[di:di + 1, :] for di in range(2)], wb5, 0)
    a5 = _lrelu(y5 + b5[...])                                    # (1, 64)

    # ---- fc1 + LeakyReLU, fc2 + log_softmax ---------------------------------
    h = _lrelu(jnp.dot(a5, wf1[...], preferred_element_type=jnp.float32) + bf1[...])
    logits = jnp.dot(h, wf2[...], preferred_element_type=jnp.float32) + bf2[...]
    mx = jnp.max(logits, axis=-1, keepdims=True)
    lse = mx + jnp.log(jnp.sum(jnp.exp(logits - mx), axis=-1, keepdims=True))
    o_ref[0] = (logits - lse).astype(o_ref.dtype)                # (1, 2)


# ---------------------------------------------------------------------------
# One-time (wrapper-side) parameter transforms: banded conv weight matrices
# ---------------------------------------------------------------------------
def _banded_conv_weights(w, w_in, pool):
    """w: (Cout, Cin, kh, kw) PyTorch layout.

    Returns (n_par*kh, w_in*Cin, wo_out*Cout) matmul weights for the 2-D
    (H, W*C) activation layout; for pooled layers (n_par=2) the two halves hold
    the even / odd output-column parities so column max-pooling becomes a
    plain elementwise max inside the kernel.
    """
    cout, cin, kh, kw = w.shape
    wk = jnp.transpose(w.astype(jnp.float32), (2, 3, 1, 0))      # (kh, kw, cin, cout)
    wo = w_in - kw + 1
    step = 2 if pool else 1
    wo_out = wo // step
    jp = jnp.arange(w_in)[:, None]                               # input spatial col
    mats = []
    for par in range(2 if pool else 1):
        jout = step * jnp.arange(wo_out)[None, :] + par          # conv output col
        dj = jp - jout                                           # (w_in, wo_out)
        valid = (dj >= 0) & (dj < kw)
        g = wk[:, jnp.clip(dj, 0, kw - 1)]                       # (kh, w_in, wo_out, cin, cout)
        g = jnp.where(valid[None, :, :, None, None], g, 0.0)
        mats.append(jnp.transpose(g, (0, 1, 3, 2, 4))
                    .reshape(kh, w_in * cin, wo_out * cout))
    return jnp.concatenate(mats, axis=0)


def _bias_row(b, wo_out):
    return jnp.tile(b.astype(jnp.float32), wo_out).reshape(1, -1)


def prepare_params(params):
    """Turn PyTorch-layout parameters into kernel-ready (banded) arrays."""
    w1, c1 = params["conv1"]; w2, c2 = params["conv2"]; w3, c3 = params["conv3"]
    w4, c4 = params["conv4"]; w5, c5 = params["conv5"]
    wf1, bf1 = params["fc1"]; wf2, bf2 = params["fc2"]
    return dict(
        wb1=_banded_conv_weights(w1, 32, False), b1=_bias_row(c1, 30),
        wb2=_banded_conv_weights(w2, 30, True),  b2=_bias_row(c2, 14),
        wb3=_banded_conv_weights(w3, 14, True),  b3=_bias_row(c3, 6),
        wb4=_banded_conv_weights(w4, 6,  True),  b4=_bias_row(c4, 2),
        wb5=_banded_conv_weights(w5, 2,  False), b5=_bias_row(c5, 1),
        wf1=wf1.astype(jnp.float32), bf1=bf1.reshape(1, -1).astype(jnp.float32),
        wf2=wf2.astype(jnp.float32), bf2=bf2.reshape(1, -1).astype(jnp.float32),
    )


def _const_spec(arr):
    nd = arr.ndim
    return pl.BlockSpec(arr.shape, lambda i, _nd=nd: (0,) * _nd)


# ---------------------------------------------------------------------------
# Forward pass: one pallas_call over the batch
# ---------------------------------------------------------------------------
@jax.jit
def forward(kp, x_nchw):
    n = x_nchw.shape[0]
    x = x_nchw[:, 0, :, :].astype(jnp.float32)       # (N, 32, 32): W on the lane dim
    args = (x, kp["wb1"], kp["b1"], kp["wb2"], kp["b2"], kp["wb3"], kp["b3"],
            kp["wb4"], kp["b4"], kp["wb5"], kp["b5"],
            kp["wf1"], kp["bf1"], kp["wf2"], kp["bf2"])
    in_specs = [pl.BlockSpec((1, 32, 32), lambda i: (i, 0, 0))]
    in_specs += [_const_spec(a) for a in args[1:]]
    out = pl.pallas_call(
        _convnet_kernel,
        out_shape=jax.ShapeDtypeStruct((n, 1, 2), jnp.float32),
        grid=(n,),
        in_specs=in_specs,
        out_specs=pl.BlockSpec((1, 1, 2), lambda i: (i, 0, 0)),
        scratch_shapes=[pltpu.VMEM((30, 120), jnp.float32),   # conv1 activation
                        pltpu.VMEM((14, 112), jnp.float32),   # pool(conv2)
                        pltpu.VMEM((6, 96), jnp.float32)],    # pool(conv3)
        compiler_params=pltpu.CompilerParams(
            dimension_semantics=("parallel",)),
    )(*args)
    return out.reshape(n, 2)


# ---------------------------------------------------------------------------
# Parameters (deterministic, PyTorch-style uniform fan-in init)
# ---------------------------------------------------------------------------
def init_params(key):
    def conv_p(k, cout, cin, ksz):
        k1, k2 = jax.random.split(k)
        bound = 1.0 / (cin * ksz * ksz) ** 0.5
        w = jax.random.uniform(k1, (cout, cin, ksz, ksz), jnp.float32, -bound, bound)
        b = jax.random.uniform(k2, (cout,), jnp.float32, -bound, bound)
        return w, b

    def fc_p(k, fin, fout):
        k1, k2 = jax.random.split(k)
        bound = 1.0 / fin ** 0.5
        w = jax.random.uniform(k1, (fin, fout), jnp.float32, -bound, bound)
        b = jax.random.uniform(k2, (fout,), jnp.float32, -bound, bound)
        return w, b

    keys = jax.random.split(key, 7)
    return {
        "conv1": conv_p(keys[0], 4, 1, 3),
        "conv2": conv_p(keys[1], 8, 4, 3),
        "conv3": conv_p(keys[2], 16, 8, 3),
        "conv4": conv_p(keys[3], 32, 16, 3),
        "conv5": conv_p(keys[4], 64, 32, 2),
        # conv6 exists in __init__ but is unused in forward; omitted.
        "fc1": fc_p(keys[5], 64, 32),
        "fc2": fc_p(keys[6], 32, 2),
    }


# ---------------------------------------------------------------------------
# Pure-JAX reference (for correctness checking of the fused kernel)
# ---------------------------------------------------------------------------
def forward_reference(params, x_nchw):
    x = x_nchw.astype(jnp.float32)

    def conv(x, w, b):
        y = lax.conv_general_dilated(
            x, w, (1, 1), "VALID",
            dimension_numbers=("NCHW", "OIHW", "NCHW"),
            precision=lax.Precision.HIGHEST)
        return _lrelu(y + b[None, :, None, None])

    def pool(x):
        return lax.reduce_window(x, -jnp.inf, lax.max,
                                 (1, 1, 2, 2), (1, 1, 2, 2), "VALID")

    x = conv(x, *params["conv1"])
    x = conv(x, *params["conv2"]); x = pool(x)
    x = conv(x, *params["conv3"]); x = pool(x)
    x = conv(x, *params["conv4"]); x = pool(x)
    x = conv(x, *params["conv5"])
    x = x.reshape(x.shape[0], -1)
    x = _lrelu(jnp.dot(x, params["fc1"][0], precision=lax.Precision.HIGHEST)
               + params["fc1"][1])
    x = jnp.dot(x, params["fc2"][0], precision=lax.Precision.HIGHEST) + params["fc2"][1]
    return jax.nn.log_softmax(x, axis=1)


if __name__ == "__main__":
    key = jax.random.PRNGKey(0)
    pkey, xkey = jax.random.split(key)
    params = init_params(pkey)
    kparams = prepare_params(params)

    # Input must be (N, 1, 32, 32) so conv5's output is spatially 1x1 (fc1 expects 64).
    x = jax.random.normal(xkey, (2, 1, 32, 32), dtype=jnp.float32)

    out = jax.block_until_ready(forward(kparams, x))
    assert out.shape == (2, 2)

    # log_softmax rows must exponentiate-sum to 1
    assert bool(jnp.allclose(jnp.sum(jnp.exp(out), axis=1), 1.0, atol=1e-4))

    # compare against the pure-JAX reference implementation
    ref = jax.block_until_ready(forward_reference(params, x))
    err = float(jnp.max(jnp.abs(out - ref)))
    assert err < 3e-2, f"mismatch vs reference: {err}"

    print("KERNEL_OK")
</pallas_src>

<mosaic_0001>
module attributes {stable_mosaic.version = 11 : i64} {
  func.func @_convnet_kernel(%arg0: i32, %arg1: memref<1x32x32xf32, #tpu.memory_space<vmem>>, %arg2: memref<3x32x120xf32, #tpu.memory_space<vmem>>, %arg3: memref<1x120xf32, #tpu.memory_space<vmem>>, %arg4: memref<6x120x112xf32, #tpu.memory_space<vmem>>, %arg5: memref<1x112xf32, #tpu.memory_space<vmem>>, %arg6: memref<6x112x96xf32, #tpu.memory_space<vmem>>, %arg7: memref<1x96xf32, #tpu.memory_space<vmem>>, %arg8: memref<6x96x64xf32, #tpu.memory_space<vmem>>, %arg9: memref<1x64xf32, #tpu.memory_space<vmem>>, %arg10: memref<2x64x64xf32, #tpu.memory_space<vmem>>, %arg11: memref<1x64xf32, #tpu.memory_space<vmem>>, %arg12: memref<64x32xf32, #tpu.memory_space<vmem>>, %arg13: memref<1x32xf32, #tpu.memory_space<vmem>>, %arg14: memref<32x2xf32, #tpu.memory_space<vmem>>, %arg15: memref<1x2xf32, #tpu.memory_space<vmem>>, %arg16: memref<1x1x2xf32, #tpu.memory_space<vmem>>, %arg17: memref<30x120xf32, #tpu.memory_space<vmem>>, %arg18: memref<14x112xf32, #tpu.memory_space<vmem>>, %arg19: memref<6x96xf32, #tpu.memory_space<vmem>>) attributes {dimension_semantics = [#tpu.dimension_semantics<parallel>], iteration_bounds = array<i64: 2>, scalar_prefetch = 0 : i64, scratch_operands = 3 : i64, tpu.core_type = #tpu.core_type<tc>, window_params = [{transform_indices = @transform_0, window_bounds = array<i64: 1, 32, 32>}, {pipeline_mode = #tpu.pipeline_mode<synchronous>, transform_indices = @transform_1, window_bounds = array<i64: 3, 32, 120>}, {pipeline_mode = #tpu.pipeline_mode<synchronous>, transform_indices = @transform_2, window_bounds = array<i64: 1, 120>}, {pipeline_mode = #tpu.pipeline_mode<synchronous>, transform_indices = @transform_3, window_bounds = array<i64: 6, 120, 112>}, {pipeline_mode = #tpu.pipeline_mode<synchronous>, transform_indices = @transform_4, window_bounds = array<i64: 1, 112>}, {pipeline_mode = #tpu.pipeline_mode<synchronous>, transform_indices = @transform_5, window_bounds = array<i64: 6, 112, 96>}, {pipeline_mode = #tpu.pipeline_mode<synchronous>, transform_indices = @transform_6, window_bounds = array<i64: 1, 96>}, {pipeline_mode = #tpu.pipeline_mode<synchronous>, transform_indices = @transform_7, window_bounds = array<i64: 6, 96, 64>}, {pipeline_mode = #tpu.pipeline_mode<synchronous>, transform_indices = @transform_8, window_bounds = array<i64: 1, 64>}, {pipeline_mode = #tpu.pipeline_mode<synchronous>, transform_indices = @transform_9, window_bounds = array<i64: 2, 64, 64>}, {pipeline_mode = #tpu.pipeline_mode<synchronous>, transform_indices = @transform_10, window_bounds = array<i64: 1, 64>}, {pipeline_mode = #tpu.pipeline_mode<synchronous>, transform_indices = @transform_11, window_bounds = array<i64: 64, 32>}, {pipeline_mode = #tpu.pipeline_mode<synchronous>, transform_indices = @transform_12, window_bounds = array<i64: 1, 32>}, {pipeline_mode = #tpu.pipeline_mode<synchronous>, transform_indices = @transform_13, window_bounds = array<i64: 32, 2>}, {pipeline_mode = #tpu.pipeline_mode<synchronous>, transform_indices = @transform_14, window_bounds = array<i64: 1, 2>}, {transform_indices = @transform_15, window_bounds = array<i64: 1, 1, 2>}]} {
    %c0 = arith.constant 0 : index
    %c0_0 = arith.constant 0 : index
    %c0_1 = arith.constant 0 : index
    %0 = vector.load %arg1[%c0, %c0_0, %c0_1] : memref<1x32x32xf32, #tpu.memory_space<vmem>>, vector<1x32x32xf32>
    %1 = vector.shape_cast %0 : vector<1x32x32xf32> to vector<32x32xf32>
    %2 = vector.extract_strided_slice %1 {offsets = [0, 0], sizes = [30, 32], strides = [1, 1]} : vector<32x32xf32> to vector<30x32xf32>
    %3 = vector.extract_strided_slice %1 {offsets = [1, 0], sizes = [30, 32], strides = [1, 1]} : vector<32x32xf32> to vector<30x32xf32>
    %4 = vector.extract_strided_slice %1 {offsets = [2, 0], sizes = [30, 32], strides = [1, 1]} : vector<32x32xf32> to vector<30x32xf32>
    %c0_2 = arith.constant 0 : index
    %c0_3 = arith.constant 0 : index
    %c0_4 = arith.constant 0 : index
    %5 = vector.load %arg2[%c0_2, %c0_3, %c0_4] : memref<3x32x120xf32, #tpu.memory_space<vmem>>, vector<1x32x120xf32>
    %6 = vector.shape_cast %5 : vector<1x32x120xf32> to vector<32x120xf32>
    %cst = arith.constant dense<0.000000e+00> : vector<30x120xf32>
    %7 = tpu.matmul %2, %6, %cst {dimension_numbers = #tpu.dot_dimension_numbers<[1], [0], [0], [1], [0, 0, 1, 1], [], []>} : vector<30x32xf32>, vector<32x120xf32>, vector<30x120xf32> -> vector<30x120xf32>
    %c1 = arith.constant 1 : index
    %c0_5 = arith.constant 0 : index
    %c0_6 = arith.constant 0 : index
    %8 = vector.load %arg2[%c1, %c0_5, %c0_6] : memref<3x32x120xf32, #tpu.memory_space<vmem>>, vector<1x32x120xf32>
    %9 = vector.shape_cast %8 : vector<1x32x120xf32> to vector<32x120xf32>
    %cst_7 = arith.constant dense<0.000000e+00> : vector<30x120xf32>
    %10 = tpu.matmul %3, %9, %cst_7 {dimension_numbers = #tpu.dot_dimension_numbers<[1], [0], [0], [1], [0, 0, 1, 1], [], []>} : vector<30x32xf32>, vector<32x120xf32>, vector<30x120xf32> -> vector<30x120xf32>
    %11 = arith.addf %7, %10 : vector<30x120xf32>
    %c2 = arith.constant 2 : index
    %c0_8 = arith.constant 0 : index
    %c0_9 = arith.constant 0 : index
    %12 = vector.load %arg2[%c2, %c0_8, %c0_9] : memref<3x32x120xf32, #tpu.memory_space<vmem>>, vector<1x32x120xf32>
    %13 = vector.shape_cast %12 : vector<1x32x120xf32> to vector<32x120xf32>
    %cst_10 = arith.constant dense<0.000000e+00> : vector<30x120xf32>
    %14 = tpu.matmul %4, %13, %cst_10 {dimension_numbers = #tpu.dot_dimension_numbers<[1], [0], [0], [1], [0, 0, 1, 1], [], []>} : vector<30x32xf32>, vector<32x120xf32>, vector<30x120xf32> -> vector<30x120xf32>
    %15 = arith.addf %11, %14 : vector<30x120xf32>
    %c0_11 = arith.constant 0 : index
    %c0_12 = arith.constant 0 : index
    %16 = vector.load %arg3[%c0_11, %c0_12] : memref<1x120xf32, #tpu.memory_space<vmem>>, vector<1x120xf32>
    %17 = vector.broadcast %16 : vector<1x120xf32> to vector<30x120xf32>
    %18 = arith.addf %15, %17 : vector<30x120xf32>
    %cst_13 = arith.constant 0.000000e+00 : f32
    %19 = vector.broadcast %cst_13 : f32 to vector<30x120xf32>
    %20 = arith.cmpf ogt, %18, %19 : vector<30x120xf32>
    %cst_14 = arith.constant 1.000000e-01 : f32
    %21 = vector.broadcast %cst_14 : f32 to vector<30x120xf32>
    %22 = arith.mulf %21, %18 : vector<30x120xf32>
    %23 = arith.select %20, %18, %22 : vector<30x120xi1>, vector<30x120xf32>
    %c0_15 = arith.constant 0 : index
    %c0_16 = arith.constant 0 : index
    %24 = vector.load %arg17[%c0_15, %c0_16] : memref<30x120xf32, #tpu.memory_space<vmem>>, vector<30x120xf32>
    tpu.vector_store %arg17[%c0_15, %c0_16], %23 {strides = array<i32>} : memref<30x120xf32, #tpu.memory_space<vmem>>, vector<30x120xf32>,
    %c0_17 = arith.constant 0 : index
    %c0_18 = arith.constant 0 : index
    %25 = tpu.strided_load %arg17[%c0_17, %c0_18] {strides = array<i32: 2, 1>} : memref<30x120xf32, #tpu.memory_space<vmem>>, vector<14x120xf32>
    %c1_19 = arith.constant 1 : index
    %c0_20 = arith.constant 0 : index
    %26 = tpu.strided_load %arg17[%c1_19, %c0_20] {strides = array<i32: 2, 1>} : memref<30x120xf32, #tpu.memory_space<vmem>>, vector<14x120xf32>
    %c2_21 = arith.constant 2 : index
    %c0_22 = arith.constant 0 : index
    %27 = tpu.strided_load %arg17[%c2_21, %c0_22] {strides = array<i32: 2, 1>} : memref<30x120xf32, #tpu.memory_space<vmem>>, vector<14x120xf32>
    %c0_23 = arith.constant 0 : index
    %c0_24 = arith.constant 0 : index
    %c0_25 = arith.constant 0 : index
    %28 = vector.load %arg4[%c0_23, %c0_24, %c0_25] : memref<6x120x112xf32, #tpu.memory_space<vmem>>, vector<1x120x112xf32>
    %29 = vector.shape_cast %28 : vector<1x120x112xf32> to vector<120x112xf32>
    %cst_26 = arith.constant dense<0.000000e+00> : vector<14x112xf32>
    %30 = tpu.matmul %25, %29, %cst_26 {dimension_numbers = #tpu.dot_dimension_numbers<[1], [0], [0], [1], [0, 0, 1, 1], [], []>} : vector<14x120xf32>, vector<120x112xf32>, vector<14x112xf32> -> vector<14x112xf32>
    %c1_27 = arith.constant 1 : index
    %c0_28 = arith.constant 0 : index
    %c0_29 = arith.constant 0 : index
    %31 = vector.load %arg4[%c1_27, %c0_28, %c0_29] : memref<6x120x112xf32, #tpu.memory_space<vmem>>, vector<1x120x112xf32>
    %32 = vector.shape_cast %31 : vector<1x120x112xf32> to vector<120x112xf32>
    %cst_30 = arith.constant dense<0.000000e+00> : vector<14x112xf32>
    %33 = tpu.matmul %26, %32, %cst_30 {dimension_numbers = #tpu.dot_dimension_numbers<[1], [0], [0], [1], [0, 0, 1, 1], [], []>} : vector<14x120xf32>, vector<120x112xf32>, vector<14x112xf32> -> vector<14x112xf32>
    %34 = arith.addf %30, %33 : vector<14x112xf32>
    %c2_31 = arith.constant 2 : index
    %c0_32 = arith.constant 0 : index
    %c0_33 = arith.constant 0 : index
    %35 = vector.load %arg4[%c2_31, %c0_32, %c0_33] : memref<6x120x112xf32, #tpu.memory_space<vmem>>, vector<1x120x112xf32>
    %36 = vector.shape_cast %35 : vector<1x120x112xf32> to vector<120x112xf32>
    %cst_34 = arith.constant dense<0.000000e+00> : vector<14x112xf32>
    %37 = tpu.matmul %27, %36, %cst_34 {dimension_numbers = #tpu.dot_dimension_numbers<[1], [0], [0], [1], [0, 0, 1, 1], [], []>} : vector<14x120xf32>, vector<120x112xf32>, vector<14x112xf32> -> vector<14x112xf32>
    %38 = arith.addf %34, %37 : vector<14x112xf32>
    %c3 = arith.constant 3 : index
    %c0_35 = arith.constant 0 : index
    %c0_36 = arith.constant 0 : index
    %39 = vector.load %arg4[%c3, %c0_35, %c0_36] : memref<6x120x112xf32, #tpu.memory_space<vmem>>, vector<1x120x112xf32>
    %40 = vector.shape_cast %39 : vector<1x120x112xf32> to vector<120x112xf32>
    %cst_37 = arith.constant dense<0.000000e+00> : vector<14x112xf32>
    %41 = tpu.matmul %25, %40, %cst_37 {dimension_numbers = #tpu.dot_dimension_numbers<[1], [0], [0], [1], [0, 0, 1, 1], [], []>} : vector<14x120xf32>, vector<120x112xf32>, vector<14x112xf32> -> vector<14x112xf32>
    %c4 = arith.constant 4 : index
    %c0_38 = arith.constant 0 : index
    %c0_39 = arith.constant 0 : index
    %42 = vector.load %arg4[%c4, %c0_38, %c0_39] : memref<6x120x112xf32, #tpu.memory_space<vmem>>, vector<1x120x112xf32>
    %43 = vector.shape_cast %42 : vector<1x120x112xf32> to vector<120x112xf32>
    %cst_40 = arith.constant dense<0.000000e+00> : vector<14x112xf32>
    %44 = tpu.matmul %26, %43, %cst_40 {dimension_numbers = #tpu.dot_dimension_numbers<[1], [0], [0], [1], [0, 0, 1, 1], [], []>} : vector<14x120xf32>, vector<120x112xf32>, vector<14x112xf32> -> vector<14x112xf32>
    %45 = arith.addf %41, %44 : vector<14x112xf32>
    %c5 = arith.constant 5 : index
    %c0_41 = arith.constant 0 : index
    %c0_42 = arith.constant 0 : index
    %46 = vector.load %arg4[%c5, %c0_41, %c0_42] : memref<6x120x112xf32, #tpu.memory_space<vmem>>, vector<1x120x112xf32>
    %47 = vector.shape_cast %46 : vector<1x120x112xf32> to vector<120x112xf32>
    %cst_43 = arith.constant dense<0.000000e+00> : vector<14x112xf32>
    %48 = tpu.matmul %27, %47, %cst_43 {dimension_numbers = #tpu.dot_dimension_numbers<[1], [0], [0], [1], [0, 0, 1, 1], [], []>} : vector<14x120xf32>, vector<120x112xf32>, vector<14x112xf32> -> vector<14x112xf32>
    %49 = arith.addf %45, %48 : vector<14x112xf32>
    %50 = arith.maximumf %38, %49 : vector<14x112xf32>
    %c1_44 = arith.constant 1 : index
    %c0_45 = arith.constant 0 : index
    %51 = tpu.strided_load %arg17[%c1_44, %c0_45] {strides = array<i32: 2, 1>} : memref<30x120xf32, #tpu.memory_space<vmem>>, vector<14x120xf32>
    %c2_46 = arith.constant 2 : index
    %c0_47 = arith.constant 0 : index
    %52 = tpu.strided_load %arg17[%c2_46, %c0_47] {strides = array<i32: 2, 1>} : memref<30x120xf32, #tpu.memory_space<vmem>>, vector<14x120xf32>
    %c3_48 = arith.constant 3 : index
    %c0_49 = arith.constant 0 : index
    %53 = tpu.strided_load %arg17[%c3_48, %c0_49] {strides = array<i32: 2, 1>} : memref<30x120xf32, #tpu.memory_space<vmem>>, vector<14x120xf32>
    %c0_50 = arith.constant 0 : index
    %c0_51 = arith.constant 0 : index
    %c0_52 = arith.constant 0 : index
    %54 = vector.load %arg4[%c0_50, %c0_51, %c0_52] : memref<6x120x112xf32, #tpu.memory_space<vmem>>, vector<1x120x112xf32>
    %55 = vector.shape_cast %54 : vector<1x120x112xf32> to vector<120x112xf32>
    %cst_53 = arith.constant dense<0.000000e+00> : vector<14x112xf32>
    %56 = tpu.matmul %51, %55, %cst_53 {dimension_numbers = #tpu.dot_dimension_numbers<[1], [0], [0], [1], [0, 0, 1, 1], [], []>} : vector<14x120xf32>, vector<120x112xf32>, vector<14x112xf32> -> vector<14x112xf32>
    %c1_54 = arith.constant 1 : index
    %c0_55 = arith.constant 0 : index
    %c0_56 = arith.constant 0 : index
    %57 = vector.load %arg4[%c1_54, %c0_55, %c0_56] : memref<6x120x112xf32, #tpu.memory_space<vmem>>, vector<1x120x112xf32>
    %58 = vector.shape_cast %57 : vector<1x120x112xf32> to vector<120x112xf32>
    %cst_57 = arith.constant dense<0.000000e+00> : vector<14x112xf32>
    %59 = tpu.matmul %52, %58, %cst_57 {dimension_numbers = #tpu.dot_dimension_numbers<[1], [0], [0], [1], [0, 0, 1, 1], [], []>} : vector<14x120xf32>, vector<120x112xf32>, vector<14x112xf32> -> vector<14x112xf32>
    %60 = arith.addf %56, %59 : vector<14x112xf32>
    %c2_58 = arith.constant 2 : index
    %c0_59 = arith.constant 0 : index
    %c0_60 = arith.constant 0 : index
    %61 = vector.load %arg4[%c2_58, %c0_59, %c0_60] : memref<6x120x112xf32, #tpu.memory_space<vmem>>, vector<1x120x112xf32>
    %62 = vector.shape_cast %61 : vector<1x120x112xf32> to vector<120x112xf32>
    %cst_61 = arith.constant dense<0.000000e+00> : vector<14x112xf32>
    %63 = tpu.matmul %53, %62, %cst_61 {dimension_numbers = #tpu.dot_dimension_numbers<[1], [0], [0], [1], [0, 0, 1, 1], [], []>} : vector<14x120xf32>, vector<120x112xf32>, vector<14x112xf32> -> vector<14x112xf32>
    %64 = arith.addf %60, %63 : vector<14x112xf32>
    %65 = arith.maximumf %50, %64 : vector<14x112xf32>
    %c3_62 = arith.constant 3 : index
    %c0_63 = arith.constant 0 : index
    %c0_64 = arith.constant 0 : index
    %66 = vector.load %arg4[%c3_62, %c0_63, %c0_64] : memref<6x120x112xf32, #tpu.memory_space<vmem>>, vector<1x120x112xf32>
    %67 = vector.shape_cast %66 : vector<1x120x112xf32> to vector<120x112xf32>
    %cst_65 = arith.constant dense<0.000000e+00> : vector<14x112xf32>
    %68 = tpu.matmul %51, %67, %cst_65 {dimension_numbers = #tpu.dot_dimension_numbers<[1], [0], [0], [1], [0, 0, 1, 1], [], []>} : vector<14x120xf32>, vector<120x112xf32>, vector<14x112xf32> -> vector<14x112xf32>
    %c4_66 = arith.constant 4 : index
    %c0_67 = arith.constant 0 : index
    %c0_68 = arith.constant 0 : index
    %69 = vector.load %arg4[%c4_66, %c0_67, %c0_68] : memref<6x120x112xf32, #tpu.memory_space<vmem>>, vector<1x120x112xf32>
    %70 = vector.shape_cast %69 : vector<1x120x112xf32> to vector<120x112xf32>
    %cst_69 = arith.constant dense<0.000000e+00> : vector<14x112xf32>
    %71 = tpu.matmul %52, %70, %cst_69 {dimension_numbers = #tpu.dot_dimension_numbers<[1], [0], [0], [1], [0, 0, 1, 1], [], []>} : vector<14x120xf32>, vector<120x112xf32>, vector<14x112xf32> -> vector<14x112xf32>
    %72 = arith.addf %68, %71 : vector<14x112xf32>
    %c5_70 = arith.constant 5 : index
    %c0_71 = arith.constant 0 : index
    %c0_72 = arith.constant 0 : index
    %73 = vector.load %arg4[%c5_70, %c0_71, %c0_72] : memref<6x120x112xf32, #tpu.memory_space<vmem>>, vector<1x120x112xf32>
    %74 = vector.shape_cast %73 : vector<1x120x112xf32> to vector<120x112xf32>
    %cst_73 = arith.constant dense<0.000000e+00> : vector<14x112xf32>
    %75 = tpu.matmul %53, %74, %cst_73 {dimension_numbers = #tpu.dot_dimension_numbers<[1], [0], [0], [1], [0, 0, 1, 1], [], []>} : vector<14x120xf32>, vector<120x112xf32>, vector<14x112xf32> -> vector<14x112xf32>
    %76 = arith.addf %72, %75 : vector<14x112xf32>
    %77 = arith.maximumf %65, %76 : vector<14x112xf32>
    %c0_74 = arith.constant 0 : index
    %c0_75 = arith.constant 0 : index
    %78 = vector.load %arg5[%c0_74, %c0_75] : memref<1x112xf32, #tpu.memory_space<vmem>>, vector<1x112xf32>
    %79 = vector.broadcast %78 : vector<1x112xf32> to vector<14x112xf32>
    %80 = arith.addf %77, %79 : vector<14x112xf32>
    %cst_76 = arith.constant 0.000000e+00 : f32
    %81 = vector.broadcast %cst_76 : f32 to vector<14x112xf32>
    %82 = arith.cmpf ogt, %80, %81 : vector<14x112xf32>
    %cst_77 = arith.constant 1.000000e-01 : f32
    %83 = vector.broadcast %cst_77 : f32 to vector<14x112xf32>
    %84 = arith.mulf %83, %80 : vector<14x112xf32>
    %85 = arith.select %82, %80, %84 : vector<14x112xi1>, vector<14x112xf32>
    %c0_78 = arith.constant 0 : index
    %c0_79 = arith.constant 0 : index
    %86 = vector.load %arg18[%c0_78, %c0_79] : memref<14x112xf32, #tpu.memory_space<vmem>>, vector<14x112xf32>
    tpu.vector_store %arg18[%c0_78, %c0_79], %85 {strides = array<i32>} : memref<14x112xf32, #tpu.memory_space<vmem>>, vector<14x112xf32>,
    %c0_80 = arith.constant 0 : index
    %c0_81 = arith.constant 0 : index
    %87 = tpu.strided_load %arg18[%c0_80, %c0_81] {strides = array<i32: 2, 1>} : memref<14x112xf32, #tpu.memory_space<vmem>>, vector<6x112xf32>
    %c1_82 = arith.constant 1 : index
    %c0_83 = arith.constant 0 : index
    %88 = tpu.strided_load %arg18[%c1_82, %c0_83] {strides = array<i32: 2, 1>} : memref<14x112xf32, #tpu.memory_space<vmem>>, vector<6x112xf32>
    %c2_84 = arith.constant 2 : index
    %c0_85 = arith.constant 0 : index
    %89 = tpu.strided_load %arg18[%c2_84, %c0_85] {strides = array<i32: 2, 1>} : memref<14x112xf32, #tpu.memory_space<vmem>>, vector<6x112xf32>
    %c0_86 = arith.constant 0 : index
    %c0_87 = arith.constant 0 : index
    %c0_88 = arith.constant 0 : index
    %90 = vector.load %arg6[%c0_86, %c0_87, %c0_88] : memref<6x112x96xf32, #tpu.memory_space<vmem>>, vector<1x112x96xf32>
    %91 = vector.shape_cast %90 : vector<1x112x96xf32> to vector<112x96xf32>
    %cst_89 = arith.constant dense<0.000000e+00> : vector<6x96xf32>
    %92 = tpu.matmul %87, %91, %cst_89 {dimension_numbers = #tpu.dot_dimension_numbers<[1], [0], [0], [1], [0, 0, 1, 1], [], []>} : vector<6x112xf32>, vector<112x96xf32>, vector<6x96xf32> -> vector<6x96xf32>
    %c1_90 = arith.constant 1 : index
    %c0_91 = arith.constant 0 : index
    %c0_92 = arith.constant 0 : index
    %93 = vector.load %arg6[%c1_90, %c0_91, %c0_92] : memref<6x112x96xf32, #tpu.memory_space<vmem>>, vector<1x112x96xf32>
    %94 = vector.shape_cast %93 : vector<1x112x96xf32> to vector<112x96xf32>
    %cst_93 = arith.constant dense<0.000000e+00> : vector<6x96xf32>
    %95 = tpu.matmul %88, %94, %cst_93 {dimension_numbers = #tpu.dot_dimension_numbers<[1], [0], [0], [1], [0, 0, 1, 1], [], []>} : vector<6x112xf32>, vector<112x96xf32>, vector<6x96xf32> -> vector<6x96xf32>
    %96 = arith.addf %92, %95 : vector<6x96xf32>
    %c2_94 = arith.constant 2 : index
    %c0_95 = arith.constant 0 : index
    %c0_96 = arith.constant 0 : index
    %97 = vector.load %arg6[%c2_94, %c0_95, %c0_96] : memref<6x112x96xf32, #tpu.memory_space<vmem>>, vector<1x112x96xf32>
    %98 = vector.shape_cast %97 : vector<1x112x96xf32> to vector<112x96xf32>
    %cst_97 = arith.constant dense<0.000000e+00> : vector<6x96xf32>
    %99 = tpu.matmul %89, %98, %cst_97 {dimension_numbers = #tpu.dot_dimension_numbers<[1], [0], [0], [1], [0, 0, 1, 1], [], []>} : vector<6x112xf32>, vector<112x96xf32>, vector<6x96xf32> -> vector<6x96xf32>
    %100 = arith.addf %96, %99 : vector<6x96xf32>
    %c3_98 = arith.constant 3 : index
    %c0_99 = arith.constant 0 : index
    %c0_100 = arith.constant 0 : index
    %101 = vector.load %arg6[%c3_98, %c0_99, %c0_100] : memref<6x112x96xf32, #tpu.memory_space<vmem>>, vector<1x112x96xf32>
    %102 = vector.shape_cast %101 : vector<1x112x96xf32> to vector<112x96xf32>
    %cst_101 = arith.constant dense<0.000000e+00> : vector<6x96xf32>
    %103 = tpu.matmul %87, %102, %cst_101 {dimension_numbers = #tpu.dot_dimension_numbers<[1], [0], [0], [1], [0, 0, 1, 1], [], []>} : vector<6x112xf32>, vector<112x96xf32>, vector<6x96xf32> -> vector<6x96xf32>
    %c4_102 = arith.constant 4 : index
    %c0_103 = arith.constant 0 : index
    %c0_104 = arith.constant 0 : index
    %104 = vector.load %arg6[%c4_102, %c0_103, %c0_104] : memref<6x112x96xf32, #tpu.memory_space<vmem>>, vector<1x112x96xf32>
    %105 = vector.shape_cast %104 : vector<1x112x96xf32> to vector<112x96xf32>
    %cst_105 = arith.constant dense<0.000000e+00> : vector<6x96xf32>
    %106 = tpu.matmul %88, %105, %cst_105 {dimension_numbers = #tpu.dot_dimension_numbers<[1], [0], [0], [1], [0, 0, 1, 1], [], []>} : vector<6x112xf32>, vector<112x96xf32>, vector<6x96xf32> -> vector<6x96xf32>
    %107 = arith.addf %103, %106 : vector<6x96xf32>
    %c5_106 = arith.constant 5 : index
    %c0_107 = arith.constant 0 : index
    %c0_108 = arith.constant 0 : index
    %108 = vector.load %arg6[%c5_106, %c0_107, %c0_108] : memref<6x112x96xf32, #tpu.memory_space<vmem>>, vector<1x112x96xf32>
    %109 = vector.shape_cast %108 : vector<1x112x96xf32> to vector<112x96xf32>
    %cst_109 = arith.constant dense<0.000000e+00> : vector<6x96xf32>
    %110 = tpu.matmul %89, %109, %cst_109 {dimension_numbers = #tpu.dot_dimension_numbers<[1], [0], [0], [1], [0, 0, 1, 1], [], []>} : vector<6x112xf32>, vector<112x96xf32>, vector<6x96xf32> -> vector<6x96xf32>
    %111 = arith.addf %107, %110 : vector<6x96xf32>
    %112 = arith.maximumf %100, %111 : vector<6x96xf32>
    %c1_110 = arith.constant 1 : index
    %c0_111 = arith.constant 0 : index
    %113 = tpu.strided_load %arg18[%c1_110, %c0_111] {strides = array<i32: 2, 1>} : memref<14x112xf32, #tpu.memory_space<vmem>>, vector<6x112xf32>
    %c2_112 = arith.constant 2 : index
    %c0_113 = arith.constant 0 : index
    %114 = tpu.strided_load %arg18[%c2_112, %c0_113] {strides = array<i32: 2, 1>} : memref<14x112xf32, #tpu.memory_space<vmem>>, vector<6x112xf32>
    %c3_114 = arith.constant 3 : index
    %c0_115 = arith.constant 0 : index
    %115 = tpu.strided_load %arg18[%c3_114, %c0_115] {strides = array<i32: 2, 1>} : memref<14x112xf32, #tpu.memory_space<vmem>>, vector<6x112xf32>
    %c0_116 = arith.constant 0 : index
    %c0_117 = arith.constant 0 : index
    %c0_118 = arith.constant 0 : index
    %116 = vector.load %arg6[%c0_116, %c0_117, %c0_118] : memref<6x112x96xf32, #tpu.memory_space<vmem>>, vector<1x112x96xf32>
    %117 = vector.shape_cast %116 : vector<1x112x96xf32> to vector<112x96xf32>
    %cst_119 = arith.constant dense<0.000000e+00> : vector<6x96xf32>
    %118 = tpu.matmul %113, %117, %cst_119 {dimension_numbers = #tpu.dot_dimension_numbers<[1], [0], [0], [1], [0, 0, 1, 1], [], []>} : vector<6x112xf32>, vector<112x96xf32>, vector<6x96xf32> -> vector<6x96xf32>
    %c1_120 = arith.constant 1 : index
    %c0_121 = arith.constant 0 : index
    %c0_122 = arith.constant 0 : index
    %119 = vector.load %arg6[%c1_120, %c0_121, %c0_122] : memref<6x112x96xf32, #tpu.memory_space<vmem>>, vector<1x112x96xf32>
    %120 = vector.shape_cast %119 : vector<1x112x96xf32> to vector<112x96xf32>
    %cst_123 = arith.constant dense<0.000000e+00> : vector<6x96xf32>
    %121 = tpu.matmul %114, %120, %cst_123 {dimension_numbers = #tpu.dot_dimension_numbers<[1], [0], [0], [1], [0, 0, 1, 1], [], []>} : vector<6x112xf32>, vector<112x96xf32>, vector<6x96xf32> -> vector<6x96xf32>
    %122 = arith.addf %118, %121 : vector<6x96xf32>
    %c2_124 = arith.constant 2 : index
    %c0_125 = arith.constant 0 : index
    %c0_126 = arith.constant 0 : index
    %123 = vector.load %arg6[%c2_124, %c0_125, %c0_126] : memref<6x112x96xf32, #tpu.memory_space<vmem>>, vector<1x112x96xf32>
    %124 = vector.shape_cast %123 : vector<1x112x96xf32> to vector<112x96xf32>
    %cst_127 = arith.constant dense<0.000000e+00> : vector<6x96xf32>
    %125 = tpu.matmul %115, %124, %cst_127 {dimension_numbers = #tpu.dot_dimension_numbers<[1], [0], [0], [1], [0, 0, 1, 1], [], []>} : vector<6x112xf32>, vector<112x96xf32>, vector<6x96xf32> -> vector<6x96xf32>
    %126 = arith.addf %122, %125 : vector<6x96xf32>
    %127 = arith.maximumf %112, %126 : vector<6x96xf32>
    %c3_128 = arith.constant 3 : index
    %c0_129 = arith.constant 0 : index
    %c0_130 = arith.constant 0 : index
    %128 = vector.load %arg6[%c3_128, %c0_129, %c0_130] : memref<6x112x96xf32, #tpu.memory_space<vmem>>, vector<1x112x96xf32>
    %129 = vector.shape_cast %128 : vector<1x112x96xf32> to vector<112x96xf32>
    %cst_131 = arith.constant dense<0.000000e+00> : vector<6x96xf32>
    %130 = tpu.matmul %113, %129, %cst_131 {dimension_numbers = #tpu.dot_dimension_numbers<[1], [0], [0], [1], [0, 0, 1, 1], [], []>} : vector<6x112xf32>, vector<112x96xf32>, vector<6x96xf32> -> vector<6x96xf32>
    %c4_132 = arith.constant 4 : index
    %c0_133 = arith.constant 0 : index
    %c0_134 = arith.constant 0 : index
    %131 = vector.load %arg6[%c4_132, %c0_133, %c0_134] : memref<6x112x96xf32, #tpu.memory_space<vmem>>, vector<1x112x96xf32>
    %132 = vector.shape_cast %131 : vector<1x112x96xf32> to vector<112x96xf32>
    %cst_135 = arith.constant dense<0.000000e+00> : vector<6x96xf32>
    %133 = tpu.matmul %114, %132, %cst_135 {dimension_numbers = #tpu.dot_dimension_numbers<[1], [0], [0], [1], [0, 0, 1, 1], [], []>} : vector<6x112xf32>, vector<112x96xf32>, vector<6x96xf32> -> vector<6x96xf32>
    %134 = arith.addf %130, %133 : vector<6x96xf32>
    %c5_136 = arith.constant 5 : index
    %c0_137 = arith.constant 0 : index
    %c0_138 = arith.constant 0 : index
    %135 = vector.load %arg6[%c5_136, %c0_137, %c0_138] : memref<6x112x96xf32, #tpu.memory_space<vmem>>, vector<1x112x96xf32>
    %136 = vector.shape_cast %135 : vector<1x112x96xf32> to vector<112x96xf32>
    %cst_139 = arith.constant dense<0.000000e+00> : vector<6x96xf32>
    %137 = tpu.matmul %115, %136, %cst_139 {dimension_numbers = #tpu.dot_dimension_numbers<[1], [0], [0], [1], [0, 0, 1, 1], [], []>} : vector<6x112xf32>, vector<112x96xf32>, vector<6x96xf32> -> vector<6x96xf32>
    %138 = arith.addf %134, %137 : vector<6x96xf32>
    %139 = arith.maximumf %127, %138 : vector<6x96xf32>
    %c0_140 = arith.constant 0 : index
    %c0_141 = arith.constant 0 : index
    %140 = vector.load %arg7[%c0_140, %c0_141] : memref<1x96xf32, #tpu.memory_space<vmem>>, vector<1x96xf32>
    %141 = vector.broadcast %140 : vector<1x96xf32> to vector<6x96xf32>
    %142 = arith.addf %139, %141 : vector<6x96xf32>
    %cst_142 = arith.constant 0.000000e+00 : f32
    %143 = vector.broadcast %cst_142 : f32 to vector<6x96xf32>
    %144 = arith.cmpf ogt, %142, %143 : vector<6x96xf32>
    %cst_143 = arith.constant 1.000000e-01 : f32
    %145 = vector.broadcast %cst_143 : f32 to vector<6x96xf32>
    %146 = arith.mulf %145, %142 : vector<6x96xf32>
    %147 = arith.select %144, %142, %146 : vector<6x96xi1>, vector<6x96xf32>
    %c0_144 = arith.constant 0 : index
    %c0_145 = arith.constant 0 : index
    %148 = vector.load %arg19[%c0_144, %c0_145] : memref<6x96xf32, #tpu.memory_space<vmem>>, vector<6x96xf32>
    tpu.vector_store %arg19[%c0_144, %c0_145], %147 {strides = array<i32>} : memref<6x96xf32, #tpu.memory_space<vmem>>, vector<6x96xf32>,
    %c0_146 = arith.constant 0 : index
    %c0_147 = arith.constant 0 : index
    %149 = tpu.strided_load %arg19[%c0_146, %c0_147] {strides = array<i32: 2, 1>} : memref<6x96xf32, #tpu.memory_space<vmem>>, vector<2x96xf32>
    %c1_148 = arith.constant 1 : index
    %c0_149 = arith.constant 0 : index
    %150 = tpu.strided_load %arg19[%c1_148, %c0_149] {strides = array<i32: 2, 1>} : memref<6x96xf32, #tpu.memory_space<vmem>>, vector<2x96xf32>
    %c2_150 = arith.constant 2 : index
    %c0_151 = arith.constant 0 : index
    %151 = tpu.strided_load %arg19[%c2_150, %c0_151] {strides = array<i32: 2, 1>} : memref<6x96xf32, #tpu.memory_space<vmem>>, vector<2x96xf32>
    %c0_152 = arith.constant 0 : index
    %c0_153 = arith.constant 0 : index
    %c0_154 = arith.constant 0 : index
    %152 = vector.load %arg8[%c0_152, %c0_153, %c0_154] : memref<6x96x64xf32, #tpu.memory_space<vmem>>, vector<1x96x64xf32>
    %153 = vector.shape_cast %152 : vector<1x96x64xf32> to vector<96x64xf32>
    %cst_155 = arith.constant dense<0.000000e+00> : vector<2x64xf32>
    %154 = tpu.matmul %149, %153, %cst_155 {dimension_numbers = #tpu.dot_dimension_numbers<[1], [0], [0], [1], [0, 0, 1, 1], [], []>} : vector<2x96xf32>, vector<96x64xf32>, vector<2x64xf32> -> vector<2x64xf32>
    %c1_156 = arith.constant 1 : index
    %c0_157 = arith.constant 0 : index
    %c0_158 = arith.constant 0 : index
    %155 = vector.load %arg8[%c1_156, %c0_157, %c0_158] : memref<6x96x64xf32, #tpu.memory_space<vmem>>, vector<1x96x64xf32>
    %156 = vector.shape_cast %155 : vector<1x96x64xf32> to vector<96x64xf32>
    %cst_159 = arith.constant dense<0.000000e+00> : vector<2x64xf32>
    %157 = tpu.matmul %150, %156, %cst_159 {dimension_numbers = #tpu.dot_dimension_numbers<[1], [0], [0], [1], [0, 0, 1, 1], [], []>} : vector<2x96xf32>, vector<96x64xf32>, vector<2x64xf32> -> vector<2x64xf32>
    %158 = arith.addf %154, %157 : vector<2x64xf32>
    %c2_160 = arith.constant 2 : index
    %c0_161 = arith.constant 0 : index
    %c0_162 = arith.constant 0 : index
    %159 = vector.load %arg8[%c2_160, %c0_161, %c0_162] : memref<6x96x64xf32, #tpu.memory_space<vmem>>, vector<1x96x64xf32>
    %160 = vector.shape_cast %159 : vector<1x96x64xf32> to vector<96x64xf32>
    %cst_163 = arith.constant dense<0.000000e+00> : vector<2x64xf32>
    %161 = tpu.matmul %151, %160, %cst_163 {dimension_numbers = #tpu.dot_dimension_numbers<[1], [0], [0], [1], [0, 0, 1, 1], [], []>} : vector<2x96xf32>, vector<96x64xf32>, vector<2x64xf32> -> vector<2x64xf32>
    %162 = arith.addf %158, %161 : vector<2x64xf32>
    %c3_164 = arith.constant 3 : index
    %c0_165 = arith.constant 0 : index
    %c0_166 = arith.constant 0 : index
    %163 = vector.load %arg8[%c3_164, %c0_165, %c0_166] : memref<6x96x64xf32, #tpu.memory_space<vmem>>, vector<1x96x64xf32>
    %164 = vector.shape_cast %163 : vector<1x96x64xf32> to vector<96x64xf32>
    %cst_167 = arith.constant dense<0.000000e+00> : vector<2x64xf32>
    %165 = tpu.matmul %149, %164, %cst_167 {dimension_numbers = #tpu.dot_dimension_numbers<[1], [0], [0], [1], [0, 0, 1, 1], [], []>} : vector<2x96xf32>, vector<96x64xf32>, vector<2x64xf32> -> vector<2x64xf32>
    %c4_168 = arith.constant 4 : index
    %c0_169 = arith.constant 0 : index
    %c0_170 = arith.constant 0 : index
    %166 = vector.load %arg8[%c4_168, %c0_169, %c0_170] : memref<6x96x64xf32, #tpu.memory_space<vmem>>, vector<1x96x64xf32>
    %167 = vector.shape_cast %166 : vector<1x96x64xf32> to vector<96x64xf32>
    %cst_171 = arith.constant dense<0.000000e+00> : vector<2x64xf32>
    %168 = tpu.matmul %150, %167, %cst_171 {dimension_numbers = #tpu.dot_dimension_numbers<[1], [0], [0], [1], [0, 0, 1, 1], [], []>} : vector<2x96xf32>, vector<96x64xf32>, vector<2x64xf32> -> vector<2x64xf32>
    %169 = arith.addf %165, %168 : vector<2x64xf32>
    %c5_172 = arith.constant 5 : index
    %c0_173 = arith.constant 0 : index
    %c0_174 = arith.constant 0 : index
    %170 = vector.load %arg8[%c5_172, %c0_173, %c0_174] : memref<6x96x64xf32, #tpu.memory_space<vmem>>, vector<1x96x64xf32>
    %171 = vector.shape_cast %170 : vector<1x96x64xf32> to vector<96x64xf32>
    %cst_175 = arith.constant dense<0.000000e+00> : vector<2x64xf32>
    %172 = tpu.matmul %151, %171, %cst_175 {dimension_numbers = #tpu.dot_dimension_numbers<[1], [0], [0], [1], [0, 0, 1, 1], [], []>} : vector<2x96xf32>, vector<96x64xf32>, vector<2x64xf32> -> vector<2x64xf32>
    %173 = arith.addf %169, %172 : vector<2x64xf32>
    %174 = arith.maximumf %162, %173 : vector<2x64xf32>
    %c1_176 = arith.constant 1 : index
    %c0_177 = arith.constant 0 : index
    %175 = tpu.strided_load %arg19[%c1_176, %c0_177] {strides = array<i32: 2, 1>} : memref<6x96xf32, #tpu.memory_space<vmem>>, vector<2x96xf32>
    %c2_178 = arith.constant 2 : index
    %c0_179 = arith.constant 0 : index
    %176 = tpu.strided_load %arg19[%c2_178, %c0_179] {strides = array<i32: 2, 1>} : memref<6x96xf32, #tpu.memory_space<vmem>>, vector<2x96xf32>
    %c3_180 = arith.constant 3 : index
    %c0_181 = arith.constant 0 : index
    %177 = tpu.strided_load %arg19[%c3_180, %c0_181] {strides = array<i32: 2, 1>} : memref<6x96xf32, #tpu.memory_space<vmem>>, vector<2x96xf32>
    %c0_182 = arith.constant 0 : index
    %c0_183 = arith.constant 0 : index
    %c0_184 = arith.constant 0 : index
    %178 = vector.load %arg8[%c0_182, %c0_183, %c0_184] : memref<6x96x64xf32, #tpu.memory_space<vmem>>, vector<1x96x64xf32>
    %179 = vector.shape_cast %178 : vector<1x96x64xf32> to vector<96x64xf32>
    %cst_185 = arith.constant dense<0.000000e+00> : vector<2x64xf32>
    %180 = tpu.matmul %175, %179, %cst_185 {dimension_numbers = #tpu.dot_dimension_numbers<[1], [0], [0], [1], [0, 0, 1, 1], [], []>} : vector<2x96xf32>, vector<96x64xf32>, vector<2x64xf32> -> vector<2x64xf32>
    %c1_186 = arith.constant 1 : index
    %c0_187 = arith.constant 0 : index
    %c0_188 = arith.constant 0 : index
    %181 = vector.load %arg8[%c1_186, %c0_187, %c0_188] : memref<6x96x64xf32, #tpu.memory_space<vmem>>, vector<1x96x64xf32>
    %182 = vector.shape_cast %181 : vector<1x96x64xf32> to vector<96x64xf32>
    %cst_189 = arith.constant dense<0.000000e+00> : vector<2x64xf32>
    %183 = tpu.matmul %176, %182, %cst_189 {dimension_numbers = #tpu.dot_dimension_numbers<[1], [0], [0], [1], [0, 0, 1, 1], [], []>} : vector<2x96xf32>, vector<96x64xf32>, vector<2x64xf32> -> vector<2x64xf32>
    %184 = arith.addf %180, %183 : vector<2x64xf32>
    %c2_190 = arith.constant 2 : index
    %c0_191 = arith.constant 0 : index
    %c0_192 = arith.constant 0 : index
    %185 = vector.load %arg8[%c2_190, %c0_191, %c0_192] : memref<6x96x64xf32, #tpu.memory_space<vmem>>, vector<1x96x64xf32>
    %186 = vector.shape_cast %185 : vector<1x96x64xf32> to vector<96x64xf32>
    %cst_193 = arith.constant dense<0.000000e+00> : vector<2x64xf32>
    %187 = tpu.matmul %177, %186, %cst_193 {dimension_numbers = #tpu.dot_dimension_numbers<[1], [0], [0], [1], [0, 0, 1, 1], [], []>} : vector<2x96xf32>, vector<96x64xf32>, vector<2x64xf32> -> vector<2x64xf32>
    %188 = arith.addf %184, %187 : vector<2x64xf32>
    %189 = arith.maximumf %174, %188 : vector<2x64xf32>
    %c3_194 = arith.constant 3 : index
    %c0_195 = arith.constant 0 : index
    %c0_196 = arith.constant 0 : index
    %190 = vector.load %arg8[%c3_194, %c0_195, %c0_196] : memref<6x96x64xf32, #tpu.memory_space<vmem>>, vector<1x96x64xf32>
    %191 = vector.shape_cast %190 : vector<1x96x64xf32> to vector<96x64xf32>
    %cst_197 = arith.constant dense<0.000000e+00> : vector<2x64xf32>
    %192 = tpu.matmul %175, %191, %cst_197 {dimension_numbers = #tpu.dot_dimension_numbers<[1], [0], [0], [1], [0, 0, 1, 1], [], []>} : vector<2x96xf32>, vector<96x64xf32>, vector<2x64xf32> -> vector<2x64xf32>
    %c4_198 = arith.constant 4 : index
    %c0_199 = arith.constant 0 : index
    %c0_200 = arith.constant 0 : index
    %193 = vector.load %arg8[%c4_198, %c0_199, %c0_200] : memref<6x96x64xf32, #tpu.memory_space<vmem>>, vector<1x96x64xf32>
    %194 = vector.shape_cast %193 : vector<1x96x64xf32> to vector<96x64xf32>
    %cst_201 = arith.constant dense<0.000000e+00> : vector<2x64xf32>
    %195 = tpu.matmul %176, %194, %cst_201 {dimension_numbers = #tpu.dot_dimension_numbers<[1], [0], [0], [1], [0, 0, 1, 1], [], []>} : vector<2x96xf32>, vector<96x64xf32>, vector<2x64xf32> -> vector<2x64xf32>
    %196 = arith.addf %192, %195 : vector<2x64xf32>
    %c5_202 = arith.constant 5 : index
    %c0_203 = arith.constant 0 : index
    %c0_204 = arith.constant 0 : index
    %197 = vector.load %arg8[%c5_202, %c0_203, %c0_204] : memref<6x96x64xf32, #tpu.memory_space<vmem>>, vector<1x96x64xf32>
    %198 = vector.shape_cast %197 : vector<1x96x64xf32> to vector<96x64xf32>
    %cst_205 = arith.constant dense<0.000000e+00> : vector<2x64xf32>
    %199 = tpu.matmul %177, %198, %cst_205 {dimension_numbers = #tpu.dot_dimension_numbers<[1], [0], [0], [1], [0, 0, 1, 1], [], []>} : vector<2x96xf32>, vector<96x64xf32>, vector<2x64xf32> -> vector<2x64xf32>
    %200 = arith.addf %196, %199 : vector<2x64xf32>
    %201 = arith.maximumf %189, %200 : vector<2x64xf32>
    %c0_206 = arith.constant 0 : index
    %c0_207 = arith.constant 0 : index
    %202 = vector.load %arg9[%c0_206, %c0_207] : memref<1x64xf32, #tpu.memory_space<vmem>>, vector<1x64xf32>
    %203 = vector.broadcast %202 : vector<1x64xf32> to vector<2x64xf32>
    %204 = arith.addf %201, %203 : vector<2x64xf32>
    %cst_208 = arith.constant 0.000000e+00 : f32
    %205 = vector.broadcast %cst_208 : f32 to vector<2x64xf32>
    %206 = arith.cmpf ogt, %204, %205 : vector<2x64xf32>
    %cst_209 = arith.constant 1.000000e-01 : f32
    %207 = vector.broadcast %cst_209 : f32 to vector<2x64xf32>
    %208 = arith.mulf %207, %204 : vector<2x64xf32>
    %209 = arith.select %206, %204, %208 : vector<2x64xi1>, vector<2x64xf32>
    %210 = vector.extract_strided_slice %209 {offsets = [0, 0], sizes = [1, 64], strides = [1, 1]} : vector<2x64xf32> to vector<1x64xf32>
    %211 = vector.extract_strided_slice %209 {offsets = [1, 0], sizes = [1, 64], strides = [1, 1]} : vector<2x64xf32> to vector<1x64xf32>
    %c0_210 = arith.constant 0 : index
    %c0_211 = arith.constant 0 : index
    %c0_212 = arith.constant 0 : index
    %212 = vector.load %arg10[%c0_210, %c0_211, %c0_212] : memref<2x64x64xf32, #tpu.memory_space<vmem>>, vector<1x64x64xf32>
    %213 = vector.shape_cast %212 : vector<1x64x64xf32> to vector<64x64xf32>
    %cst_213 = arith.constant dense<0.000000e+00> : vector<1x64xf32>
    %214 = tpu.matmul %210, %213, %cst_213 {dimension_numbers = #tpu.dot_dimension_numbers<[1], [0], [0], [1], [0, 0, 1, 1], [], []>} : vector<1x64xf32>, vector<64x64xf32>, vector<1x64xf32> -> vector<1x64xf32>
    %c1_214 = arith.constant 1 : index
    %c0_215 = arith.constant 0 : index
    %c0_216 = arith.constant 0 : index
    %215 = vector.load %arg10[%c1_214, %c0_215, %c0_216] : memref<2x64x64xf32, #tpu.memory_space<vmem>>, vector<1x64x64xf32>
    %216 = vector.shape_cast %215 : vector<1x64x64xf32> to vector<64x64xf32>
    %cst_217 = arith.constant dense<0.000000e+00> : vector<1x64xf32>
    %217 = tpu.matmul %211, %216, %cst_217 {dimension_numbers = #tpu.dot_dimension_numbers<[1], [0], [0], [1], [0, 0, 1, 1], [], []>} : vector<1x64xf32>, vector<64x64xf32>, vector<1x64xf32> -> vector<1x64xf32>
    %218 = arith.addf %214, %217 : vector<1x64xf32>
    %c0_218 = arith.constant 0 : index
    %c0_219 = arith.constant 0 : index
    %219 = vector.load %arg11[%c0_218, %c0_219] : memref<1x64xf32, #tpu.memory_space<vmem>>, vector<1x64xf32>
    %220 = arith.addf %218, %219 : vector<1x64xf32>
    %cst_220 = arith.constant 0.000000e+00 : f32
    %221 = vector.broadcast %cst_220 : f32 to vector<1x64xf32>
    %222 = arith.cmpf ogt, %220, %221 : vector<1x64xf32>
    %cst_221 = arith.constant 1.000000e-01 : f32
    %223 = vector.broadcast %cst_221 : f32 to vector<1x64xf32>
    %224 = arith.mulf %223, %220 : vector<1x64xf32>
    %225 = arith.select %222, %220, %224 : vector<1x64xi1>, vector<1x64xf32>
    %c0_222 = arith.constant 0 : index
    %c0_223 = arith.constant 0 : index
    %226 = vector.load %arg12[%c0_222, %c0_223] : memref<64x32xf32, #tpu.memory_space<vmem>>, vector<64x32xf32>
    %cst_224 = arith.constant dense<0.000000e+00> : vector<1x32xf32>
    %227 = tpu.matmul %225, %226, %cst_224 {dimension_numbers = #tpu.dot_dimension_numbers<[1], [0], [0], [1], [0, 0, 1, 1], [], []>} : vector<1x64xf32>, vector<64x32xf32>, vector<1x32xf32> -> vector<1x32xf32>
    %c0_225 = arith.constant 0 : index
    %c0_226 = arith.constant 0 : index
    %228 = vector.load %arg13[%c0_225, %c0_226] : memref<1x32xf32, #tpu.memory_space<vmem>>, vector<1x32xf32>
    %229 = arith.addf %227, %228 : vector<1x32xf32>
    %cst_227 = arith.constant 0.000000e+00 : f32
    %230 = vector.broadcast %cst_227 : f32 to vector<1x32xf32>
    %231 = arith.cmpf ogt, %229, %230 : vector<1x32xf32>
    %cst_228 = arith.constant 1.000000e-01 : f32
    %232 = vector.broadcast %cst_228 : f32 to vector<1x32xf32>
    %233 = arith.mulf %232, %229 : vector<1x32xf32>
    %234 = arith.select %231, %229, %233 : vector<1x32xi1>, vector<1x32xf32>
    %c0_229 = arith.constant 0 : index
    %c0_230 = arith.constant 0 : index
    %235 = vector.load %arg14[%c0_229, %c0_230] : memref<32x2xf32, #tpu.memory_space<vmem>>, vector<32x2xf32>
    %cst_231 = arith.constant dense<0.000000e+00> : vector<1x2xf32>
    %236 = tpu.matmul %234, %235, %cst_231 {dimension_numbers = #tpu.dot_dimension_numbers<[1], [0], [0], [1], [0, 0, 1, 1], [], []>} : vector<1x32xf32>, vector<32x2xf32>, vector<1x2xf32> -> vector<1x2xf32>
    %c0_232 = arith.constant 0 : index
    %c0_233 = arith.constant 0 : index
    %237 = vector.load %arg15[%c0_232, %c0_233] : memref<1x2xf32, #tpu.memory_space<vmem>>, vector<1x2xf32>
    %238 = arith.addf %236, %237 : vector<1x2xf32>
    %cst_234 = arith.constant dense<0xFF800000> : vector<1xf32>
    %239 = vector.multi_reduction <maximumf>, %238, %cst_234 [1] : vector<1x2xf32> to vector<1xf32>
    %240 = vector.shape_cast %239 : vector<1xf32> to vector<1x1xf32>
    %241 = vector.broadcast %240 : vector<1x1xf32> to vector<1x2xf32>
    %242 = arith.subf %238, %241 : vector<1x2xf32>
    %243 = math.exp %242 : vector<1x2xf32>
    %cst_235 = arith.constant dense<0.000000e+00> : vector<1xf32>
    %244 = vector.multi_reduction <add>, %243, %cst_235 [1] : vector<1x2xf32> to vector<1xf32>
    %245 = vector.shape_cast %244 : vector<1xf32> to vector<1x1xf32>
    %246 = math.log %245 : vector<1x1xf32>
    %247 = arith.addf %240, %246 : vector<1x1xf32>
    %248 = vector.broadcast %247 : vector<1x1xf32> to vector<1x2xf32>
    %249 = arith.subf %238, %248 : vector<1x2xf32>
    %c0_236 = arith.constant 0 : index
    %c0_237 = arith.constant 0 : index
    %c0_238 = arith.constant 0 : index
    %250 = vector.load %arg16[%c0_236, %c0_237, %c0_238] : memref<1x1x2xf32, #tpu.memory_space<vmem>>, vector<1x1x2xf32>
    %251 = vector.shape_cast %250 : vector<1x1x2xf32> to vector<1x2xf32>
    %252 = vector.shape_cast %249 : vector<1x2xf32> to vector<1x1x2xf32>
    tpu.vector_store %arg16[%c0_236, %c0_237, %c0_238], %252 {strides = array<i32>} : memref<1x1x2xf32, #tpu.memory_space<vmem>>, vector<1x1x2xf32>,
    return
  }
  func.func @transform_0(%arg0: i32) -> (i32, i32, i32) {
    %c0_i32 = arith.constant 0 : i32
    %c0_i32_0 = arith.constant 0 : i32
    %c0_i32_1 = arith.constant 0 : i32
    return %arg0, %c0_i32, %c0_i32_0 : i32, i32, i32
  }
  func.func @transform_1(%arg0: i32) -> (i32, i32, i32) {
    %c0_i32 = arith.constant 0 : i32
    %c0_i32_0 = arith.constant 0 : i32
    %c0_i32_1 = arith.constant 0 : i32
    %c0_i32_2 = arith.constant 0 : i32
    return %c0_i32, %c0_i32_0, %c0_i32_1 : i32, i32, i32
  }
  func.func @transform_2(%arg0: i32) -> (i32, i32) {
    %c0_i32 = arith.constant 0 : i32
    %c0_i32_0 = arith.constant 0 : i32
    %c0_i32_1 = arith.constant 0 : i32
    return %c0_i32, %c0_i32_0 : i32, i32
  }
  func.func @transform_3(%arg0: i32) -> (i32, i32, i32) {
    %c0_i32 = arith.constant 0 : i32
    %c0_i32_0 = arith.constant 0 : i32
    %c0_i32_1 = arith.constant 0 : i32
    %c0_i32_2 = arith.constant 0 : i32
    return %c0_i32, %c0_i32_0, %c0_i32_1 : i32, i32, i32
  }
  func.func @transform_4(%arg0: i32) -> (i32, i32) {
    %c0_i32 = arith.constant 0 : i32
    %c0_i32_0 = arith.constant 0 : i32
    %c0_i32_1 = arith.constant 0 : i32
    return %c0_i32, %c0_i32_0 : i32, i32
  }
  func.func @transform_5(%arg0: i32) -> (i32, i32, i32) {
    %c0_i32 = arith.constant 0 : i32
    %c0_i32_0 = arith.constant 0 : i32
    %c0_i32_1 = arith.constant 0 : i32
    %c0_i32_2 = arith.constant 0 : i32
    return %c0_i32, %c0_i32_0, %c0_i32_1 : i32, i32, i32
  }
  func.func @transform_6(%arg0: i32) -> (i32, i32) {
    %c0_i32 = arith.constant 0 : i32
    %c0_i32_0 = arith.constant 0 : i32
    %c0_i32_1 = arith.constant 0 : i32
    return %c0_i32, %c0_i32_0 : i32, i32
  }
  func.func @transform_7(%arg0: i32) -> (i32, i32, i32) {
    %c0_i32 = arith.constant 0 : i32
    %c0_i32_0 = arith.constant 0 : i32
    %c0_i32_1 = arith.constant 0 : i32
    %c0_i32_2 = arith.constant 0 : i32
    return %c0_i32, %c0_i32_0, %c0_i32_1 : i32, i32, i32
  }
  func.func @transform_8(%arg0: i32) -> (i32, i32) {
    %c0_i32 = arith.constant 0 : i32
    %c0_i32_0 = arith.constant 0 : i32
    %c0_i32_1 = arith.constant 0 : i32
    return %c0_i32, %c0_i32_0 : i32, i32
  }
  func.func @transform_9(%arg0: i32) -> (i32, i32, i32) {
    %c0_i32 = arith.constant 0 : i32
    %c0_i32_0 = arith.constant 0 : i32
    %c0_i32_1 = arith.constant 0 : i32
    %c0_i32_2 = arith.constant 0 : i32
    return %c0_i32, %c0_i32_0, %c0_i32_1 : i32, i32, i32
  }
  func.func @transform_10(%arg0: i32) -> (i32, i32) {
    %c0_i32 = arith.constant 0 : i32
    %c0_i32_0 = arith.constant 0 : i32
    %c0_i32_1 = arith.constant 0 : i32
    return %c0_i32, %c0_i32_0 : i32, i32
  }
  func.func @transform_11(%arg0: i32) -> (i32, i32) {
    %c0_i32 = arith.constant 0 : i32
    %c0_i32_0 = arith.constant 0 : i32
    %c0_i32_1 = arith.constant 0 : i32
    return %c0_i32, %c0_i32_0 : i32, i32
  }
  func.func @transform_12(%arg0: i32) -> (i32, i32) {
    %c0_i32 = arith.constant 0 : i32
    %c0_i32_0 = arith.constant 0 : i32
    %c0_i32_1 = arith.constant 0 : i32
    return %c0_i32, %c0_i32_0 : i32, i32
  }
  func.func @transform_13(%arg0: i32) -> (i32, i32) {
    %c0_i32 = arith.constant 0 : i32
    %c0_i32_0 = arith.constant 0 : i32
    %c0_i32_1 = arith.constant 0 : i32
    return %c0_i32, %c0_i32_0 : i32, i32
  }
  func.func @transform_14(%arg0: i32) -> (i32, i32) {
    %c0_i32 = arith.constant 0 : i32
    %c0_i32_0 = arith.constant 0 : i32
    %c0_i32_1 = arith.constant 0 : i32
    return %c0_i32, %c0_i32_0 : i32, i32
  }
  func.func @transform_15(%arg0: i32) -> (i32, i32, i32) {
    %c0_i32 = arith.constant 0 : i32
    %c0_i32_0 = arith.constant 0 : i32
    %c0_i32_1 = arith.constant 0 : i32
    return %arg0, %c0_i32, %c0_i32_0 : i32, i32, i32
  }
}

</mosaic_0001>

<llo_original>
// kernel: forward.1
$region0: #{forward.1}
  #allocation0 [shape = 'u32[]', space=smem, size = 0x4, offset = 0x4, fixed_abs, tag = 'smem constant byte address 0x4 - core index']
  #allocation1 [shape = 'u32[144,128]{1,0:T(1,128)}', space=vmem, size = 0x12000, scoped, tag = 'internal scratch']
  #allocation2 [shape = 'f32[30,120]{1,0:T(8,128)}', space=vmem, size = 0x4000, scoped, tag = 'scratch operand']
  #allocation3 [shape = 'f32[14,112]{1,0:T(8,128)}', space=vmem, size = 0x2000, scoped, tag = 'scratch operand']
  #allocation4 [shape = 'f32[6,96]{1,0:T(8,128)}', space=vmem, size = 0x1000, scoped, tag = 'scratch operand']
  %s0 = inlined_call_operand.vmem [shape: f32[2,32,32], index: 0, kind: input, shape index: {}]
  %s1 = inlined_call_operand.vmem [shape: f32[3,32,120], index: 1, kind: input, shape index: {}]
  %s2 = inlined_call_operand.vmem [shape: f32[1,120], index: 2, kind: input, shape index: {}]
  %s3 = inlined_call_operand.vmem [shape: f32[6,120,112], index: 3, kind: input, shape index: {}]
  %s4 = inlined_call_operand.vmem [shape: f32[1,112], index: 4, kind: input, shape index: {}]
  %s5 = inlined_call_operand.vmem [shape: f32[6,112,96], index: 5, kind: input, shape index: {}]
  %s6 = inlined_call_operand.vmem [shape: f32[1,96], index: 6, kind: input, shape index: {}]
  %s7 = inlined_call_operand.vmem [shape: f32[6,96,64], index: 7, kind: input, shape index: {}]
  %s8 = inlined_call_operand.vmem [shape: f32[1,64], index: 8, kind: input, shape index: {}]
  %s9 = inlined_call_operand.vmem [shape: f32[2,64,64], index: 9, kind: input, shape index: {}]
  %s10 = inlined_call_operand.vmem [shape: f32[1,64], index: 10, kind: input, shape index: {}]
  %s11 = inlined_call_operand.vmem [shape: f32[64,32], index: 11, kind: input, shape index: {}]
  %s12 = inlined_call_operand.vmem [shape: f32[1,32], index: 12, kind: input, shape index: {}]
  %s13 = inlined_call_operand.vmem [shape: f32[32,2], index: 13, kind: input, shape index: {}]
  %s14 = inlined_call_operand.vmem [shape: f32[1,2], index: 14, kind: input, shape index: {}]
  %s15 = inlined_call_operand.hbm [shape: f32[2,1,2], index: 15, kind: output, shape index: {}]
  %s16 = sld [smem:[#allocation0]]
  $region93: #{forward.1} parent=0
    _
  %s18 = ssub.s32 1, %s16
  %s19 = scalar_select 0, %s18, %s16
  $region1: #{forward.1} parent=0
    #allocation5 [shape = 'u8[1024]{0}', space=vmem, size = 0x400, scoped, tag = 'output window, operand 0']
    #allocation6 [shape = 's32[2]{0}', space=sflag, size = 0x8, scoped, tag = 'scoped memory for forward.1']
    %20 = vsyncpa [#allocation6], 0
    %s21 = scalar_lea.sflag [#allocation6], 1
    %22 = vsyncpa %s21, 0
    loop: start=0, step=1, limit=4
    $region2: #{forward.1} parent=1 // loop_pre_header
      _
    $region3: #{forward.1} parent=1 // loop_header
      %s24 = sphi 0, %s28
      %p25 = scmp.ge.s32.totalorder %s24, 4
      %s34 = sphi 0, %s36
      %s37 = sphi 0, %s34
      %s38 = sphi 0, %s37
      %s54 = sphi 0, %s38
      %s58 = sphi 0, %s58
      %s60 = sphi 0, %s58
      %s61 = sphi 0, %s60
      %s75 = sphi 0, %s61
      %s79 = sphi 0, %s79
      %s81 = sphi 0, %s79
      %s82 = sphi 0, %s81
      %s96 = sphi 0, %s82
      %s100 = sphi 0, %s100
      %s102 = sphi 0, %s100
      %s103 = sphi 0, %s102
      %s117 = sphi 0, %s103
      %s121 = sphi 0, %s121
      %s123 = sphi 0, %s121
      %s124 = sphi 0, %s123
      %s138 = sphi 0, %s124
      %s142 = sphi 0, %s142
      %s144 = sphi 0, %s142
      %s145 = sphi 0, %s144
      %s159 = sphi 0, %s145
      %s163 = sphi 0, %s163
      %s165 = sphi 0, %s163
      %s166 = sphi 0, %s165
      %s180 = sphi 0, %s166
      %s184 = sphi 0, %s184
      %s186 = sphi 0, %s184
      %s187 = sphi 0, %s186
      %s201 = sphi 0, %s187
      %s205 = sphi 0, %s205
      %s207 = sphi 0, %s205
      %s208 = sphi 0, %s207
      %s222 = sphi 0, %s208
      %s226 = sphi 0, %s226
      %s228 = sphi 0, %s226
      %s229 = sphi 0, %s228
      %s243 = sphi 0, %s229
      %s247 = sphi 0, %s247
      %s249 = sphi 0, %s247
      %s250 = sphi 0, %s249
      %s264 = sphi 0, %s250
      %s268 = sphi 0, %s268
      %s270 = sphi 0, %s268
      %s271 = sphi 0, %s270
      %s285 = sphi 0, %s271
      %s289 = sphi 0, %s289
      %s291 = sphi 0, %s289
      %s292 = sphi 0, %s291
      %s306 = sphi 0, %s292
      %s310 = sphi 0, %s310
      %s312 = sphi 0, %s310
      %s313 = sphi 0, %s312
      %s327 = sphi 0, %s313
      %s331 = sphi 0, %s331
      %s333 = sphi 0, %s331
      %s334 = sphi 0, %s333
      %s348 = sphi 0, %s334
      %s354 = sphi 0, %s356
      %s357 = sphi 0, %s354
      %s358 = sphi 0, %s357
      %s374 = sphi 0, %s358
    $region4: #{forward.1} parent=1 // loop_header_branch
      %27 = sbr.rel (%p25) target = $region8
    $region5: #{forward.1} parent=1 // loop_body
      %s29 = ssub.s32 %s24, 1
      %s30 = ssub.s32 %s24, 2
      %s31 = sadd.s32 %s24, 1
      %s32 = ssub.s32 %s24, %s31
      %p33 = scmp.eq.s32.totalorder %s32, 0
      %s35 = sadd.s32 %s34, 1
      %s36 = scalar_select %p33, %s34, %s35
      %p39 = pneg %p33
      %p40 = scmp.eq.s32.totalorder %s24, 1
      %p41 = por %p39, %p40
      %p42 = scmp.ne.s32.totalorder %s34, %s37
      %p43 = scmp.eq.s32.totalorder %s24, 0
      %p44 = por %p42, %p43
      %p45 = scmp.ne.s32.totalorder %s34, %s37
      %p46 = scmp.eq.s32.totalorder %s29, 1
      %p47 = por %p45, %p46
      %p48 = scmp.ne.s32.totalorder %s37, %s38
      %p49 = scmp.eq.s32.totalorder %s29, 0
      %p50 = por %p48, %p49
      %p51 = scmp.ne.s32.totalorder %s37, %s38
      %p52 = scmp.eq.s32.totalorder %s30, 1
      %p53 = por %p51, %p52
      %p55 = scmp.ne.s32.totalorder %s38, %s54
      %p56 = scmp.eq.s32.totalorder %s30, 0
      %p57 = por %p55, %p56
      %s59 = sadd.s32 %s58, 1
      %p62 = scmp.eq.s32.totalorder %s24, 1
      %p63 = scmp.ne.s32.totalorder %s58, %s60
      %p64 = scmp.eq.s32.totalorder %s24, 0
      %p65 = por %p63, %p64
      %p66 = scmp.ne.s32.totalorder %s58, %s60
      %p67 = scmp.eq.s32.totalorder %s29, 1
      %p68 = por %p66, %p67
      %p69 = scmp.ne.s32.totalorder %s60, %s61
      %p70 = scmp.eq.s32.totalorder %s29, 0
      %p71 = por %p69, %p70
      %p72 = scmp.ne.s32.totalorder %s60, %s61
      %p73 = scmp.eq.s32.totalorder %s30, 1
      %p74 = por %p72, %p73
      %p76 = scmp.ne.s32.totalorder %s61, %s75
      %p77 = scmp.eq.s32.totalorder %s30, 0
      %p78 = por %p76, %p77
      %s80 = sadd.s32 %s79, 1
      %p83 = scmp.eq.s32.totalorder %s24, 1
      %p84 = scmp.ne.s32.totalorder %s79, %s81
      %p85 = scmp.eq.s32.totalorder %s24, 0
      %p86 = por %p84, %p85
      %p87 = scmp.ne.s32.totalorder %s79, %s81
      %p88 = scmp.eq.s32.totalorder %s29, 1
      %p89 = por %p87, %p88
      %p90 = scmp.ne.s32.totalorder %s81, %s82
      %p91 = scmp.eq.s32.totalorder %s29, 0
      %p92 = por %p90, %p91
      %p93 = scmp.ne.s32.totalorder %s81, %s82
      %p94 = scmp.eq.s32.totalorder %s30, 1
      %p95 = por %p93, %p94
      %p97 = scmp.ne.s32.totalorder %s82, %s96
      %p98 = scmp.eq.s32.totalorder %s30, 0
      %p99 = por %p97, %p98
      %s101 = sadd.s32 %s100, 1
      %p104 = scmp.eq.s32.totalorder %s24, 1
      %p105 = scmp.ne.s32.totalorder %s100, %s102
      %p106 = scmp.eq.s32.totalorder %s24, 0
      %p107 = por %p105, %p106
      %p108 = scmp.ne.s32.totalorder %s100, %s102
      %p109 = scmp.eq.s32.totalorder %s29, 1
      %p110 = por %p108, %p109
      %p111 = scmp.ne.s32.totalorder %s102, %s103
      %p112 = scmp.eq.s32.totalorder %s29, 0
      %p113 = por %p111, %p112
      %p114 = scmp.ne.s32.totalorder %s102, %s103
      %p115 = scmp.eq.s32.totalorder %s30, 1
      %p116 = por %p114, %p115
      %p118 = scmp.ne.s32.totalorder %s103, %s117
      %p119 = scmp.eq.s32.totalorder %s30, 0
      %p120 = por %p118, %p119
      %s122 = sadd.s32 %s121, 1
      %p125 = scmp.eq.s32.totalorder %s24, 1
      %p126 = scmp.ne.s32.totalorder %s121, %s123
      %p127 = scmp.eq.s32.totalorder %s24, 0
      %p128 = por %p126, %p127
      %p129 = scmp.ne.s32.totalorder %s121, %s123
      %p130 = scmp.eq.s32.totalorder %s29, 1
      %p131 = por %p129, %p130
      %p132 = scmp.ne.s32.totalorder %s123, %s124
      %p133 = scmp.eq.s32.totalorder %s29, 0
      %p134 = por %p132, %p133
      %p135 = scmp.ne.s32.totalorder %s123, %s124
      %p136 = scmp.eq.s32.totalorder %s30, 1
      %p137 = por %p135, %p136
      %p139 = scmp.ne.s32.totalorder %s124, %s138
      %p140 = scmp.eq.s32.totalorder %s30, 0
      %p141 = por %p139, %p140
      %s143 = sadd.s32 %s142, 1
      %p146 = scmp.eq.s32.totalorder %s24, 1
      %p147 = scmp.ne.s32.totalorder %s142, %s144
      %p148 = scmp.eq.s32.totalorder %s24, 0
      %p149 = por %p147, %p148
      %p150 = scmp.ne.s32.totalorder %s142, %s144
      %p151 = scmp.eq.s32.totalorder %s29, 1
      %p152 = por %p150, %p151
      %p153 = scmp.ne.s32.totalorder %s144, %s145
      %p154 = scmp.eq.s32.totalorder %s29, 0
      %p155 = por %p153, %p154
      %p156 = scmp.ne.s32.totalorder %s144, %s145
      %p157 = scmp.eq.s32.totalorder %s30, 1
      %p158 = por %p156, %p157
      %p160 = scmp.ne.s32.totalorder %s145, %s159
      %p161 = scmp.eq.s32.totalorder %s30, 0
      %p162 = por %p160, %p161
      %s164 = sadd.s32 %s163, 1
      %p167 = scmp.eq.s32.totalorder %s24, 1
      %p168 = scmp.ne.s32.totalorder %s163, %s165
      %p169 = scmp.eq.s32.totalorder %s24, 0
      %p170 = por %p168, %p169
      %p171 = scmp.ne.s32.totalorder %s163, %s165
      %p172 = scmp.eq.s32.totalorder %s29, 1
      %p173 = por %p171, %p172
      %p174 = scmp.ne.s32.totalorder %s165, %s166
      %p175 = scmp.eq.s32.totalorder %s29, 0
      %p176 = por %p174, %p175
      %p177 = scmp.ne.s32.totalorder %s165, %s166
      %p178 = scmp.eq.s32.totalorder %s30, 1
      %p179 = por %p177, %p178
      %p181 = scmp.ne.s32.totalorder %s166, %s180
      %p182 = scmp.eq.s32.totalorder %s30, 0
      %p183 = por %p181, %p182
      %s185 = sadd.s32 %s184, 1
      %p188 = scmp.eq.s32.totalorder %s24, 1
      %p189 = scmp.ne.s32.totalorder %s184, %s186
      %p190 = scmp.eq.s32.totalorder %s24, 0
      %p191 = por %p189, %p190
      %p192 = scmp.ne.s32.totalorder %s184, %s186
      %p193 = scmp.eq.s32.totalorder %s29, 1
      %p194 = por %p192, %p193
      %p195 = scmp.ne.s32.totalorder %s186, %s187
      %p196 = scmp.eq.s32.totalorder %s29, 0
      %p197 = por %p195, %p196
      %p198 = scmp.ne.s32.totalorder %s186, %s187
      %p199 = scmp.eq.s32.totalorder %s30, 1
      %p200 = por %p198, %p199
      %p202 = scmp.ne.s32.totalorder %s187, %s201
      %p203 = scmp.eq.s32.totalorder %s30, 0
      %p204 = por %p202, %p203
      %s206 = sadd.s32 %s205, 1
      %p209 = scmp.eq.s32.totalorder %s24, 1
      %p210 = scmp.ne.s32.totalorder %s205, %s207
      %p211 = scmp.eq.s32.totalorder %s24, 0
      %p212 = por %p210, %p211
      %p213 = scmp.ne.s32.totalorder %s205, %s207
      %p214 = scmp.eq.s32.totalorder %s29, 1
      %p215 = por %p213, %p214
      %p216 = scmp.ne.s32.totalorder %s207, %s208
      %p217 = scmp.eq.s32.totalorder %s29, 0
      %p218 = por %p216, %p217
      %p219 = scmp.ne.s32.totalorder %s207, %s208
      %p220 = scmp.eq.s32.totalorder %s30, 1
      %p221 = por %p219, %p220
      %p223 = scmp.ne.s32.totalorder %s208, %s222
      %p224 = scmp.eq.s32.totalorder %s30, 0
      %p225 = por %p223, %p224
      %s227 = sadd.s32 %s226, 1
      %p230 = scmp.eq.s32.totalorder %s24, 1
      %p231 = scmp.ne.s32.totalorder %s226, %s228
      %p232 = scmp.eq.s32.totalorder %s24, 0
      %p233 = por %p231, %p232
      %p234 = scmp.ne.s32.totalorder %s226, %s228
      %p235 = scmp.eq.s32.totalorder %s29, 1
      %p236 = por %p234, %p235
      %p237 = scmp.ne.s32.totalorder %s228, %s229
      %p238 = scmp.eq.s32.totalorder %s29, 0
      %p239 = por %p237, %p238
      %p240 = scmp.ne.s32.totalorder %s228, %s229
      %p241 = scmp.eq.s32.totalorder %s30, 1
      %p242 = por %p240, %p241
      %p244 = scmp.ne.s32.totalorder %s229, %s243
      %p245 = scmp.eq.s32.totalorder %s30, 0
      %p246 = por %p244, %p245
      %s248 = sadd.s32 %s247, 1
      %p251 = scmp.eq.s32.totalorder %s24, 1
      %p252 = scmp.ne.s32.totalorder %s247, %s249
      %p253 = scmp.eq.s32.totalorder %s24, 0
      %p254 = por %p252, %p253
      %p255 = scmp.ne.s32.totalorder %s247, %s249
      %p256 = scmp.eq.s32.totalorder %s29, 1
      %p257 = por %p255, %p256
      %p258 = scmp.ne.s32.totalorder %s249, %s250
      %p259 = scmp.eq.s32.totalorder %s29, 0
      %p260 = por %p258, %p259
      %p261 = scmp.ne.s32.totalorder %s249, %s250
      %p262 = scmp.eq.s32.totalorder %s30, 1
      %p263 = por %p261, %p262
      %p265 = scmp.ne.s32.totalorder %s250, %s264
      %p266 = scmp.eq.s32.totalorder %s30, 0
      %p267 = por %p265, %p266
      %s269 = sadd.s32 %s268, 1
      %p272 = scmp.eq.s32.totalorder %s24, 1
      %p273 = scmp.ne.s32.totalorder %s268, %s270
      %p274 = scmp.eq.s32.totalorder %s24, 0
      %p275 = por %p273, %p274
      %p276 = scmp.ne.s32.totalorder %s268, %s270
      %p277 = scmp.eq.s32.totalorder %s29, 1
      %p278 = por %p276, %p277
      %p279 = scmp.ne.s32.totalorder %s270, %s271
      %p280 = scmp.eq.s32.totalorder %s29, 0
      %p281 = por %p279, %p280
      %p282 = scmp.ne.s32.totalorder %s270, %s271
      %p283 = scmp.eq.s32.totalorder %s30, 1
      %p284 = por %p282, %p283
      %p286 = scmp.ne.s32.totalorder %s271, %s285
      %p287 = scmp.eq.s32.totalorder %s30, 0
      %p288 = por %p286, %p287
      %s290 = sadd.s32 %s289, 1
      %p293 = scmp.eq.s32.totalorder %s24, 1
      %p294 = scmp.ne.s32.totalorder %s289, %s291
      %p295 = scmp.eq.s32.totalorder %s24, 0
      %p296 = por %p294, %p295
      %p297 = scmp.ne.s32.totalorder %s289, %s291
      %p298 = scmp.eq.s32.totalorder %s29, 1
      %p299 = por %p297, %p298
      %p300 = scmp.ne.s32.totalorder %s291, %s292
      %p301 = scmp.eq.s32.totalorder %s29, 0
      %p302 = por %p300, %p301
      %p303 = scmp.ne.s32.totalorder %s291, %s292
      %p304 = scmp.eq.s32.totalorder %s30, 1
      %p305 = por %p303, %p304
      %p307 = scmp.ne.s32.totalorder %s292, %s306
      %p308 = scmp.eq.s32.totalorder %s30, 0
      %p309 = por %p307, %p308
      %s311 = sadd.s32 %s310, 1
      %p314 = scmp.eq.s32.totalorder %s24, 1
      %p315 = scmp.ne.s32.totalorder %s310, %s312
      %p316 = scmp.eq.s32.totalorder %s24, 0
      %p317 = por %p315, %p316
      %p318 = scmp.ne.s32.totalorder %s310, %s312
      %p319 = scmp.eq.s32.totalorder %s29, 1
      %p320 = por %p318, %p319
      %p321 = scmp.ne.s32.totalorder %s312, %s313
      %p322 = scmp.eq.s32.totalorder %s29, 0
      %p323 = por %p321, %p322
      %p324 = scmp.ne.s32.totalorder %s312, %s313
      %p325 = scmp.eq.s32.totalorder %s30, 1
      %p326 = por %p324, %p325
      %p328 = scmp.ne.s32.totalorder %s313, %s327
      %p329 = scmp.eq.s32.totalorder %s30, 0
      %p330 = por %p328, %p329
      %s332 = sadd.s32 %s331, 1
      %p335 = scmp.eq.s32.totalorder %s24, 1
      %p336 = scmp.ne.s32.totalorder %s331, %s333
      %p337 = scmp.eq.s32.totalorder %s24, 0
      %p338 = por %p336, %p337
      %p339 = scmp.ne.s32.totalorder %s331, %s333
      %p340 = scmp.eq.s32.totalorder %s29, 1
      %p341 = por %p339, %p340
      %p342 = scmp.ne.s32.totalorder %s333, %s334
      %p343 = scmp.eq.s32.totalorder %s29, 0
      %p344 = por %p342, %p343
      %p345 = scmp.ne.s32.totalorder %s333, %s334
      %p346 = scmp.eq.s32.totalorder %s30, 1
      %p347 = por %p345, %p346
      %p349 = scmp.ne.s32.totalorder %s334, %s348
      %p350 = scmp.eq.s32.totalorder %s30, 0
      %p351 = por %p349, %p350
      %s352 = ssub.s32 %s24, %s31
      %p353 = scmp.eq.s32.totalorder %s352, 0
      %s355 = sadd.s32 %s354, 1
      %s356 = scalar_select %p353, %s354, %s355
      %p359 = pneg %p353
      %p360 = scmp.eq.s32.totalorder %s24, 1
      %p361 = por %p359, %p360
      %p362 = scmp.ne.s32.totalorder %s354, %s357
      %p363 = scmp.eq.s32.totalorder %s24, 0
      %p364 = por %p362, %p363
      %p365 = scmp.ne.s32.totalorder %s354, %s357
      %p366 = scmp.eq.s32.totalorder %s29, 1
      %p367 = por %p365, %p366
      %p368 = scmp.ne.s32.totalorder %s357, %s358
      %p369 = scmp.eq.s32.totalorder %s29, 0
      %p370 = por %p368, %p369
      %p371 = scmp.ne.s32.totalorder %s357, %s358
      %p372 = scmp.eq.s32.totalorder %s30, 1
      %p373 = por %p371, %p372
      %p375 = scmp.ne.s32.totalorder %s358, %s374
      %p376 = scmp.eq.s32.totalorder %s30, 0
      %p377 = por %p375, %p376
      %p378 = scmp.le.s32.totalorder 1, %s24
      %p379 = scmp.lt.s32.totalorder %s24, 3
      %p380 = pnand %p378, %p379
      %p381 = pneg %p380
      // Predicated region
      $region9: #{forward.1} parent=5 // pred_check
        _
      $region10: #{forward.1} parent=5 // pred_check_branch
        %383 = sbr.rel (%p380) target = $region12
      $region11: #{forward.1} parent=5 // pred_region
        %s384 = ssub.s32 %s24, 1
        // Predicated region
        $region13: #{forward.1} parent=11 // pred_check
          %p385 = pneg %p71
        $region14: #{forward.1} parent=11 // pred_check_branch
          %387 = sbr.rel (%p385) target = $region16
        $region15: #{forward.1} parent=11 // pred_region
          _
        $region16: #{forward.1} parent=11 // pred_fallthru
          _
        // Predicated region
        $region17: #{forward.1} parent=11 // pred_check
          %p388 = pneg %p92
        $region18: #{forward.1} parent=11 // pred_check_branch
          %390 = sbr.rel (%p388) target = $region20
        $region19: #{forward.1} parent=11 // pred_region
          _
        $region20: #{forward.1} parent=11 // pred_fallthru
          _
        // Predicated region
        $region21: #{forward.1} parent=11 // pred_check
          %p391 = pneg %p113
        $region22: #{forward.1} parent=11 // pred_check_branch
          %393 = sbr.rel (%p391) target = $region24
        $region23: #{forward.1} parent=11 // pred_region
          _
        $region24: #{forward.1} parent=11 // pred_fallthru
          _
        // Predicated region
        $region25: #{forward.1} parent=11 // pred_check
          %p394 = pneg %p134
        $region26: #{forward.1} parent=11 // pred_check_branch
          %396 = sbr.rel (%p394) target = $region28
        $region27: #{forward.1} parent=11 // pred_region
          _
        $region28: #{forward.1} parent=11 // pred_fallthru
          _
        // Predicated region
        $region29: #{forward.1} parent=11 // pred_check
          %p397 = pneg %p155
        $region30: #{forward.1} parent=11 // pred_check_branch
          %399 = sbr.rel (%p397) target = $region32
        $region31: #{forward.1} parent=11 // pred_region
          _
        $region32: #{forward.1} parent=11 // pred_fallthru
          _
        // Predicated region
        $region33: #{forward.1} parent=11 // pred_check
          %p400 = pneg %p176
        $region34: #{forward.1} parent=11 // pred_check_branch
          %402 = sbr.rel (%p400) target = $region36
        $region35: #{forward.1} parent=11 // pred_region
          _
        $region36: #{forward.1} parent=11 // pred_fallthru
          _
        // Predicated region
        $region37: #{forward.1} parent=11 // pred_check
          %p403 = pneg %p197
        $region38: #{forward.1} parent=11 // pred_check_branch
          %405 = sbr.rel (%p403) target = $region40
        $region39: #{forward.1} parent=11 // pred_region
          _
        $region40: #{forward.1} parent=11 // pred_fallthru
          _
        // Predicated region
        $region41: #{forward.1} parent=11 // pred_check
          %p406 = pneg %p218
        $region42: #{forward.1} parent=11 // pred_check_branch
          %408 = sbr.rel (%p406) target = $region44
        $region43: #{forward.1} parent=11 // pred_region
          _
        $region44: #{forward.1} parent=11 // pred_fallthru
          _
        // Predicated region
        $region45: #{forward.1} parent=11 // pred_check
          %p409 = pneg %p239
        $region46: #{forward.1} parent=11 // pred_check_branch
          %411 = sbr.rel (%p409) target = $region48
        $region47: #{forward.1} parent=11 // pred_region
          _
        $region48: #{forward.1} parent=11 // pred_fallthru
          _
        // Predicated region
        $region49: #{forward.1} parent=11 // pred_check
          %p412 = pneg %p260
        $region50: #{forward.1} parent=11 // pred_check_branch
          %414 = sbr.rel (%p412) target = $region52
        $region51: #{forward.1} parent=11 // pred_region
          _
        $region52: #{forward.1} parent=11 // pred_fallthru
          _
        // Predicated region
        $region53: #{forward.1} parent=11 // pred_check
          %p415 = pneg %p281
        $region54: #{forward.1} parent=11 // pred_check_branch
          %417 = sbr.rel (%p415) target = $region56
        $region55: #{forward.1} parent=11 // pred_region
          _
        $region56: #{forward.1} parent=11 // pred_fallthru
          _
        // Predicated region
        $region57: #{forward.1} parent=11 // pred_check
          %p418 = pneg %p302
        $region58: #{forward.1} parent=11 // pred_check_branch
          %420 = sbr.rel (%p418) target = $region60
        $region59: #{forward.1} parent=11 // pred_region
          _
        $region60: #{forward.1} parent=11 // pred_fallthru
          _
        // Predicated region
        $region61: #{forward.1} parent=11 // pred_check
          %p421 = pneg %p323
        $region62: #{forward.1} parent=11 // pred_check_branch
          %423 = sbr.rel (%p421) target = $region64
        $region63: #{forward.1} parent=11 // pred_region
          _
        $region64: #{forward.1} parent=11 // pred_fallthru
          _
        // Predicated region
        $region65: #{forward.1} parent=11 // pred_check
          %p424 = pneg %p344
        $region66: #{forward.1} parent=11 // pred_check_branch
          %426 = sbr.rel (%p424) target = $region68
        $region67: #{forward.1} parent=11 // pred_region
          _
        $region68: #{forward.1} parent=11 // pred_fallthru
          _
      $region12: #{forward.1} parent=5 // pred_fallthru
        _
      %p427 = scmp.lt.s32.totalorder %s24, 2
      // Predicated region
      $region69: #{forward.1} parent=5 // pred_check
        %p428 = pneg %p427
      $region70: #{forward.1} parent=5 // pred_check_branch
        %430 = sbr.rel (%p428) target = $region72
      $region71: #{forward.1} parent=5 // pred_region
        // Predicated region
        $region73: #{forward.1} parent=71 // pred_check
          %p431 = pneg %p44
        $region74: #{forward.1} parent=71 // pred_check_branch
          %433 = sbr.rel (%p431) target = $region76
        $region75: #{forward.1} parent=71 // pred_region
          %p434 = scmp.lt.s32.totalorder %s24, 1
          %s435 = scalar_select %p434, %s24, 1
          %s436 = smul.addr %s435, 4
          %s437 = smul.addr %s436, 8
          %s438 = scalar_lea.vmem %s0, %s437
        $region76: #{forward.1} parent=71 // pred_fallthru
          _
      $region72: #{forward.1} parent=5 // pred_fallthru
        _
      %p439 = scmp.le.s32.totalorder 1, %s24
      %p440 = scmp.lt.s32.totalorder %s24, 3
      %p441 = pnand %p439, %p440
      %p442 = pneg %p441
      // Predicated region
      $region77: #{forward.1} parent=5 // pred_check
        _
      $region78: #{forward.1} parent=5 // pred_check_branch
        %444 = sbr.rel (%p441) target = $region80
      $region79: #{forward.1} parent=5 // pred_region
        %s445 = ssub.s32 %s24, 1
        %p446 = scmp.lt.s32.totalorder %s29, 1
        %s447 = scalar_select %p446, %s29, 1
        %s448 = smul.addr %s447, 4
        %s449 = smul.addr %s448, 8
        %s450 = scalar_lea.vmem %s0, %s449
        %p451 = pneg %p50
        %p452 = pneg %p47
        %p453 = pneg %p71
        %p454 = pneg %p68
        %p455 = pneg %p92
        %p456 = pneg %p89
        %p457 = pneg %p113
        %p458 = pneg %p110
        %p459 = pneg %p134
        %p460 = pneg %p131
        %p461 = pneg %p155
        %p462 = pneg %p152
        %p463 = pneg %p176
        %p464 = pneg %p173
        %p465 = pneg %p197
        %p466 = pneg %p194
        %p467 = pneg %p218
        %p468 = pneg %p215
        %p469 = pneg %p239
        %p470 = pneg %p236
        %p471 = pneg %p260
        %p472 = pneg %p257
        %p473 = pneg %p281
        %p474 = pneg %p278
        %p475 = pneg %p302
        %p476 = pneg %p299
        %p477 = pneg %p323
        %p478 = pneg %p320
        %p479 = pneg %p344
        %p480 = pneg %p341
        %p481 = pneg %p370
        %p482 = pneg %p367
        %s483 = sand.u32 %s357, 1
        %s484 = scalar_lea.sflag [#allocation6], %s483
        %s485 = sand.u32 %s357, 1
        %s486 = scalar_lea.vmem [#allocation5], %s485
        %p487 = scmp.lt.s32.totalorder %s29, 1
        %s488 = scalar_select %p487, %s29, 1
        %s489 = smul.addr %s488, 4
        %s490 = smul.addr %s489, 8
        %s491 = scalar_lea.vmem %s0, %s490
        %v492 = vld [vmem:[%s491] sm:$0xff]
        %v493 = vld [vmem:[%s491 + $0x8] sm:$0xff]
        %v494 = vld [vmem:[%s491 + $0x10] sm:$0xff]
        %v495 = vld [vmem:[%s491 + $0x18] sm:$0xff]
        %v496 = vld [vmem:[%s1] sm:$0xff]
        %v497 = vld [vmem:[%s1 + $0x8] sm:$0xff]
        %v498 = vld [vmem:[%s1 + $0x10] sm:$0xff]
        %v499 = vld [vmem:[%s1 + $0x18] sm:$0xff]
        %s500 = scalar_lea.vmem %s1, 32
        %v501 = vld [vmem:[%s500] sm:$0xff]
        %v502 = vld [vmem:[%s500 + $0x8] sm:$0xff]
        %v503 = vld [vmem:[%s500 + $0x10] sm:$0xff]
        %v504 = vld [vmem:[%s500 + $0x18] sm:$0xff]
        %vm509 = vcmask 1046528
        %v510 = vrot.slane %v492, 1
        %v511 = vrot.slane %v493, 1
        %v512 = vsel %vm509, %v510, %v511
        %v513 = vrot.slane %v494, 1
        %v514 = vsel %vm509, %v511, %v513
        %v515 = vrot.slane %v495, 1
        %v516 = vsel %vm509, %v513, %v515
        %vm517 = vcmask 261120
        %v518 = vsel %vm517, %v512, 0
        %v520 = vsel %vm517, %v514, 0
        %v522 = vsel %vm517, %v516, 0
        %v524 = vsel %vm517, %v515, 0
        %526 = vmatprep.subr.mxu0 0.0
        %527 = vmatpush1.msra.mxu0 %v501
        %528 = vmatprep.subr.mxu0 0.0
        %529 = vmatpush1.msra.mxu0 %v502
        %530 = vmatprep.subr.mxu0 0.0
        %531 = vmatpush1.msra.mxu0 %v503
        %532 = vmatprep.subr.mxu0 0.0
        %533 = vmatpush1.msra.mxu0 %v504
        %534 = vmatprep.subr.mxu0 0.0
        %535 = vmatpush1.msra.mxu0 0.0
        %536 = vmatprep.subr.mxu0 0.0
        %537 = vmatpush1.msra.mxu0 0.0
        %538 = vmatprep.subr.mxu0 0.0
        %539 = vmatpush1.msra.mxu0 0.0
        %540 = vmatprep.subr.mxu0 0.0
        %541 = vmatpush1.msra.mxu0 0.0
        %542 = vmatprep.subr.mxu0 0.0
        %543 = vmatpush1.msra.mxu0 0.0
        %544 = vmatprep.subr.mxu0 0.0
        %545 = vmatpush1.msra.mxu0 0.0
        %546 = vmatprep.subr.mxu0 0.0
        %547 = vmatpush1.msra.mxu0 0.0
        %548 = vmatprep.subr.mxu0 0.0
        %549 = vmatpush1.msra.mxu0 0.0
        %550 = vmatprep.subr.mxu0 0.0
        %551 = vmatpush1.msra.mxu0 0.0
        %552 = vmatprep.subr.mxu0 0.0
        %553 = vmatpush1.msra.mxu0 0.0
        %554 = vmatprep.subr.mxu0 0.0
        %555 = vmatpush1.msra.mxu0 0.0
        %556 = vmatprep.subr.mxu0 0.0
        %557 = vmatpush1.msra.mxu0 0.0
        %558 = vmatprep.subr.mxu0 0.0
        %559 = vmatpush1.msra.mxu0 0.0
        %560 = vmatprep.subr.mxu0 0.0
        %561 = vmatpush1.msra.mxu0 0.0
        %562 = vmatprep.subr.mxu0 0.0
        %563 = vmatpush1.msra.mxu0 0.0
        %564 = vmatprep.subr.mxu0 0.0
        %565 = vmatpush1.msra.mxu0 0.0
        %566 = vmatprep.subr.mxu0 0.0
        %567 = vmatpush1.msra.mxu0 0.0
        %568 = vmatprep.subr.mxu0 0.0
        %569 = vmatpush1.msra.mxu0 0.0
        %570 = vmatprep.subr.mxu0 0.0
        %571 = vmatpush1.msra.mxu0 0.0
        %572 = vmatprep.subr.mxu0 0.0
        %573 = vmatpush1.msra.mxu0 0.0
        %574 = vmatprep.subr.mxu0 0.0
        %575 = vmatpush1.msra.mxu0 0.0
        %576 = vmatprep.subr.mxu0 0.0
        %577 = vmatpush1.msra.mxu0 0.0
        %578 = vmatprep.subr.mxu0 0.0
        %579 = vmatpush1.msra.mxu0 0.0
        %580 = vmatprep.subr.mxu0 0.0
        %581 = vmatpush1.msra.mxu0 0.0
        %582 = vmatprep.subr.mxu0 0.0
        %583 = vmatpush1.msra.mxu0 0.0
        %584 = vmatprep.subr.mxu0 0.0
        %585 = vmatpush1.msra.mxu0 0.0
        %586 = vmatprep.subr.mxu0 0.0
        %587 = vmatpush1.msra.mxu0 0.0
        %588 = vmatprep.subr.mxu0 0.0
        %589 = vmatpush1.msra.mxu0 0.0
        %590 = vmatprep.mubr.f32.mxu0 0.0
        %591 = vmatmul.mubr.f32.gmra.mrb[0].mxu0 %v518
        %v592 = vpop.f32.mrb[0].mxu0
        %v593 = vadd.f32 0.0, %v592
        %v594 = vpop.f32.mrb[0].mxu0
        %595 = vmatprep.mubr.f32.mxu0 0.0
        %596 = vmatmul.mubr.f32.gmra.mrb[0].mxu0 %v520
        %v597 = vpop.f32.mrb[0].mxu0
        %v598 = vadd.f32 0.0, %v597
        %v599 = vpop.f32.mrb[0].mxu0
        %600 = vmatprep.mubr.f32.mxu0 0.0
        %601 = vmatmul.mubr.f32.gmra.mrb[0].mxu0 %v522
        %v602 = vpop.f32.mrb[0].mxu0
        %v603 = vadd.f32 0.0, %v602
        %v604 = vpop.f32.mrb[0].mxu0
        %605 = vmatprep.mubr.f32.mxu0 0.0
        %606 = vmatmul.mubr.f32.gmra.mrb[0].mxu0 %v524
        %v607 = vpop.f32.mrb[0].mxu0
        %v608 = vadd.f32 0.0, %v607
        %v609 = vpop.f32.mrb[0].mxu0
        %610 = vdwg.mxu0
        %v611 = vsel %vm517, %v492, 0
        %v613 = vsel %vm517, %v493, 0
        %v615 = vsel %vm517, %v494, 0
        %v617 = vsel %vm517, %v495, 0
        %619 = vmatprep.subr.mxu0 0.0
        %620 = vmatpush1.msra.mxu0 %v496
        %621 = vmatprep.subr.mxu0 0.0
        %622 = vmatpush1.msra.mxu0 %v497
        %623 = vmatprep.subr.mxu0 0.0
        %624 = vmatpush1.msra.mxu0 %v498
        %625 = vmatprep.subr.mxu0 0.0
        %626 = vmatpush1.msra.mxu0 %v499
        %627 = vmatprep.subr.mxu0 0.0
        %628 = vmatpush1.msra.mxu0 0.0
        %629 = vmatprep.subr.mxu0 0.0
        %630 = vmatpush1.msra.mxu0 0.0
        %631 = vmatprep.subr.mxu0 0.0
        %632 = vmatpush1.msra.mxu0 0.0
        %633 = vmatprep.subr.mxu0 0.0
        %634 = vmatpush1.msra.mxu0 0.0
        %635 = vmatprep.subr.mxu0 0.0
        %636 = vmatpush1.msra.mxu0 0.0
        %637 = vmatprep.subr.mxu0 0.0
        %638 = vmatpush1.msra.mxu0 0.0
        %639 = vmatprep.subr.mxu0 0.0
        %640 = vmatpush1.msra.mxu0 0.0
        %641 = vmatprep.subr.mxu0 0.0
        %642 = vmatpush1.msra.mxu0 0.0
        %643 = vmatprep.subr.mxu0 0.0
        %644 = vmatpush1.msra.mxu0 0.0
        %645 = vmatprep.subr.mxu0 0.0
        %646 = vmatpush1.msra.mxu0 0.0
        %647 = vmatprep.subr.mxu0 0.0
        %648 = vmatpush1.msra.mxu0 0.0
        %649 = vmatprep.subr.mxu0 0.0
        %650 = vmatpush1.msra.mxu0 0.0
        %651 = vmatprep.subr.mxu0 0.0
        %652 = vmatpush1.msra.mxu0 0.0
        %653 = vmatprep.subr.mxu0 0.0
        %654 = vmatpush1.msra.mxu0 0.0
        %655 = vmatprep.subr.mxu0 0.0
        %656 = vmatpush1.msra.mxu0 0.0
        %657 = vmatprep.subr.mxu0 0.0
        %658 = vmatpush1.msra.mxu0 0.0
        %659 = vmatprep.subr.mxu0 0.0
        %660 = vmatpush1.msra.mxu0 0.0
        %661 = vmatprep.subr.mxu0 0.0
        %662 = vmatpush1.msra.mxu0 0.0
        %663 = vmatprep.subr.mxu0 0.0
        %664 = vmatpush1.msra.mxu0 0.0
        %665 = vmatprep.subr.mxu0 0.0
        %666 = vmatpush1.msra.mxu0 0.0
        %667 = vmatprep.subr.mxu0 0.0
        %668 = vmatpush1.msra.mxu0 0.0
        %669 = vmatprep.subr.mxu0 0.0
        %670 = vmatpush1.msra.mxu0 0.0
        %671 = vmatprep.subr.mxu0 0.0
        %672 = vmatpush1.msra.mxu0 0.0
        %673 = vmatprep.subr.mxu0 0.0
        %674 = vmatpush1.msra.mxu0 0.0
        %675 = vmatprep.subr.mxu0 0.0
        %676 = vmatpush1.msra.mxu0 0.0
        %677 = vmatprep.subr.mxu0 0.0
        %678 = vmatpush1.msra.mxu0 0.0
        %679 = vmatprep.subr.mxu0 0.0
        %680 = vmatpush1.msra.mxu0 0.0
        %681 = vmatprep.subr.mxu0 0.0
        %682 = vmatpush1.msra.mxu0 0.0
        %683 = vmatprep.mubr.f32.mxu0 0.0
        %684 = vmatmul.mubr.f32.gmra.mrb[0].mxu0 %v611
        %v685 = vpop.f32.mrb[0].mxu0
        %v686 = vadd.f32 %v593, %v685
        %v687 = vpop.f32.mrb[0].mxu0
        %688 = vmatprep.mubr.f32.mxu0 0.0
        %689 = vmatmul.mubr.f32.gmra.mrb[0].mxu0 %v613
        %v690 = vpop.f32.mrb[0].mxu0
        %v691 = vadd.f32 %v598, %v690
        %v692 = vpop.f32.mrb[0].mxu0
        %693 = vmatprep.mubr.f32.mxu0 0.0
        %694 = vmatmul.mubr.f32.gmra.mrb[0].mxu0 %v615
        %v695 = vpop.f32.mrb[0].mxu0
        %v696 = vadd.f32 %v603, %v695
        %v697 = vpop.f32.mrb[0].mxu0
        %698 = vmatprep.mubr.f32.mxu0 0.0
        %699 = vmatmul.mubr.f32.gmra.mrb[0].mxu0 %v617
        %v700 = vpop.f32.mrb[0].mxu0
        %v701 = vadd.f32 %v608, %v700
        %v702 = vpop.f32.mrb[0].mxu0
        %703 = vdwg.mxu0
        %s704 = scalar_lea.vmem %s1, 64
        %v705 = vld [vmem:[%s704] sm:$0xff]
        %v706 = vld [vmem:[%s704 + $0x8] sm:$0xff]
        %v707 = vld [vmem:[%s704 + $0x10] sm:$0xff]
        %v708 = vld [vmem:[%s704 + $0x18] sm:$0xff]
        %vm709 = vcmask 1045504
        %v710 = vrot.slane %v492, 2
        %v711 = vrot.slane %v493, 2
        %v712 = vsel %vm709, %v710, %v711
        %v713 = vrot.slane %v494, 2
        %v714 = vsel %vm709, %v711, %v713
        %v715 = vrot.slane %v495, 2
        %v716 = vsel %vm709, %v713, %v715
        %v717 = vsel %vm517, %v712, 0
        %v719 = vsel %vm517, %v714, 0
        %v721 = vsel %vm517, %v716, 0
        %v723 = vsel %vm517, %v715, 0
        %725 = vmatprep.subr.mxu0 0.0
        %726 = vmatpush1.msra.mxu0 %v705
        %727 = vmatprep.subr.mxu0 0.0
        %728 = vmatpush1.msra.mxu0 %v706
        %729 = vmatprep.subr.mxu0 0.0
        %730 = vmatpush1.msra.mxu0 %v707
        %731 = vmatprep.subr.mxu0 0.0
        %732 = vmatpush1.msra.mxu0 %v708
        %733 = vmatprep.subr.mxu0 0.0
        %734 = vmatpush1.msra.mxu0 0.0
        %735 = vmatprep.subr.mxu0 0.0
        %736 = vmatpush1.msra.mxu0 0.0
        %737 = vmatprep.subr.mxu0 0.0
        %738 = vmatpush1.msra.mxu0 0.0
        %739 = vmatprep.subr.mxu0 0.0
        %740 = vmatpush1.msra.mxu0 0.0
        %741 = vmatprep.subr.mxu0 0.0
        %742 = vmatpush1.msra.mxu0 0.0
        %743 = vmatprep.subr.mxu0 0.0
        %744 = vmatpush1.msra.mxu0 0.0
        %745 = vmatprep.subr.mxu0 0.0
        %746 = vmatpush1.msra.mxu0 0.0
        %747 = vmatprep.subr.mxu0 0.0
        %748 = vmatpush1.msra.mxu0 0.0
        %749 = vmatprep.subr.mxu0 0.0
        %750 = vmatpush1.msra.mxu0 0.0
        %751 = vmatprep.subr.mxu0 0.0
        %752 = vmatpush1.msra.mxu0 0.0
        %753 = vmatprep.subr.mxu0 0.0
        %754 = vmatpush1.msra.mxu0 0.0
        %755 = vmatprep.subr.mxu0 0.0
        %756 = vmatpush1.msra.mxu0 0.0
        %757 = vmatprep.subr.mxu0 0.0
        %758 = vmatpush1.msra.mxu0 0.0
        %759 = vmatprep.subr.mxu0 0.0
        %760 = vmatpush1.msra.mxu0 0.0
        %761 = vmatprep.subr.mxu0 0.0
        %762 = vmatpush1.msra.mxu0 0.0
        %763 = vmatprep.subr.mxu0 0.0
        %764 = vmatpush1.msra.mxu0 0.0
        %765 = vmatprep.subr.mxu0 0.0
        %766 = vmatpush1.msra.mxu0 0.0
        %767 = vmatprep.subr.mxu0 0.0
        %768 = vmatpush1.msra.mxu0 0.0
        %769 = vmatprep.subr.mxu0 0.0
        %770 = vmatpush1.msra.mxu0 0.0
        %771 = vmatprep.subr.mxu0 0.0
        %772 = vmatpush1.msra.mxu0 0.0
        %773 = vmatprep.subr.mxu0 0.0
        %774 = vmatpush1.msra.mxu0 0.0
        %775 = vmatprep.subr.mxu0 0.0
        %776 = vmatpush1.msra.mxu0 0.0
        %777 = vmatprep.subr.mxu0 0.0
        %778 = vmatpush1.msra.mxu0 0.0
        %779 = vmatprep.subr.mxu0 0.0
        %780 = vmatpush1.msra.mxu0 0.0
        %781 = vmatprep.subr.mxu0 0.0
        %782 = vmatpush1.msra.mxu0 0.0
        %783 = vmatprep.subr.mxu0 0.0
        %784 = vmatpush1.msra.mxu0 0.0
        %785 = vmatprep.subr.mxu0 0.0
        %786 = vmatpush1.msra.mxu0 0.0
        %787 = vmatprep.subr.mxu0 0.0
        %788 = vmatpush1.msra.mxu0 0.0
        %789 = vmatprep.mubr.f32.mxu0 0.0
        %790 = vmatmul.mubr.f32.gmra.mrb[0].mxu0 %v717
        %v791 = vpop.f32.mrb[0].mxu0
        %v792 = vadd.f32 0.0, %v791
        %v793 = vpop.f32.mrb[0].mxu0
        %794 = vmatprep.mubr.f32.mxu0 0.0
        %795 = vmatmul.mubr.f32.gmra.mrb[0].mxu0 %v719
        %v796 = vpop.f32.mrb[0].mxu0
        %v797 = vadd.f32 0.0, %v796
        %v798 = vpop.f32.mrb[0].mxu0
        %799 = vmatprep.mubr.f32.mxu0 0.0
        %800 = vmatmul.mubr.f32.gmra.mrb[0].mxu0 %v721
        %v801 = vpop.f32.mrb[0].mxu0
        %v802 = vadd.f32 0.0, %v801
        %v803 = vpop.f32.mrb[0].mxu0
        %804 = vmatprep.mubr.f32.mxu0 0.0
        %805 = vmatmul.mubr.f32.gmra.mrb[0].mxu0 %v723
        %v806 = vpop.f32.mrb[0].mxu0
        %v807 = vadd.f32 0.0, %v806
        %v808 = vpop.f32.mrb[0].mxu0
        %809 = vdwg.mxu0
        %v810 = vadd.f32 %v686, %v792
        %v811 = vadd.f32 %v691, %v797
        %v812 = vadd.f32 %v696, %v802
        %v813 = vadd.f32 %v701, %v807
        %v814 = vld [vmem:[%s2] sm:$0x1]
        %v816 = vlaneseq
        %v817 = vshrl.u32 %v816, 7
        %v818 = vsub.s32 0, %v817
        %v819 = vrot.slane %v814, %v818
        %v821 = vadd.f32 %v810, %v819
        %v822 = vadd.f32 %v811, %v819
        %v823 = vadd.f32 %v812, %v819
        %v824 = vadd.f32 %v813, %v819
        %vm825 = vcmp.gt.f32.partialorder %v821, 0.0
        %vm826 = vcmp.gt.f32.partialorder %v822, 0.0
        %vm827 = vcmp.gt.f32.partialorder %v823, 0.0
        %vm828 = vcmp.gt.f32.partialorder %v824, 0.0
        %v829 = vmul.f32 %v821, 0.1
        %v830 = vmul.f32 %v822, 0.1
        %v831 = vmul.f32 %v823, 0.1
        %v832 = vmul.f32 %v824, 0.1
        %v833 = vsel %vm825, %v821, %v829
        %v834 = vsel %vm826, %v822, %v830
        %v835 = vsel %vm827, %v823, %v831
        %v836 = vsel %vm828, %v824, %v832
        %vm837 = vcmask 982016
        %838 = vst.msk [vmem:[#allocation2] sm:$0xff] %vm837, %v833
        %839 = vst.msk [vmem:[#allocation2 + $0x8] sm:$0xff] %vm837, %v834
        %840 = vst.msk [vmem:[#allocation2 + $0x10] sm:$0xff] %vm837, %v835
        %vm841 = vcmask 979968
        %842 = vst.msk [vmem:[#allocation2 + $0x18] sm:$0x3f] %vm841, %v836
        %v843 = vld [vmem:[#allocation2] ss:$2 sm:$0xff]
        %s844 = scalar_lea.vmem [#allocation2], 16
        %v845 = vld [vmem:[%s844] ss:$2 sm:$0x3f]
        %s846 = scalar_lea.vmem [#allocation2], 1
        %v847 = vld [vmem:[%s846] ss:$2 sm:$0xff]
        %s848 = scalar_lea.vmem [#allocation2], 17
        %v849 = vld [vmem:[%s848] ss:$2 sm:$0x3f]
        %s850 = scalar_lea.vmem [#allocation2], 2
        %v851 = vld [vmem:[%s850] ss:$2 sm:$0xff]
        %s852 = scalar_lea.vmem [#allocation2], 18
        %v853 = vld [vmem:[%s852] ss:$2 sm:$0x3f]
        %v854 = vld [vmem:[%s3] sm:$0xff]
        %v855 = vld [vmem:[%s3 + $0x8] sm:$0xff]
        %v856 = vld [vmem:[%s3 + $0x10] sm:$0xff]
        %v857 = vld [vmem:[%s3 + $0x18] sm:$0xff]
        %v858 = vld [vmem:[%s3 + $0x20] sm:$0xff]
        %v859 = vld [vmem:[%s3 + $0x28] sm:$0xff]
        %v860 = vld [vmem:[%s3 + $0x30] sm:$0xff]
        %v861 = vld [vmem:[%s3 + $0x38] sm:$0xff]
        %v862 = vld [vmem:[%s3 + $0x40] sm:$0xff]
        %v863 = vld [vmem:[%s3 + $0x48] sm:$0xff]
        %v864 = vld [vmem:[%s3 + $0x50] sm:$0xff]
        %v865 = vld [vmem:[%s3 + $0x58] sm:$0xff]
        %v866 = vld [vmem:[%s3 + $0x60] sm:$0xff]
        %v867 = vld [vmem:[%s3 + $0x68] sm:$0xff]
        %v868 = vld [vmem:[%s3 + $0x70] sm:$0xff]
        %s869 = scalar_lea.vmem %s3, 120
        %v870 = vld [vmem:[%s869] sm:$0xff]
        %v871 = vld [vmem:[%s869 + $0x8] sm:$0xff]
        %v872 = vld [vmem:[%s869 + $0x10] sm:$0xff]
        %v873 = vld [vmem:[%s869 + $0x18] sm:$0xff]
        %v874 = vld [vmem:[%s869 + $0x20] sm:$0xff]
        %v875 = vld [vmem:[%s869 + $0x28] sm:$0xff]
        %v876 = vld [vmem:[%s869 + $0x30] sm:$0xff]
        %v877 = vld [vmem:[%s869 + $0x38] sm:$0xff]
        %v878 = vld [vmem:[%s869 + $0x40] sm:$0xff]
        %v879 = vld [vmem:[%s869 + $0x48] sm:$0xff]
        %v880 = vld [vmem:[%s869 + $0x50] sm:$0xff]
        %v881 = vld [vmem:[%s869 + $0x58] sm:$0xff]
        %v882 = vld [vmem:[%s869 + $0x60] sm:$0xff]
        %v883 = vld [vmem:[%s869 + $0x68] sm:$0xff]
        %v884 = vld [vmem:[%s869 + $0x70] sm:$0xff]
        %v886 = vsel %vm837, %v847, 0
        %v889 = vsel %vm837, %v849, 0
        %891 = vmatprep.subr.mxu0 0.0
        %892 = vmatpush1.msra.mxu0 %v870
        %893 = vmatprep.subr.mxu0 0.0
        %894 = vmatpush1.msra.mxu0 %v871
        %895 = vmatprep.subr.mxu0 0.0
        %896 = vmatpush1.msra.mxu0 %v872
        %897 = vmatprep.subr.mxu0 0.0
        %898 = vmatpush1.msra.mxu0 %v873
        %899 = vmatprep.subr.mxu0 0.0
        %900 = vmatpush1.msra.mxu0 %v874
        %901 = vmatprep.subr.mxu0 0.0
        %902 = vmatpush1.msra.mxu0 %v875
        %903 = vmatprep.subr.mxu0 0.0
        %904 = vmatpush1.msra.mxu0 %v876
        %905 = vmatprep.subr.mxu0 0.0
        %906 = vmatpush1.msra.mxu0 %v877
        %907 = vmatprep.subr.mxu0 0.0
        %908 = vmatpush1.msra.mxu0 %v878
        %909 = vmatprep.subr.mxu0 0.0
        %910 = vmatpush1.msra.mxu0 %v879
        %911 = vmatprep.subr.mxu0 0.0
        %912 = vmatpush1.msra.mxu0 %v880
        %913 = vmatprep.subr.mxu0 0.0
        %914 = vmatpush1.msra.mxu0 %v881
        %915 = vmatprep.subr.mxu0 0.0
        %916 = vmatpush1.msra.mxu0 %v882
        %917 = vmatprep.subr.mxu0 0.0
        %918 = vmatpush1.msra.mxu0 %v883
        %919 = vmatprep.subr.mxu0 0.0
        %920 = vmatpush1.msra.mxu0 %v884
        %921 = vmatprep.subr.mxu0 0.0
        %922 = vmatpush1.msra.mxu0 0.0
        %923 = vmatprep.subr.mxu0 0.0
        %924 = vmatpush1.msra.mxu0 0.0
        %925 = vmatprep.subr.mxu0 0.0
        %926 = vmatpush1.msra.mxu0 0.0
        %927 = vmatprep.subr.mxu0 0.0
        %928 = vmatpush1.msra.mxu0 0.0
        %929 = vmatprep.subr.mxu0 0.0
        %930 = vmatpush1.msra.mxu0 0.0
        %931 = vmatprep.subr.mxu0 0.0
        %932 = vmatpush1.msra.mxu0 0.0
        %933 = vmatprep.subr.mxu0 0.0
        %934 = vmatpush1.msra.mxu0 0.0
        %935 = vmatprep.subr.mxu0 0.0
        %936 = vmatpush1.msra.mxu0 0.0
        %937 = vmatprep.subr.mxu0 0.0
        %938 = vmatpush1.msra.mxu0 0.0
        %939 = vmatprep.subr.mxu0 0.0
        %940 = vmatpush1.msra.mxu0 0.0
        %941 = vmatprep.subr.mxu0 0.0
        %942 = vmatpush1.msra.mxu0 0.0
        %943 = vmatprep.subr.mxu0 0.0
        %944 = vmatpush1.msra.mxu0 0.0
        %945 = vmatprep.subr.mxu0 0.0
        %946 = vmatpush1.msra.mxu0 0.0
        %947 = vmatprep.subr.mxu0 0.0
        %948 = vmatpush1.msra.mxu0 0.0
        %949 = vmatprep.subr.mxu0 0.0
        %950 = vmatpush1.msra.mxu0 0.0
        %951 = vmatprep.subr.mxu0 0.0
        %952 = vmatpush1.msra.mxu0 0.0
        %953 = vmatprep.subr.mxu0 0.0
        %954 = vmatpush1.msra.mxu0 0.0
        %955 = vmatprep.mubr.f32.mxu0 0.0
        %956 = vmatmul.mubr.f32.gmra.mrb[0].mxu0 %v886
        %v957 = vpop.f32.mrb[0].mxu0
        %v958 = vadd.f32 0.0, %v957
        %v959 = vpop.f32.mrb[0].mxu0
        %960 = vmatprep.mubr.f32.mxu0 0.0
        %961 = vmatmul.mubr.f32.gmra.mrb[0].mxu0 %v889
        %v962 = vpop.f32.mrb[0].mxu0
        %v963 = vadd.f32 0.0, %v962
        %v964 = vpop.f32.mrb[0].mxu0
        %965 = vdwg.mxu0
        %v967 = vsel %vm837, %v843, 0
        %v970 = vsel %vm837, %v845, 0
        %972 = vmatprep.subr.mxu0 0.0
        %973 = vmatpush1.msra.mxu0 %v854
        %974 = vmatprep.subr.mxu0 0.0
        %975 = vmatpush1.msra.mxu0 %v855
        %976 = vmatprep.subr.mxu0 0.0
        %977 = vmatpush1.msra.mxu0 %v856
        %978 = vmatprep.subr.mxu0 0.0
        %979 = vmatpush1.msra.mxu0 %v857
        %980 = vmatprep.subr.mxu0 0.0
        %981 = vmatpush1.msra.mxu0 %v858
        %982 = vmatprep.subr.mxu0 0.0
        %983 = vmatpush1.msra.mxu0 %v859
        %984 = vmatprep.subr.mxu0 0.0
        %985 = vmatpush1.msra.mxu0 %v860
        %986 = vmatprep.subr.mxu0 0.0
        %987 = vmatpush1.msra.mxu0 %v861
        %988 = vmatprep.subr.mxu0 0.0
        %989 = vmatpush1.msra.mxu0 %v862
        %990 = vmatprep.subr.mxu0 0.0
        %991 = vmatpush1.msra.mxu0 %v863
        %992 = vmatprep.subr.mxu0 0.0
        %993 = vmatpush1.msra.mxu0 %v864
        %994 = vmatprep.subr.mxu0 0.0
        %995 = vmatpush1.msra.mxu0 %v865
        %996 = vmatprep.subr.mxu0 0.0
        %997 = vmatpush1.msra.mxu0 %v866
        %998 = vmatprep.subr.mxu0 0.0
        %999 = vmatpush1.msra.mxu0 %v867
        %1000 = vmatprep.subr.mxu0 0.0
        %1001 = vmatpush1.msra.mxu0 %v868
        %1002 = vmatprep.subr.mxu0 0.0
        %1003 = vmatpush1.msra.mxu0 0.0
        %1004 = vmatprep.subr.mxu0 0.0
        %1005 = vmatpush1.msra.mxu0 0.0
        %1006 = vmatprep.subr.mxu0 0.0
        %1007 = vmatpush1.msra.mxu0 0.0
        %1008 = vmatprep.subr.mxu0 0.0
        %1009 = vmatpush1.msra.mxu0 0.0
        %1010 = vmatprep.subr.mxu0 0.0
        %1011 = vmatpush1.msra.mxu0 0.0
        %1012 = vmatprep.subr.mxu0 0.0
        %1013 = vmatpush1.msra.mxu0 0.0
        %1014 = vmatprep.subr.mxu0 0.0
        %1015 = vmatpush1.msra.mxu0 0.0
        %1016 = vmatprep.subr.mxu0 0.0
        %1017 = vmatpush1.msra.mxu0 0.0
        %1018 = vmatprep.subr.mxu0 0.0
        %1019 = vmatpush1.msra.mxu0 0.0
        %1020 = vmatprep.subr.mxu0 0.0
        %1021 = vmatpush1.msra.mxu0 0.0
        %1022 = vmatprep.subr.mxu0 0.0
        %1023 = vmatpush1.msra.mxu0 0.0
        %1024 = vmatprep.subr.mxu0 0.0
        %1025 = vmatpush1.msra.mxu0 0.0
        %1026 = vmatprep.subr.mxu0 0.0
        %1027 = vmatpush1.msra.mxu0 0.0
        %1028 = vmatprep.subr.mxu0 0.0
        %1029 = vmatpush1.msra.mxu0 0.0
        %1030 = vmatprep.subr.mxu0 0.0
        %1031 = vmatpush1.msra.mxu0 0.0
        %1032 = vmatprep.subr.mxu0 0.0
        %1033 = vmatpush1.msra.mxu0 0.0
        %1034 = vmatprep.subr.mxu0 0.0
        %1035 = vmatpush1.msra.mxu0 0.0
        %1036 = vmatprep.mubr.f32.mxu0 0.0
        %1037 = vmatmul.mubr.f32.gmra.mrb[0].mxu0 %v967
        %v1038 = vpop.f32.mrb[0].mxu0
        %v1039 = vadd.f32 %v958, %v1038
        %v1040 = vpop.f32.mrb[0].mxu0
        %1041 = vmatprep.mubr.f32.mxu0 0.0
        %1042 = vmatmul.mubr.f32.gmra.mrb[0].mxu0 %v970
        %v1043 = vpop.f32.mrb[0].mxu0
        %v1044 = vadd.f32 %v963, %v1043
        %v1045 = vpop.f32.mrb[0].mxu0
        %1046 = vdwg.mxu0
        %s1047 = scalar_lea.vmem %s3, 240
        %v1048 = vld [vmem:[%s1047] sm:$0xff]
        %v1049 = vld [vmem:[%s1047 + $0x8] sm:$0xff]
        %v1050 = vld [vmem:[%s1047 + $0x10] sm:$0xff]
        %v1051 = vld [vmem:[%s1047 + $0x18] sm:$0xff]
        %v1052 = vld [vmem:[%s1047 + $0x20] sm:$0xff]
        %v1053 = vld [vmem:[%s1047 + $0x28] sm:$0xff]
        %v1054 = vld [vmem:[%s1047 + $0x30] sm:$0xff]
        %v1055 = vld [vmem:[%s1047 + $0x38] sm:$0xff]
        %v1056 = vld [vmem:[%s1047 + $0x40] sm:$0xff]
        %v1057 = vld [vmem:[%s1047 + $0x48] sm:$0xff]
        %v1058 = vld [vmem:[%s1047 + $0x50] sm:$0xff]
        %v1059 = vld [vmem:[%s1047 + $0x58] sm:$0xff]
        %v1060 = vld [vmem:[%s1047 + $0x60] sm:$0xff]
        %v1061 = vld [vmem:[%s1047 + $0x68] sm:$0xff]
        %v1062 = vld [vmem:[%s1047 + $0x70] sm:$0xff]
        %v1064 = vsel %vm837, %v851, 0
        %v1067 = vsel %vm837, %v853, 0
        %1069 = vmatprep.subr.mxu0 0.0
        %1070 = vmatpush1.msra.mxu0 %v1048
        %1071 = vmatprep.subr.mxu0 0.0
        %1072 = vmatpush1.msra.mxu0 %v1049
        %1073 = vmatprep.subr.mxu0 0.0
        %1074 = vmatpush1.msra.mxu0 %v1050
        %1075 = vmatprep.subr.mxu0 0.0
        %1076 = vmatpush1.msra.mxu0 %v1051
        %1077 = vmatprep.subr.mxu0 0.0
        %1078 = vmatpush1.msra.mxu0 %v1052
        %1079 = vmatprep.subr.mxu0 0.0
        %1080 = vmatpush1.msra.mxu0 %v1053
        %1081 = vmatprep.subr.mxu0 0.0
        %1082 = vmatpush1.msra.mxu0 %v1054
        %1083 = vmatprep.subr.mxu0 0.0
        %1084 = vmatpush1.msra.mxu0 %v1055
        %1085 = vmatprep.subr.mxu0 0.0
        %1086 = vmatpush1.msra.mxu0 %v1056
        %1087 = vmatprep.subr.mxu0 0.0
        %1088 = vmatpush1.msra.mxu0 %v1057
        %1089 = vmatprep.subr.mxu0 0.0
        %1090 = vmatpush1.msra.mxu0 %v1058
        %1091 = vmatprep.subr.mxu0 0.0
        %1092 = vmatpush1.msra.mxu0 %v1059
        %1093 = vmatprep.subr.mxu0 0.0
        %1094 = vmatpush1.msra.mxu0 %v1060
        %1095 = vmatprep.subr.mxu0 0.0
        %1096 = vmatpush1.msra.mxu0 %v1061
        %1097 = vmatprep.subr.mxu0 0.0
        %1098 = vmatpush1.msra.mxu0 %v1062
        %1099 = vmatprep.subr.mxu0 0.0
        %1100 = vmatpush1.msra.mxu0 0.0
        %1101 = vmatprep.subr.mxu0 0.0
        %1102 = vmatpush1.msra.mxu0 0.0
        %1103 = vmatprep.subr.mxu0 0.0
        %1104 = vmatpush1.msra.mxu0 0.0
        %1105 = vmatprep.subr.mxu0 0.0
        %1106 = vmatpush1.msra.mxu0 0.0
        %1107 = vmatprep.subr.mxu0 0.0
        %1108 = vmatpush1.msra.mxu0 0.0
        %1109 = vmatprep.subr.mxu0 0.0
        %1110 = vmatpush1.msra.mxu0 0.0
        %1111 = vmatprep.subr.mxu0 0.0
        %1112 = vmatpush1.msra.mxu0 0.0
        %1113 = vmatprep.subr.mxu0 0.0
        %1114 = vmatpush1.msra.mxu0 0.0
        %1115 = vmatprep.subr.mxu0 0.0
        %1116 = vmatpush1.msra.mxu0 0.0
        %1117 = vmatprep.subr.mxu0 0.0
        %1118 = vmatpush1.msra.mxu0 0.0
        %1119 = vmatprep.subr.mxu0 0.0
        %1120 = vmatpush1.msra.mxu0 0.0
        %1121 = vmatprep.subr.mxu0 0.0
        %1122 = vmatpush1.msra.mxu0 0.0
        %1123 = vmatprep.subr.mxu0 0.0
        %1124 = vmatpush1.msra.mxu0 0.0
        %1125 = vmatprep.subr.mxu0 0.0
        %1126 = vmatpush1.msra.mxu0 0.0
        %1127 = vmatprep.subr.mxu0 0.0
        %1128 = vmatpush1.msra.mxu0 0.0
        %1129 = vmatprep.subr.mxu0 0.0
        %1130 = vmatpush1.msra.mxu0 0.0
        %1131 = vmatprep.subr.mxu0 0.0
        %1132 = vmatpush1.msra.mxu0 0.0
        %1133 = vmatprep.mubr.f32.mxu0 0.0
        %1134 = vmatmul.mubr.f32.gmra.mrb[0].mxu0 %v1064
        %v1135 = vpop.f32.mrb[0].mxu0
        %v1136 = vadd.f32 0.0, %v1135
        %v1137 = vpop.f32.mrb[0].mxu0
        %1138 = vmatprep.mubr.f32.mxu0 0.0
        %1139 = vmatmul.mubr.f32.gmra.mrb[0].mxu0 %v1067
        %v1140 = vpop.f32.mrb[0].mxu0
        %v1141 = vadd.f32 0.0, %v1140
        %v1142 = vpop.f32.mrb[0].mxu0
        %1143 = vdwg.mxu0
        %v1144 = vadd.f32 %v1039, %v1136
        %v1145 = vadd.f32 %v1044, %v1141
        %s1146 = scalar_lea.vmem %s3, 360
        %v1147 = vld [vmem:[%s1146] sm:$0xff]
        %v1148 = vld [vmem:[%s1146 + $0x8] sm:$0xff]
        %v1149 = vld [vmem:[%s1146 + $0x10] sm:$0xff]
        %v1150 = vld [vmem:[%s1146 + $0x18] sm:$0xff]
        %v1151 = vld [vmem:[%s1146 + $0x20] sm:$0xff]
        %v1152 = vld [vmem:[%s1146 + $0x28] sm:$0xff]
        %v1153 = vld [vmem:[%s1146 + $0x30] sm:$0xff]
        %v1154 = vld [vmem:[%s1146 + $0x38] sm:$0xff]
        %v1155 = vld [vmem:[%s1146 + $0x40] sm:$0xff]
        %v1156 = vld [vmem:[%s1146 + $0x48] sm:$0xff]
        %v1157 = vld [vmem:[%s1146 + $0x50] sm:$0xff]
        %v1158 = vld [vmem:[%s1146 + $0x58] sm:$0xff]
        %v1159 = vld [vmem:[%s1146 + $0x60] sm:$0xff]
        %v1160 = vld [vmem:[%s1146 + $0x68] sm:$0xff]
        %v1161 = vld [vmem:[%s1146 + $0x70] sm:$0xff]
        %s1162 = scalar_lea.vmem %s3, 480
        %v1163 = vld [vmem:[%s1162] sm:$0xff]
        %v1164 = vld [vmem:[%s1162 + $0x8] sm:$0xff]
        %v1165 = vld [vmem:[%s1162 + $0x10] sm:$0xff]
        %v1166 = vld [vmem:[%s1162 + $0x18] sm:$0xff]
        %v1167 = vld [vmem:[%s1162 + $0x20] sm:$0xff]
        %v1168 = vld [vmem:[%s1162 + $0x28] sm:$0xff]
        %v1169 = vld [vmem:[%s1162 + $0x30] sm:$0xff]
        %v1170 = vld [vmem:[%s1162 + $0x38] sm:$0xff]
        %v1171 = vld [vmem:[%s1162 + $0x40] sm:$0xff]
        %v1172 = vld [vmem:[%s1162 + $0x48] sm:$0xff]
        %v1173 = vld [vmem:[%s1162 + $0x50] sm:$0xff]
        %v1174 = vld [vmem:[%s1162 + $0x58] sm:$0xff]
        %v1175 = vld [vmem:[%s1162 + $0x60] sm:$0xff]
        %v1176 = vld [vmem:[%s1162 + $0x68] sm:$0xff]
        %v1177 = vld [vmem:[%s1162 + $0x70] sm:$0xff]
        %1178 = vmatprep.subr.mxu0 0.0
        %1179 = vmatpush1.msra.mxu0 %v1163
        %1180 = vmatprep.subr.mxu0 0.0
        %1181 = vmatpush1.msra.mxu0 %v1164
        %1182 = vmatprep.subr.mxu0 0.0
        %1183 = vmatpush1.msra.mxu0 %v1165
        %1184 = vmatprep.subr.mxu0 0.0
        %1185 = vmatpush1.msra.mxu0 %v1166
        %1186 = vmatprep.subr.mxu0 0.0
        %1187 = vmatpush1.msra.mxu0 %v1167
        %1188 = vmatprep.subr.mxu0 0.0
        %1189 = vmatpush1.msra.mxu0 %v1168
        %1190 = vmatprep.subr.mxu0 0.0
        %1191 = vmatpush1.msra.mxu0 %v1169
        %1192 = vmatprep.subr.mxu0 0.0
        %1193 = vmatpush1.msra.mxu0 %v1170
        %1194 = vmatprep.subr.mxu0 0.0
        %1195 = vmatpush1.msra.mxu0 %v1171
        %1196 = vmatprep.subr.mxu0 0.0
        %1197 = vmatpush1.msra.mxu0 %v1172
        %1198 = vmatprep.subr.mxu0 0.0
        %1199 = vmatpush1.msra.mxu0 %v1173
        %1200 = vmatprep.subr.mxu0 0.0
        %1201 = vmatpush1.msra.mxu0 %v1174
        %1202 = vmatprep.subr.mxu0 0.0
        %1203 = vmatpush1.msra.mxu0 %v1175
        %1204 = vmatprep.subr.mxu0 0.0
        %1205 = vmatpush1.msra.mxu0 %v1176
        %1206 = vmatprep.subr.mxu0 0.0
        %1207 = vmatpush1.msra.mxu0 %v1177
        %1208 = vmatprep.subr.mxu0 0.0
        %1209 = vmatpush1.msra.mxu0 0.0
        %1210 = vmatprep.subr.mxu0 0.0
        %1211 = vmatpush1.msra.mxu0 0.0
        %1212 = vmatprep.subr.mxu0 0.0
        %1213 = vmatpush1.msra.mxu0 0.0
        %1214 = vmatprep.subr.mxu0 0.0
        %1215 = vmatpush1.msra.mxu0 0.0
        %1216 = vmatprep.subr.mxu0 0.0
        %1217 = vmatpush1.msra.mxu0 0.0
        %1218 = vmatprep.subr.mxu0 0.0
        %1219 = vmatpush1.msra.mxu0 0.0
        %1220 = vmatprep.subr.mxu0 0.0
        %1221 = vmatpush1.msra.mxu0 0.0
        %1222 = vmatprep.subr.mxu0 0.0
        %1223 = vmatpush1.msra.mxu0 0.0
        %1224 = vmatprep.subr.mxu0 0.0
        %1225 = vmatpush1.msra.mxu0 0.0
        %1226 = vmatprep.subr.mxu0 0.0
        %1227 = vmatpush1.msra.mxu0 0.0
        %1228 = vmatprep.subr.mxu0 0.0
        %1229 = vmatpush1.msra.mxu0 0.0
        %1230 = vmatprep.subr.mxu0 0.0
        %1231 = vmatpush1.msra.mxu0 0.0
        %1232 = vmatprep.subr.mxu0 0.0
        %1233 = vmatpush1.msra.mxu0 0.0
        %1234 = vmatprep.subr.mxu0 0.0
        %1235 = vmatpush1.msra.mxu0 0.0
        %1236 = vmatprep.subr.mxu0 0.0
        %1237 = vmatpush1.msra.mxu0 0.0
        %1238 = vmatprep.subr.mxu0 0.0
        %1239 = vmatpush1.msra.mxu0 0.0
        %1240 = vmatprep.subr.mxu0 0.0
        %1241 = vmatpush1.msra.mxu0 0.0
        %1242 = vmatprep.mubr.f32.mxu0 0.0
        %1243 = vmatmul.mubr.f32.gmra.mrb[0].mxu0 %v886
        %v1244 = vpop.f32.mrb[0].mxu0
        %v1245 = vadd.f32 0.0, %v1244
        %v1246 = vpop.f32.mrb[0].mxu0
        %1247 = vmatprep.mubr.f32.mxu0 0.0
        %1248 = vmatmul.mubr.f32.gmra.mrb[0].mxu0 %v889
        %v1249 = vpop.f32.mrb[0].mxu0
        %v1250 = vadd.f32 0.0, %v1249
        %v1251 = vpop.f32.mrb[0].mxu0
        %1252 = vdwg.mxu0
        %1253 = vmatprep.subr.mxu0 0.0
        %1254 = vmatpush1.msra.mxu0 %v1147
        %1255 = vmatprep.subr.mxu0 0.0
        %1256 = vmatpush1.msra.mxu0 %v1148
        %1257 = vmatprep.subr.mxu0 0.0
        %1258 = vmatpush1.msra.mxu0 %v1149
        %1259 = vmatprep.subr.mxu0 0.0
        %1260 = vmatpush1.msra.mxu0 %v1150
        %1261 = vmatprep.subr.mxu0 0.0
        %1262 = vmatpush1.msra.mxu0 %v1151
        %1263 = vmatprep.subr.mxu0 0.0
        %1264 = vmatpush1.msra.mxu0 %v1152
        %1265 = vmatprep.subr.mxu0 0.0
        %1266 = vmatpush1.msra.mxu0 %v1153
        %1267 = vmatprep.subr.mxu0 0.0
        %1268 = vmatpush1.msra.mxu0 %v1154
        %1269 = vmatprep.subr.mxu0 0.0
        %1270 = vmatpush1.msra.mxu0 %v1155
        %1271 = vmatprep.subr.mxu0 0.0
        %1272 = vmatpush1.msra.mxu0 %v1156
        %1273 = vmatprep.subr.mxu0 0.0
        %1274 = vmatpush1.msra.mxu0 %v1157
        %1275 = vmatprep.subr.mxu0 0.0
        %1276 = vmatpush1.msra.mxu0 %v1158
        %1277 = vmatprep.subr.mxu0 0.0
        %1278 = vmatpush1.msra.mxu0 %v1159
        %1279 = vmatprep.subr.mxu0 0.0
        %1280 = vmatpush1.msra.mxu0 %v1160
        %1281 = vmatprep.subr.mxu0 0.0
        %1282 = vmatpush1.msra.mxu0 %v1161
        %1283 = vmatprep.subr.mxu0 0.0
        %1284 = vmatpush1.msra.mxu0 0.0
        %1285 = vmatprep.subr.mxu0 0.0
        %1286 = vmatpush1.msra.mxu0 0.0
        %1287 = vmatprep.subr.mxu0 0.0
        %1288 = vmatpush1.msra.mxu0 0.0
        %1289 = vmatprep.subr.mxu0 0.0
        %1290 = vmatpush1.msra.mxu0 0.0
        %1291 = vmatprep.subr.mxu0 0.0
        %1292 = vmatpush1.msra.mxu0 0.0
        %1293 = vmatprep.subr.mxu0 0.0
        %1294 = vmatpush1.msra.mxu0 0.0
        %1295 = vmatprep.subr.mxu0 0.0
        %1296 = vmatpush1.msra.mxu0 0.0
        %1297 = vmatprep.subr.mxu0 0.0
        %1298 = vmatpush1.msra.mxu0 0.0
        %1299 = vmatprep.subr.mxu0 0.0
        %1300 = vmatpush1.msra.mxu0 0.0
        %1301 = vmatprep.subr.mxu0 0.0
        %1302 = vmatpush1.msra.mxu0 0.0
        %1303 = vmatprep.subr.mxu0 0.0
        %1304 = vmatpush1.msra.mxu0 0.0
        %1305 = vmatprep.subr.mxu0 0.0
        %1306 = vmatpush1.msra.mxu0 0.0
        %1307 = vmatprep.subr.mxu0 0.0
        %1308 = vmatpush1.msra.mxu0 0.0
        %1309 = vmatprep.subr.mxu0 0.0
        %1310 = vmatpush1.msra.mxu0 0.0
        %1311 = vmatprep.subr.mxu0 0.0
        %1312 = vmatpush1.msra.mxu0 0.0
        %1313 = vmatprep.subr.mxu0 0.0
        %1314 = vmatpush1.msra.mxu0 0.0
        %1315 = vmatprep.subr.mxu0 0.0
        %1316 = vmatpush1.msra.mxu0 0.0
        %1317 = vmatprep.mubr.f32.mxu0 0.0
        %1318 = vmatmul.mubr.f32.gmra.mrb[0].mxu0 %v967
        %v1319 = vpop.f32.mrb[0].mxu0
        %v1320 = vadd.f32 %v1245, %v1319
        %v1321 = vpop.f32.mrb[0].mxu0
        %1322 = vmatprep.mubr.f32.mxu0 0.0
        %1323 = vmatmul.mubr.f32.gmra.mrb[0].mxu0 %v970
        %v1324 = vpop.f32.mrb[0].mxu0
        %v1325 = vadd.f32 %v1250, %v1324
        %v1326 = vpop.f32.mrb[0].mxu0
        %1327 = vdwg.mxu0
        %s1328 = scalar_lea.vmem %s3, 600
        %v1329 = vld [vmem:[%s1328] sm:$0xff]
        %v1330 = vld [vmem:[%s1328 + $0x8] sm:$0xff]
        %v1331 = vld [vmem:[%s1328 + $0x10] sm:$0xff]
        %v1332 = vld [vmem:[%s1328 + $0x18] sm:$0xff]
        %v1333 = vld [vmem:[%s1328 + $0x20] sm:$0xff]
        %v1334 = vld [vmem:[%s1328 + $0x28] sm:$0xff]
        %v1335 = vld [vmem:[%s1328 + $0x30] sm:$0xff]
        %v1336 = vld [vmem:[%s1328 + $0x38] sm:$0xff]
        %v1337 = vld [vmem:[%s1328 + $0x40] sm:$0xff]
        %v1338 = vld [vmem:[%s1328 + $0x48] sm:$0xff]
        %v1339 = vld [vmem:[%s1328 + $0x50] sm:$0xff]
        %v1340 = vld [vmem:[%s1328 + $0x58] sm:$0xff]
        %v1341 = vld [vmem:[%s1328 + $0x60] sm:$0xff]
        %v1342 = vld [vmem:[%s1328 + $0x68] sm:$0xff]
        %v1343 = vld [vmem:[%s1328 + $0x70] sm:$0xff]
        %1344 = vmatprep.subr.mxu0 0.0
        %1345 = vmatpush1.msra.mxu0 %v1329
        %1346 = vmatprep.subr.mxu0 0.0
        %1347 = vmatpush1.msra.mxu0 %v1330
        %1348 = vmatprep.subr.mxu0 0.0
        %1349 = vmatpush1.msra.mxu0 %v1331
        %1350 = vmatprep.subr.mxu0 0.0
        %1351 = vmatpush1.msra.mxu0 %v1332
        %1352 = vmatprep.subr.mxu0 0.0
        %1353 = vmatpush1.msra.mxu0 %v1333
        %1354 = vmatprep.subr.mxu0 0.0
        %1355 = vmatpush1.msra.mxu0 %v1334
        %1356 = vmatprep.subr.mxu0 0.0
        %1357 = vmatpush1.msra.mxu0 %v1335
        %1358 = vmatprep.subr.mxu0 0.0
        %1359 = vmatpush1.msra.mxu0 %v1336
        %1360 = vmatprep.subr.mxu0 0.0
        %1361 = vmatpush1.msra.mxu0 %v1337
        %1362 = vmatprep.subr.mxu0 0.0
        %1363 = vmatpush1.msra.mxu0 %v1338
        %1364 = vmatprep.subr.mxu0 0.0
        %1365 = vmatpush1.msra.mxu0 %v1339
        %1366 = vmatprep.subr.mxu0 0.0
        %1367 = vmatpush1.msra.mxu0 %v1340
        %1368 = vmatprep.subr.mxu0 0.0
        %1369 = vmatpush1.msra.mxu0 %v1341
        %1370 = vmatprep.subr.mxu0 0.0
        %1371 = vmatpush1.msra.mxu0 %v1342
        %1372 = vmatprep.subr.mxu0 0.0
        %1373 = vmatpush1.msra.mxu0 %v1343
        %1374 = vmatprep.subr.mxu0 0.0
        %1375 = vmatpush1.msra.mxu0 0.0
        %1376 = vmatprep.subr.mxu0 0.0
        %1377 = vmatpush1.msra.mxu0 0.0
        %1378 = vmatprep.subr.mxu0 0.0
        %1379 = vmatpush1.msra.mxu0 0.0
        %1380 = vmatprep.subr.mxu0 0.0
        %1381 = vmatpush1.msra.mxu0 0.0
        %1382 = vmatprep.subr.mxu0 0.0
        %1383 = vmatpush1.msra.mxu0 0.0
        %1384 = vmatprep.subr.mxu0 0.0
        %1385 = vmatpush1.msra.mxu0 0.0
        %1386 = vmatprep.subr.mxu0 0.0
        %1387 = vmatpush1.msra.mxu0 0.0
        %1388 = vmatprep.subr.mxu0 0.0
        %1389 = vmatpush1.msra.mxu0 0.0
        %1390 = vmatprep.subr.mxu0 0.0
        %1391 = vmatpush1.msra.mxu0 0.0
        %1392 = vmatprep.subr.mxu0 0.0
        %1393 = vmatpush1.msra.mxu0 0.0
        %1394 = vmatprep.subr.mxu0 0.0
        %1395 = vmatpush1.msra.mxu0 0.0
        %1396 = vmatprep.subr.mxu0 0.0
        %1397 = vmatpush1.msra.mxu0 0.0
        %1398 = vmatprep.subr.mxu0 0.0
        %1399 = vmatpush1.msra.mxu0 0.0
        %1400 = vmatprep.subr.mxu0 0.0
        %1401 = vmatpush1.msra.mxu0 0.0
        %1402 = vmatprep.subr.mxu0 0.0
        %1403 = vmatpush1.msra.mxu0 0.0
        %1404 = vmatprep.subr.mxu0 0.0
        %1405 = vmatpush1.msra.mxu0 0.0
        %1406 = vmatprep.subr.mxu0 0.0
        %1407 = vmatpush1.msra.mxu0 0.0
        %1408 = vmatprep.mubr.f32.mxu0 0.0
        %1409 = vmatmul.mubr.f32.gmra.mrb[0].mxu0 %v1064
        %v1410 = vpop.f32.mrb[0].mxu0
        %v1411 = vadd.f32 0.0, %v1410
        %v1412 = vpop.f32.mrb[0].mxu0
        %1413 = vmatprep.mubr.f32.mxu0 0.0
        %1414 = vmatmul.mubr.f32.gmra.mrb[0].mxu0 %v1067
        %v1415 = vpop.f32.mrb[0].mxu0
        %v1416 = vadd.f32 0.0, %v1415
        %v1417 = vpop.f32.mrb[0].mxu0
        %1418 = vdwg.mxu0
        %v1419 = vadd.f32 %v1320, %v1411
        %v1420 = vadd.f32 %v1325, %v1416
        %v1421 = vmax.f32 %v1144, %v1419
        %v1422 = vmax.f32 %v1145, %v1420
        %s1423 = scalar_lea.vmem [#allocation2], 3
        %v1424 = vld [vmem:[%s1423] ss:$2 sm:$0xff]
        %s1425 = scalar_lea.vmem [#allocation2], 19
        %v1426 = vld [vmem:[%s1425] ss:$2 sm:$0x3f]
        %1427 = vmatprep.subr.mxu0 0.0
        %1428 = vmatpush1.msra.mxu0 %v870
        %1429 = vmatprep.subr.mxu0 0.0
        %1430 = vmatpush1.msra.mxu0 %v871
        %1431 = vmatprep.subr.mxu0 0.0
        %1432 = vmatpush1.msra.mxu0 %v872
        %1433 = vmatprep.subr.mxu0 0.0
        %1434 = vmatpush1.msra.mxu0 %v873
        %1435 = vmatprep.subr.mxu0 0.0
        %1436 = vmatpush1.msra.mxu0 %v874
        %1437 = vmatprep.subr.mxu0 0.0
        %1438 = vmatpush1.msra.mxu0 %v875
        %1439 = vmatprep.subr.mxu0 0.0
        %1440 = vmatpush1.msra.mxu0 %v876
        %1441 = vmatprep.subr.mxu0 0.0
        %1442 = vmatpush1.msra.mxu0 %v877
        %1443 = vmatprep.subr.mxu0 0.0
        %1444 = vmatpush1.msra.mxu0 %v878
        %1445 = vmatprep.subr.mxu0 0.0
        %1446 = vmatpush1.msra.mxu0 %v879
        %1447 = vmatprep.subr.mxu0 0.0
        %1448 = vmatpush1.msra.mxu0 %v880
        %1449 = vmatprep.subr.mxu0 0.0
        %1450 = vmatpush1.msra.mxu0 %v881
        %1451 = vmatprep.subr.mxu0 0.0
        %1452 = vmatpush1.msra.mxu0 %v882
        %1453 = vmatprep.subr.mxu0 0.0
        %1454 = vmatpush1.msra.mxu0 %v883
        %1455 = vmatprep.subr.mxu0 0.0
        %1456 = vmatpush1.msra.mxu0 %v884
        %1457 = vmatprep.subr.mxu0 0.0
        %1458 = vmatpush1.msra.mxu0 0.0
        %1459 = vmatprep.subr.mxu0 0.0
        %1460 = vmatpush1.msra.mxu0 0.0
        %1461 = vmatprep.subr.mxu0 0.0
        %1462 = vmatpush1.msra.mxu0 0.0
        %1463 = vmatprep.subr.mxu0 0.0
        %1464 = vmatpush1.msra.mxu0 0.0
        %1465 = vmatprep.subr.mxu0 0.0
        %1466 = vmatpush1.msra.mxu0 0.0
        %1467 = vmatprep.subr.mxu0 0.0
        %1468 = vmatpush1.msra.mxu0 0.0
        %1469 = vmatprep.subr.mxu0 0.0
        %1470 = vmatpush1.msra.mxu0 0.0
        %1471 = vmatprep.subr.mxu0 0.0
        %1472 = vmatpush1.msra.mxu0 0.0
        %1473 = vmatprep.subr.mxu0 0.0
        %1474 = vmatpush1.msra.mxu0 0.0
        %1475 = vmatprep.subr.mxu0 0.0
        %1476 = vmatpush1.msra.mxu0 0.0
        %1477 = vmatprep.subr.mxu0 0.0
        %1478 = vmatpush1.msra.mxu0 0.0
        %1479 = vmatprep.subr.mxu0 0.0
        %1480 = vmatpush1.msra.mxu0 0.0
        %1481 = vmatprep.subr.mxu0 0.0
        %1482 = vmatpush1.msra.mxu0 0.0
        %1483 = vmatprep.subr.mxu0 0.0
        %1484 = vmatpush1.msra.mxu0 0.0
        %1485 = vmatprep.subr.mxu0 0.0
        %1486 = vmatpush1.msra.mxu0 0.0
        %1487 = vmatprep.subr.mxu0 0.0
        %1488 = vmatpush1.msra.mxu0 0.0
        %1489 = vmatprep.subr.mxu0 0.0
        %1490 = vmatpush1.msra.mxu0 0.0
        %1491 = vmatprep.mubr.f32.mxu0 0.0
        %1492 = vmatmul.mubr.f32.gmra.mrb[0].mxu0 %v1064
        %v1493 = vpop.f32.mrb[0].mxu0
        %v1494 = vadd.f32 0.0, %v1493
        %v1495 = vpop.f32.mrb[0].mxu0
        %1496 = vmatprep.mubr.f32.mxu0 0.0
        %1497 = vmatmul.mubr.f32.gmra.mrb[0].mxu0 %v1067
        %v1498 = vpop.f32.mrb[0].mxu0
        %v1499 = vadd.f32 0.0, %v1498
        %v1500 = vpop.f32.mrb[0].mxu0
        %1501 = vdwg.mxu0
        %1502 = vmatprep.subr.mxu0 0.0
        %1503 = vmatpush1.msra.mxu0 %v854
        %1504 = vmatprep.subr.mxu0 0.0
        %1505 = vmatpush1.msra.mxu0 %v855
        %1506 = vmatprep.subr.mxu0 0.0
        %1507 = vmatpush1.msra.mxu0 %v856
        %1508 = vmatprep.subr.mxu0 0.0
        %1509 = vmatpush1.msra.mxu0 %v857
        %1510 = vmatprep.subr.mxu0 0.0
        %1511 = vmatpush1.msra.mxu0 %v858
        %1512 = vmatprep.subr.mxu0 0.0
        %1513 = vmatpush1.msra.mxu0 %v859
        %1514 = vmatprep.subr.mxu0 0.0
        %1515 = vmatpush1.msra.mxu0 %v860
        %1516 = vmatprep.subr.mxu0 0.0
        %1517 = vmatpush1.msra.mxu0 %v861
        %1518 = vmatprep.subr.mxu0 0.0
        %1519 = vmatpush1.msra.mxu0 %v862
        %1520 = vmatprep.subr.mxu0 0.0
        %1521 = vmatpush1.msra.mxu0 %v863
        %1522 = vmatprep.subr.mxu0 0.0
        %1523 = vmatpush1.msra.mxu0 %v864
        %1524 = vmatprep.subr.mxu0 0.0
        %1525 = vmatpush1.msra.mxu0 %v865
        %1526 = vmatprep.subr.mxu0 0.0
        %1527 = vmatpush1.msra.mxu0 %v866
        %1528 = vmatprep.subr.mxu0 0.0
        %1529 = vmatpush1.msra.mxu0 %v867
        %1530 = vmatprep.subr.mxu0 0.0
        %1531 = vmatpush1.msra.mxu0 %v868
        %1532 = vmatprep.subr.mxu0 0.0
        %1533 = vmatpush1.msra.mxu0 0.0
        %1534 = vmatprep.subr.mxu0 0.0
        %1535 = vmatpush1.msra.mxu0 0.0
        %1536 = vmatprep.subr.mxu0 0.0
        %1537 = vmatpush1.msra.mxu0 0.0
        %1538 = vmatprep.subr.mxu0 0.0
        %1539 = vmatpush1.msra.mxu0 0.0
        %1540 = vmatprep.subr.mxu0 0.0
        %1541 = vmatpush1.msra.mxu0 0.0
        %1542 = vmatprep.subr.mxu0 0.0
        %1543 = vmatpush1.msra.mxu0 0.0
        %1544 = vmatprep.subr.mxu0 0.0
        %1545 = vmatpush1.msra.mxu0 0.0
        %1546 = vmatprep.subr.mxu0 0.0
        %1547 = vmatpush1.msra.mxu0 0.0
        %1548 = vmatprep.subr.mxu0 0.0
        %1549 = vmatpush1.msra.mxu0 0.0
        %1550 = vmatprep.subr.mxu0 0.0
        %1551 = vmatpush1.msra.mxu0 0.0
        %1552 = vmatprep.subr.mxu0 0.0
        %1553 = vmatpush1.msra.mxu0 0.0
        %1554 = vmatprep.subr.mxu0 0.0
        %1555 = vmatpush1.msra.mxu0 0.0
        %1556 = vmatprep.subr.mxu0 0.0
        %1557 = vmatpush1.msra.mxu0 0.0
        %1558 = vmatprep.subr.mxu0 0.0
        %1559 = vmatpush1.msra.mxu0 0.0
        %1560 = vmatprep.subr.mxu0 0.0
        %1561 = vmatpush1.msra.mxu0 0.0
        %1562 = vmatprep.subr.mxu0 0.0
        %1563 = vmatpush1.msra.mxu0 0.0
        %1564 = vmatprep.subr.mxu0 0.0
        %1565 = vmatpush1.msra.mxu0 0.0
        %1566 = vmatprep.mubr.f32.mxu0 0.0
        %1567 = vmatmul.mubr.f32.gmra.mrb[0].mxu0 %v886
        %v1568 = vpop.f32.mrb[0].mxu0
        %v1569 = vadd.f32 %v1494, %v1568
        %v1570 = vpop.f32.mrb[0].mxu0
        %1571 = vmatprep.mubr.f32.mxu0 0.0
        %1572 = vmatmul.mubr.f32.gmra.mrb[0].mxu0 %v889
        %v1573 = vpop.f32.mrb[0].mxu0
        %v1574 = vadd.f32 %v1499, %v1573
        %v1575 = vpop.f32.mrb[0].mxu0
        %1576 = vdwg.mxu0
        %v1578 = vsel %vm837, %v1424, 0
        %v1581 = vsel %vm837, %v1426, 0
        %1583 = vmatprep.subr.mxu0 0.0
        %1584 = vmatpush1.msra.mxu0 %v1048
        %1585 = vmatprep.subr.mxu0 0.0
        %1586 = vmatpush1.msra.mxu0 %v1049
        %1587 = vmatprep.subr.mxu0 0.0
        %1588 = vmatpush1.msra.mxu0 %v1050
        %1589 = vmatprep.subr.mxu0 0.0
        %1590 = vmatpush1.msra.mxu0 %v1051
        %1591 = vmatprep.subr.mxu0 0.0
        %1592 = vmatpush1.msra.mxu0 %v1052
        %1593 = vmatprep.subr.mxu0 0.0
        %1594 = vmatpush1.msra.mxu0 %v1053
        %1595 = vmatprep.subr.mxu0 0.0
        %1596 = vmatpush1.msra.mxu0 %v1054
        %1597 = vmatprep.subr.mxu0 0.0
        %1598 = vmatpush1.msra.mxu0 %v1055
        %1599 = vmatprep.subr.mxu0 0.0
        %1600 = vmatpush1.msra.mxu0 %v1056
        %1601 = vmatprep.subr.mxu0 0.0
        %1602 = vmatpush1.msra.mxu0 %v1057
        %1603 = vmatprep.subr.mxu0 0.0
        %1604 = vmatpush1.msra.mxu0 %v1058
        %1605 = vmatprep.subr.mxu0 0.0
        %1606 = vmatpush1.msra.mxu0 %v1059
        %1607 = vmatprep.subr.mxu0 0.0
        %1608 = vmatpush1.msra.mxu0 %v1060
        %1609 = vmatprep.subr.mxu0 0.0
        %1610 = vmatpush1.msra.mxu0 %v1061
        %1611 = vmatprep.subr.mxu0 0.0
        %1612 = vmatpush1.msra.mxu0 %v1062
        %1613 = vmatprep.subr.mxu0 0.0
        %1614 = vmatpush1.msra.mxu0 0.0
        %1615 = vmatprep.subr.mxu0 0.0
        %1616 = vmatpush1.msra.mxu0 0.0
        %1617 = vmatprep.subr.mxu0 0.0
        %1618 = vmatpush1.msra.mxu0 0.0
        %1619 = vmatprep.subr.mxu0 0.0
        %1620 = vmatpush1.msra.mxu0 0.0
        %1621 = vmatprep.subr.mxu0 0.0
        %1622 = vmatpush1.msra.mxu0 0.0
        %1623 = vmatprep.subr.mxu0 0.0
        %1624 = vmatpush1.msra.mxu0 0.0
        %1625 = vmatprep.subr.mxu0 0.0
        %1626 = vmatpush1.msra.mxu0 0.0
        %1627 = vmatprep.subr.mxu0 0.0
        %1628 = vmatpush1.msra.mxu0 0.0
        %1629 = vmatprep.subr.mxu0 0.0
        %1630 = vmatpush1.msra.mxu0 0.0
        %1631 = vmatprep.subr.mxu0 0.0
        %1632 = vmatpush1.msra.mxu0 0.0
        %1633 = vmatprep.subr.mxu0 0.0
        %1634 = vmatpush1.msra.mxu0 0.0
        %1635 = vmatprep.subr.mxu0 0.0
        %1636 = vmatpush1.msra.mxu0 0.0
        %1637 = vmatprep.subr.mxu0 0.0
        %1638 = vmatpush1.msra.mxu0 0.0
        %1639 = vmatprep.subr.mxu0 0.0
        %1640 = vmatpush1.msra.mxu0 0.0
        %1641 = vmatprep.subr.mxu0 0.0
        %1642 = vmatpush1.msra.mxu0 0.0
        %1643 = vmatprep.subr.mxu0 0.0
        %1644 = vmatpush1.msra.mxu0 0.0
        %1645 = vmatprep.subr.mxu0 0.0
        %1646 = vmatpush1.msra.mxu0 0.0
        %1647 = vmatprep.mubr.f32.mxu0 0.0
        %1648 = vmatmul.mubr.f32.gmra.mrb[0].mxu0 %v1578
        %v1649 = vpop.f32.mrb[0].mxu0
        %v1650 = vadd.f32 0.0, %v1649
        %v1651 = vpop.f32.mrb[0].mxu0
        %1652 = vmatprep.mubr.f32.mxu0 0.0
        %1653 = vmatmul.mubr.f32.gmra.mrb[0].mxu0 %v1581
        %v1654 = vpop.f32.mrb[0].mxu0
        %v1655 = vadd.f32 0.0, %v1654
        %v1656 = vpop.f32.mrb[0].mxu0
        %1657 = vdwg.mxu0
        %v1658 = vadd.f32 %v1569, %v1650
        %v1659 = vadd.f32 %v1574, %v1655
        %v1660 = vmax.f32 %v1421, %v1658
        %v1661 = vmax.f32 %v1422, %v1659
        %1662 = vmatprep.subr.mxu0 0.0
        %1663 = vmatpush1.msra.mxu0 %v1163
        %1664 = vmatprep.subr.mxu0 0.0
        %1665 = vmatpush1.msra.mxu0 %v1164
        %1666 = vmatprep.subr.mxu0 0.0
        %1667 = vmatpush1.msra.mxu0 %v1165
        %1668 = vmatprep.subr.mxu0 0.0
        %1669 = vmatpush1.msra.mxu0 %v1166
        %1670 = vmatprep.subr.mxu0 0.0
        %1671 = vmatpush1.msra.mxu0 %v1167
        %1672 = vmatprep.subr.mxu0 0.0
        %1673 = vmatpush1.msra.mxu0 %v1168
        %1674 = vmatprep.subr.mxu0 0.0
        %1675 = vmatpush1.msra.mxu0 %v1169
        %1676 = vmatprep.subr.mxu0 0.0
        %1677 = vmatpush1.msra.mxu0 %v1170
        %1678 = vmatprep.subr.mxu0 0.0
        %1679 = vmatpush1.msra.mxu0 %v1171
        %1680 = vmatprep.subr.mxu0 0.0
        %1681 = vmatpush1.msra.mxu0 %v1172
        %1682 = vmatprep.subr.mxu0 0.0
        %1683 = vmatpush1.msra.mxu0 %v1173
        %1684 = vmatprep.subr.mxu0 0.0
        %1685 = vmatpush1.msra.mxu0 %v1174
        %1686 = vmatprep.subr.mxu0 0.0
        %1687 = vmatpush1.msra.mxu0 %v1175
        %1688 = vmatprep.subr.mxu0 0.0
        %1689 = vmatpush1.msra.mxu0 %v1176
        %1690 = vmatprep.subr.mxu0 0.0
        %1691 = vmatpush1.msra.mxu0 %v1177
        %1692 = vmatprep.subr.mxu0 0.0
        %1693 = vmatpush1.msra.mxu0 0.0
        %1694 = vmatprep.subr.mxu0 0.0
        %1695 = vmatpush1.msra.mxu0 0.0
        %1696 = vmatprep.subr.mxu0 0.0
        %1697 = vmatpush1.msra.mxu0 0.0
        %1698 = vmatprep.subr.mxu0 0.0
        %1699 = vmatpush1.msra.mxu0 0.0
        %1700 = vmatprep.subr.mxu0 0.0
        %1701 = vmatpush1.msra.mxu0 0.0
        %1702 = vmatprep.subr.mxu0 0.0
        %1703 = vmatpush1.msra.mxu0 0.0
        %1704 = vmatprep.subr.mxu0 0.0
        %1705 = vmatpush1.msra.mxu0 0.0
        %1706 = vmatprep.subr.mxu0 0.0
        %1707 = vmatpush1.msra.mxu0 0.0
        %1708 = vmatprep.subr.mxu0 0.0
        %1709 = vmatpush1.msra.mxu0 0.0
        %1710 = vmatprep.subr.mxu0 0.0
        %1711 = vmatpush1.msra.mxu0 0.0
        %1712 = vmatprep.subr.mxu0 0.0
        %1713 = vmatpush1.msra.mxu0 0.0
        %1714 = vmatprep.subr.mxu0 0.0
        %1715 = vmatpush1.msra.mxu0 0.0
        %1716 = vmatprep.subr.mxu0 0.0
        %1717 = vmatpush1.msra.mxu0 0.0
        %1718 = vmatprep.subr.mxu0 0.0
        %1719 = vmatpush1.msra.mxu0 0.0
        %1720 = vmatprep.subr.mxu0 0.0
        %1721 = vmatpush1.msra.mxu0 0.0
        %1722 = vmatprep.subr.mxu0 0.0
        %1723 = vmatpush1.msra.mxu0 0.0
        %1724 = vmatprep.subr.mxu0 0.0
        %1725 = vmatpush1.msra.mxu0 0.0
        %1726 = vmatprep.mubr.f32.mxu0 0.0
        %1727 = vmatmul.mubr.f32.gmra.mrb[0].mxu0 %v1064
        %v1728 = vpop.f32.mrb[0].mxu0
        %v1729 = vadd.f32 0.0, %v1728
        %v1730 = vpop.f32.mrb[0].mxu0
        %1731 = vmatprep.mubr.f32.mxu0 0.0
        %1732 = vmatmul.mubr.f32.gmra.mrb[0].mxu0 %v1067
        %v1733 = vpop.f32.mrb[0].mxu0
        %v1734 = vadd.f32 0.0, %v1733
        %v1735 = vpop.f32.mrb[0].mxu0
        %1736 = vdwg.mxu0
        %1737 = vmatprep.subr.mxu0 0.0
        %1738 = vmatpush1.msra.mxu0 %v1147
        %1739 = vmatprep.subr.mxu0 0.0
        %1740 = vmatpush1.msra.mxu0 %v1148
        %1741 = vmatprep.subr.mxu0 0.0
        %1742 = vmatpush1.msra.mxu0 %v1149
        %1743 = vmatprep.subr.mxu0 0.0
        %1744 = vmatpush1.msra.mxu0 %v1150
        %1745 = vmatprep.subr.mxu0 0.0
        %1746 = vmatpush1.msra.mxu0 %v1151
        %1747 = vmatprep.subr.mxu0 0.0
        %1748 = vmatpush1.msra.mxu0 %v1152
        %1749 = vmatprep.subr.mxu0 0.0
        %1750 = vmatpush1.msra.mxu0 %v1153
        %1751 = vmatprep.subr.mxu0 0.0
        %1752 = vmatpush1.msra.mxu0 %v1154
        %1753 = vmatprep.subr.mxu0 0.0
        %1754 = vmatpush1.msra.mxu0 %v1155
        %1755 = vmatprep.subr.mxu0 0.0
        %1756 = vmatpush1.msra.mxu0 %v1156
        %1757 = vmatprep.subr.mxu0 0.0
        %1758 = vmatpush1.msra.mxu0 %v1157
        %1759 = vmatprep.subr.mxu0 0.0
        %1760 = vmatpush1.msra.mxu0 %v1158
        %1761 = vmatprep.subr.mxu0 0.0
        %1762 = vmatpush1.msra.mxu0 %v1159
        %1763 = vmatprep.subr.mxu0 0.0
        %1764 = vmatpush1.msra.mxu0 %v1160
        %1765 = vmatprep.subr.mxu0 0.0
        %1766 = vmatpush1.msra.mxu0 %v1161
        %1767 = vmatprep.subr.mxu0 0.0
        %1768 = vmatpush1.msra.mxu0 0.0
        %1769 = vmatprep.subr.mxu0 0.0
        %1770 = vmatpush1.msra.mxu0 0.0
        %1771 = vmatprep.subr.mxu0 0.0
        %1772 = vmatpush1.msra.mxu0 0.0
        %1773 = vmatprep.subr.mxu0 0.0
        %1774 = vmatpush1.msra.mxu0 0.0
        %1775 = vmatprep.subr.mxu0 0.0
        %1776 = vmatpush1.msra.mxu0 0.0
        %1777 = vmatprep.subr.mxu0 0.0
        %1778 = vmatpush1.msra.mxu0 0.0
        %1779 = vmatprep.subr.mxu0 0.0
        %1780 = vmatpush1.msra.mxu0 0.0
        %1781 = vmatprep.subr.mxu0 0.0
        %1782 = vmatpush1.msra.mxu0 0.0
        %1783 = vmatprep.subr.mxu0 0.0
        %1784 = vmatpush1.msra.mxu0 0.0
        %1785 = vmatprep.subr.mxu0 0.0
        %1786 = vmatpush1.msra.mxu0 0.0
        %1787 = vmatprep.subr.mxu0 0.0
        %1788 = vmatpush1.msra.mxu0 0.0
        %1789 = vmatprep.subr.mxu0 0.0
        %1790 = vmatpush1.msra.mxu0 0.0
        %1791 = vmatprep.subr.mxu0 0.0
        %1792 = vmatpush1.msra.mxu0 0.0
        %1793 = vmatprep.subr.mxu0 0.0
        %1794 = vmatpush1.msra.mxu0 0.0
        %1795 = vmatprep.subr.mxu0 0.0
        %1796 = vmatpush1.msra.mxu0 0.0
        %1797 = vmatprep.subr.mxu0 0.0
        %1798 = vmatpush1.msra.mxu0 0.0
        %1799 = vmatprep.subr.mxu0 0.0
        %1800 = vmatpush1.msra.mxu0 0.0
        %1801 = vmatprep.mubr.f32.mxu0 0.0
        %1802 = vmatmul.mubr.f32.gmra.mrb[0].mxu0 %v886
        %v1803 = vpop.f32.mrb[0].mxu0
        %v1804 = vadd.f32 %v1729, %v1803
        %v1805 = vpop.f32.mrb[0].mxu0
        %1806 = vmatprep.mubr.f32.mxu0 0.0
        %1807 = vmatmul.mubr.f32.gmra.mrb[0].mxu0 %v889
        %v1808 = vpop.f32.mrb[0].mxu0
        %v1809 = vadd.f32 %v1734, %v1808
        %v1810 = vpop.f32.mrb[0].mxu0
        %1811 = vdwg.mxu0
        %1812 = vmatprep.subr.mxu0 0.0
        %1813 = vmatpush1.msra.mxu0 %v1329
        %1814 = vmatprep.subr.mxu0 0.0
        %1815 = vmatpush1.msra.mxu0 %v1330
        %1816 = vmatprep.subr.mxu0 0.0
        %1817 = vmatpush1.msra.mxu0 %v1331
        %1818 = vmatprep.subr.mxu0 0.0
        %1819 = vmatpush1.msra.mxu0 %v1332
        %1820 = vmatprep.subr.mxu0 0.0
        %1821 = vmatpush1.msra.mxu0 %v1333
        %1822 = vmatprep.subr.mxu0 0.0
        %1823 = vmatpush1.msra.mxu0 %v1334
        %1824 = vmatprep.subr.mxu0 0.0
        %1825 = vmatpush1.msra.mxu0 %v1335
        %1826 = vmatprep.subr.mxu0 0.0
        %1827 = vmatpush1.msra.mxu0 %v1336
        %1828 = vmatprep.subr.mxu0 0.0
        %1829 = vmatpush1.msra.mxu0 %v1337
        %1830 = vmatprep.subr.mxu0 0.0
        %1831 = vmatpush1.msra.mxu0 %v1338
        %1832 = vmatprep.subr.mxu0 0.0
        %1833 = vmatpush1.msra.mxu0 %v1339
        %1834 = vmatprep.subr.mxu0 0.0
        %1835 = vmatpush1.msra.mxu0 %v1340
        %1836 = vmatprep.subr.mxu0 0.0
        %1837 = vmatpush1.msra.mxu0 %v1341
        %1838 = vmatprep.subr.mxu0 0.0
        %1839 = vmatpush1.msra.mxu0 %v1342
        %1840 = vmatprep.subr.mxu0 0.0
        %1841 = vmatpush1.msra.mxu0 %v1343
        %1842 = vmatprep.subr.mxu0 0.0
        %1843 = vmatpush1.msra.mxu0 0.0
        %1844 = vmatprep.subr.mxu0 0.0
        %1845 = vmatpush1.msra.mxu0 0.0
        %1846 = vmatprep.subr.mxu0 0.0
        %1847 = vmatpush1.msra.mxu0 0.0
        %1848 = vmatprep.subr.mxu0 0.0
        %1849 = vmatpush1.msra.mxu0 0.0
        %1850 = vmatprep.subr.mxu0 0.0
        %1851 = vmatpush1.msra.mxu0 0.0
        %1852 = vmatprep.subr.mxu0 0.0
        %1853 = vmatpush1.msra.mxu0 0.0
        %1854 = vmatprep.subr.mxu0 0.0
        %1855 = vmatpush1.msra.mxu0 0.0
        %1856 = vmatprep.subr.mxu0 0.0
        %1857 = vmatpush1.msra.mxu0 0.0
        %1858 = vmatprep.subr.mxu0 0.0
        %1859 = vmatpush1.msra.mxu0 0.0
        %1860 = vmatprep.subr.mxu0 0.0
        %1861 = vmatpush1.msra.mxu0 0.0
        %1862 = vmatprep.subr.mxu0 0.0
        %1863 = vmatpush1.msra.mxu0 0.0
        %1864 = vmatprep.subr.mxu0 0.0
        %1865 = vmatpush1.msra.mxu0 0.0
        %1866 = vmatprep.subr.mxu0 0.0
        %1867 = vmatpush1.msra.mxu0 0.0
        %1868 = vmatprep.subr.mxu0 0.0
        %1869 = vmatpush1.msra.mxu0 0.0
        %1870 = vmatprep.subr.mxu0 0.0
        %1871 = vmatpush1.msra.mxu0 0.0
        %1872 = vmatprep.subr.mxu0 0.0
        %1873 = vmatpush1.msra.mxu0 0.0
        %1874 = vmatprep.subr.mxu0 0.0
        %1875 = vmatpush1.msra.mxu0 0.0
        %1876 = vmatprep.mubr.f32.mxu0 0.0
        %1877 = vmatmul.mubr.f32.gmra.mrb[0].mxu0 %v1578
        %v1878 = vpop.f32.mrb[0].mxu0
        %v1879 = vadd.f32 0.0, %v1878
        %v1880 = vpop.f32.mrb[0].mxu0
        %1881 = vmatprep.mubr.f32.mxu0 0.0
        %1882 = vmatmul.mubr.f32.gmra.mrb[0].mxu0 %v1581
        %v1883 = vpop.f32.mrb[0].mxu0
        %v1884 = vadd.f32 0.0, %v1883
        %v1885 = vpop.f32.mrb[0].mxu0
        %1886 = vdwg.mxu0
        %v1887 = vadd.f32 %v1804, %v1879
        %v1888 = vadd.f32 %v1809, %v1884
        %v1889 = vmax.f32 %v1660, %v1887
        %v1890 = vmax.f32 %v1661, %v1888
        %v1891 = vld [vmem:[%s4] sm:$0x1]
        %v1893 = vlaneseq
        %v1894 = vshrl.u32 %v1893, 7
        %v1895 = vsub.s32 0, %v1894
        %v1896 = vrot.slane %v1891, %v1895
        %v1898 = vadd.f32 %v1889, %v1896
        %v1899 = vadd.f32 %v1890, %v1896
        %vm1900 = vcmp.gt.f32.partialorder %v1898, 0.0
        %vm1901 = vcmp.gt.f32.partialorder %v1899, 0.0
        %v1902 = vmul.f32 %v1898, 0.1
        %v1903 = vmul.f32 %v1899, 0.1
        %v1904 = vsel %vm1900, %v1898, %v1902
        %v1905 = vsel %vm1901, %v1899, %v1903
        %vm1906 = vcmask 916480
        %1907 = vst.msk [vmem:[#allocation3] sm:$0xff] %vm1906, %v1904
        %vm1908 = vcmask 914432
        %1909 = vst.msk [vmem:[#allocation3 + $0x8] sm:$0x3f] %vm1908, %v1905
        %v1910 = vld [vmem:[#allocation3] ss:$2 sm:$0x3f]
        %s1911 = scalar_lea.vmem [#allocation3], 1
        %v1912 = vld [vmem:[%s1911] ss:$2 sm:$0x3f]
        %s1913 = scalar_lea.vmem [#allocation3], 2
        %v1914 = vld [vmem:[%s1913] ss:$2 sm:$0x3f]
        %v1915 = vld [vmem:[%s5] sm:$0xff]
        %v1916 = vld [vmem:[%s5 + $0x8] sm:$0xff]
        %v1917 = vld [vmem:[%s5 + $0x10] sm:$0xff]
        %v1918 = vld [vmem:[%s5 + $0x18] sm:$0xff]
        %v1919 = vld [vmem:[%s5 + $0x20] sm:$0xff]
        %v1920 = vld [vmem:[%s5 + $0x28] sm:$0xff]
        %v1921 = vld [vmem:[%s5 + $0x30] sm:$0xff]
        %v1922 = vld [vmem:[%s5 + $0x38] sm:$0xff]
        %v1923 = vld [vmem:[%s5 + $0x40] sm:$0xff]
        %v1924 = vld [vmem:[%s5 + $0x48] sm:$0xff]
        %v1925 = vld [vmem:[%s5 + $0x50] sm:$0xff]
        %v1926 = vld [vmem:[%s5 + $0x58] sm:$0xff]
        %v1927 = vld [vmem:[%s5 + $0x60] sm:$0xff]
        %v1928 = vld [vmem:[%s5 + $0x68] sm:$0xff]
        %s1929 = scalar_lea.vmem %s5, 112
        %v1930 = vld [vmem:[%s1929] sm:$0xff]
        %v1931 = vld [vmem:[%s1929 + $0x8] sm:$0xff]
        %v1932 = vld [vmem:[%s1929 + $0x10] sm:$0xff]
        %v1933 = vld [vmem:[%s1929 + $0x18] sm:$0xff]
        %v1934 = vld [vmem:[%s1929 + $0x20] sm:$0xff]
        %v1935 = vld [vmem:[%s1929 + $0x28] sm:$0xff]
        %v1936 = vld [vmem:[%s1929 + $0x30] sm:$0xff]
        %v1937 = vld [vmem:[%s1929 + $0x38] sm:$0xff]
        %v1938 = vld [vmem:[%s1929 + $0x40] sm:$0xff]
        %v1939 = vld [vmem:[%s1929 + $0x48] sm:$0xff]
        %v1940 = vld [vmem:[%s1929 + $0x50] sm:$0xff]
        %v1941 = vld [vmem:[%s1929 + $0x58] sm:$0xff]
        %v1942 = vld [vmem:[%s1929 + $0x60] sm:$0xff]
        %v1943 = vld [vmem:[%s1929 + $0x68] sm:$0xff]
        %v1945 = vsel %vm1906, %v1912, 0
        %1947 = vmatprep.subr.mxu0 0.0
        %1948 = vmatpush1.msra.mxu0 %v1930
        %1949 = vmatprep.subr.mxu0 0.0
        %1950 = vmatpush1.msra.mxu0 %v1931
        %1951 = vmatprep.subr.mxu0 0.0
        %1952 = vmatpush1.msra.mxu0 %v1932
        %1953 = vmatprep.subr.mxu0 0.0
        %1954 = vmatpush1.msra.mxu0 %v1933
        %1955 = vmatprep.subr.mxu0 0.0
        %1956 = vmatpush1.msra.mxu0 %v1934
        %1957 = vmatprep.subr.mxu0 0.0
        %1958 = vmatpush1.msra.mxu0 %v1935
        %1959 = vmatprep.subr.mxu0 0.0
        %1960 = vmatpush1.msra.mxu0 %v1936
        %1961 = vmatprep.subr.mxu0 0.0
        %1962 = vmatpush1.msra.mxu0 %v1937
        %1963 = vmatprep.subr.mxu0 0.0
        %1964 = vmatpush1.msra.mxu0 %v1938
        %1965 = vmatprep.subr.mxu0 0.0
        %1966 = vmatpush1.msra.mxu0 %v1939
        %1967 = vmatprep.subr.mxu0 0.0
        %1968 = vmatpush1.msra.mxu0 %v1940
        %1969 = vmatprep.subr.mxu0 0.0
        %1970 = vmatpush1.msra.mxu0 %v1941
        %1971 = vmatprep.subr.mxu0 0.0
        %1972 = vmatpush1.msra.mxu0 %v1942
        %1973 = vmatprep.subr.mxu0 0.0
        %1974 = vmatpush1.msra.mxu0 %v1943
        %1975 = vmatprep.subr.mxu0 0.0
        %1976 = vmatpush1.msra.mxu0 0.0
        %1977 = vmatprep.subr.mxu0 0.0
        %1978 = vmatpush1.msra.mxu0 0.0
        %1979 = vmatprep.subr.mxu0 0.0
        %1980 = vmatpush1.msra.mxu0 0.0
        %1981 = vmatprep.subr.mxu0 0.0
        %1982 = vmatpush1.msra.mxu0 0.0
        %1983 = vmatprep.subr.mxu0 0.0
        %1984 = vmatpush1.msra.mxu0 0.0
        %1985 = vmatprep.subr.mxu0 0.0
        %1986 = vmatpush1.msra.mxu0 0.0
        %1987 = vmatprep.subr.mxu0 0.0
        %1988 = vmatpush1.msra.mxu0 0.0
        %1989 = vmatprep.subr.mxu0 0.0
        %1990 = vmatpush1.msra.mxu0 0.0
        %1991 = vmatprep.subr.mxu0 0.0
        %1992 = vmatpush1.msra.mxu0 0.0
        %1993 = vmatprep.subr.mxu0 0.0
        %1994 = vmatpush1.msra.mxu0 0.0
        %1995 = vmatprep.subr.mxu0 0.0
        %1996 = vmatpush1.msra.mxu0 0.0
        %1997 = vmatprep.subr.mxu0 0.0
        %1998 = vmatpush1.msra.mxu0 0.0
        %1999 = vmatprep.subr.mxu0 0.0
        %2000 = vmatpush1.msra.mxu0 0.0
        %2001 = vmatprep.subr.mxu0 0.0
        %2002 = vmatpush1.msra.mxu0 0.0
        %2003 = vmatprep.subr.mxu0 0.0
        %2004 = vmatpush1.msra.mxu0 0.0
        %2005 = vmatprep.subr.mxu0 0.0
        %2006 = vmatpush1.msra.mxu0 0.0
        %2007 = vmatprep.subr.mxu0 0.0
        %2008 = vmatpush1.msra.mxu0 0.0
        %2009 = vmatprep.subr.mxu0 0.0
        %2010 = vmatpush1.msra.mxu0 0.0
        %2011 = vmatprep.mubr.f32.mxu0 0.0
        %2012 = vmatmul.mubr.f32.gmra.mrb[0].mxu0 %v1945
        %v2013 = vpop.f32.mrb[0].mxu0
        %v2014 = vadd.f32 0.0, %v2013
        %v2015 = vpop.f32.mrb[0].mxu0
        %2016 = vdwg.mxu0
        %v2018 = vsel %vm1906, %v1910, 0
        %2020 = vmatprep.subr.mxu0 0.0
        %2021 = vmatpush1.msra.mxu0 %v1915
        %2022 = vmatprep.subr.mxu0 0.0
        %2023 = vmatpush1.msra.mxu0 %v1916
        %2024 = vmatprep.subr.mxu0 0.0
        %2025 = vmatpush1.msra.mxu0 %v1917
        %2026 = vmatprep.subr.mxu0 0.0
        %2027 = vmatpush1.msra.mxu0 %v1918
        %2028 = vmatprep.subr.mxu0 0.0
        %2029 = vmatpush1.msra.mxu0 %v1919
        %2030 = vmatprep.subr.mxu0 0.0
        %2031 = vmatpush1.msra.mxu0 %v1920
        %2032 = vmatprep.subr.mxu0 0.0
        %2033 = vmatpush1.msra.mxu0 %v1921
        %2034 = vmatprep.subr.mxu0 0.0
        %2035 = vmatpush1.msra.mxu0 %v1922
        %2036 = vmatprep.subr.mxu0 0.0
        %2037 = vmatpush1.msra.mxu0 %v1923
        %2038 = vmatprep.subr.mxu0 0.0
        %2039 = vmatpush1.msra.mxu0 %v1924
        %2040 = vmatprep.subr.mxu0 0.0
        %2041 = vmatpush1.msra.mxu0 %v1925
        %2042 = vmatprep.subr.mxu0 0.0
        %2043 = vmatpush1.msra.mxu0 %v1926
        %2044 = vmatprep.subr.mxu0 0.0
        %2045 = vmatpush1.msra.mxu0 %v1927
        %2046 = vmatprep.subr.mxu0 0.0
        %2047 = vmatpush1.msra.mxu0 %v1928
        %2048 = vmatprep.subr.mxu0 0.0
        %2049 = vmatpush1.msra.mxu0 0.0
        %2050 = vmatprep.subr.mxu0 0.0
        %2051 = vmatpush1.msra.mxu0 0.0
        %2052 = vmatprep.subr.mxu0 0.0
        %2053 = vmatpush1.msra.mxu0 0.0
        %2054 = vmatprep.subr.mxu0 0.0
        %2055 = vmatpush1.msra.mxu0 0.0
        %2056 = vmatprep.subr.mxu0 0.0
        %2057 = vmatpush1.msra.mxu0 0.0
        %2058 = vmatprep.subr.mxu0 0.0
        %2059 = vmatpush1.msra.mxu0 0.0
        %2060 = vmatprep.subr.mxu0 0.0
        %2061 = vmatpush1.msra.mxu0 0.0
        %2062 = vmatprep.subr.mxu0 0.0
        %2063 = vmatpush1.msra.mxu0 0.0
        %2064 = vmatprep.subr.mxu0 0.0
        %2065 = vmatpush1.msra.mxu0 0.0
        %2066 = vmatprep.subr.mxu0 0.0
        %2067 = vmatpush1.msra.mxu0 0.0
        %2068 = vmatprep.subr.mxu0 0.0
        %2069 = vmatpush1.msra.mxu0 0.0
        %2070 = vmatprep.subr.mxu0 0.0
        %2071 = vmatpush1.msra.mxu0 0.0
        %2072 = vmatprep.subr.mxu0 0.0
        %2073 = vmatpush1.msra.mxu0 0.0
        %2074 = vmatprep.subr.mxu0 0.0
        %2075 = vmatpush1.msra.mxu0 0.0
        %2076 = vmatprep.subr.mxu0 0.0
        %2077 = vmatpush1.msra.mxu0 0.0
        %2078 = vmatprep.subr.mxu0 0.0
        %2079 = vmatpush1.msra.mxu0 0.0
        %2080 = vmatprep.subr.mxu0 0.0
        %2081 = vmatpush1.msra.mxu0 0.0
        %2082 = vmatprep.subr.mxu0 0.0
        %2083 = vmatpush1.msra.mxu0 0.0
        %2084 = vmatprep.mubr.f32.mxu0 0.0
        %2085 = vmatmul.mubr.f32.gmra.mrb[0].mxu0 %v2018
        %v2086 = vpop.f32.mrb[0].mxu0
        %v2087 = vadd.f32 %v2014, %v2086
        %v2088 = vpop.f32.mrb[0].mxu0
        %2089 = vdwg.mxu0
        %s2090 = scalar_lea.vmem %s5, 224
        %v2091 = vld [vmem:[%s2090] sm:$0xff]
        %v2092 = vld [vmem:[%s2090 + $0x8] sm:$0xff]
        %v2093 = vld [vmem:[%s2090 + $0x10] sm:$0xff]
        %v2094 = vld [vmem:[%s2090 + $0x18] sm:$0xff]
        %v2095 = vld [vmem:[%s2090 + $0x20] sm:$0xff]
        %v2096 = vld [vmem:[%s2090 + $0x28] sm:$0xff]
        %v2097 = vld [vmem:[%s2090 + $0x30] sm:$0xff]
        %v2098 = vld [vmem:[%s2090 + $0x38] sm:$0xff]
        %v2099 = vld [vmem:[%s2090 + $0x40] sm:$0xff]
        %v2100 = vld [vmem:[%s2090 + $0x48] sm:$0xff]
        %v2101 = vld [vmem:[%s2090 + $0x50] sm:$0xff]
        %v2102 = vld [vmem:[%s2090 + $0x58] sm:$0xff]
        %v2103 = vld [vmem:[%s2090 + $0x60] sm:$0xff]
        %v2104 = vld [vmem:[%s2090 + $0x68] sm:$0xff]
        %v2106 = vsel %vm1906, %v1914, 0
        %2108 = vmatprep.subr.mxu0 0.0
        %2109 = vmatpush1.msra.mxu0 %v2091
        %2110 = vmatprep.subr.mxu0 0.0
        %2111 = vmatpush1.msra.mxu0 %v2092
        %2112 = vmatprep.subr.mxu0 0.0
        %2113 = vmatpush1.msra.mxu0 %v2093
        %2114 = vmatprep.subr.mxu0 0.0
        %2115 = vmatpush1.msra.mxu0 %v2094
        %2116 = vmatprep.subr.mxu0 0.0
        %2117 = vmatpush1.msra.mxu0 %v2095
        %2118 = vmatprep.subr.mxu0 0.0
        %2119 = vmatpush1.msra.mxu0 %v2096
        %2120 = vmatprep.subr.mxu0 0.0
        %2121 = vmatpush1.msra.mxu0 %v2097
        %2122 = vmatprep.subr.mxu0 0.0
        %2123 = vmatpush1.msra.mxu0 %v2098
        %2124 = vmatprep.subr.mxu0 0.0
        %2125 = vmatpush1.msra.mxu0 %v2099
        %2126 = vmatprep.subr.mxu0 0.0
        %2127 = vmatpush1.msra.mxu0 %v2100
        %2128 = vmatprep.subr.mxu0 0.0
        %2129 = vmatpush1.msra.mxu0 %v2101
        %2130 = vmatprep.subr.mxu0 0.0
        %2131 = vmatpush1.msra.mxu0 %v2102
        %2132 = vmatprep.subr.mxu0 0.0
        %2133 = vmatpush1.msra.mxu0 %v2103
        %2134 = vmatprep.subr.mxu0 0.0
        %2135 = vmatpush1.msra.mxu0 %v2104
        %2136 = vmatprep.subr.mxu0 0.0
        %2137 = vmatpush1.msra.mxu0 0.0
        %2138 = vmatprep.subr.mxu0 0.0
        %2139 = vmatpush1.msra.mxu0 0.0
        %2140 = vmatprep.subr.mxu0 0.0
        %2141 = vmatpush1.msra.mxu0 0.0
        %2142 = vmatprep.subr.mxu0 0.0
        %2143 = vmatpush1.msra.mxu0 0.0
        %2144 = vmatprep.subr.mxu0 0.0
        %2145 = vmatpush1.msra.mxu0 0.0
        %2146 = vmatprep.subr.mxu0 0.0
        %2147 = vmatpush1.msra.mxu0 0.0
        %2148 = vmatprep.subr.mxu0 0.0
        %2149 = vmatpush1.msra.mxu0 0.0
        %2150 = vmatprep.subr.mxu0 0.0
        %2151 = vmatpush1.msra.mxu0 0.0
        %2152 = vmatprep.subr.mxu0 0.0
        %2153 = vmatpush1.msra.mxu0 0.0
        %2154 = vmatprep.subr.mxu0 0.0
        %2155 = vmatpush1.msra.mxu0 0.0
        %2156 = vmatprep.subr.mxu0 0.0
        %2157 = vmatpush1.msra.mxu0 0.0
        %2158 = vmatprep.subr.mxu0 0.0
        %2159 = vmatpush1.msra.mxu0 0.0
        %2160 = vmatprep.subr.mxu0 0.0
        %2161 = vmatpush1.msra.mxu0 0.0
        %2162 = vmatprep.subr.mxu0 0.0
        %2163 = vmatpush1.msra.mxu0 0.0
        %2164 = vmatprep.subr.mxu0 0.0
        %2165 = vmatpush1.msra.mxu0 0.0
        %2166 = vmatprep.subr.mxu0 0.0
        %2167 = vmatpush1.msra.mxu0 0.0
        %2168 = vmatprep.subr.mxu0 0.0
        %2169 = vmatpush1.msra.mxu0 0.0
        %2170 = vmatprep.subr.mxu0 0.0
        %2171 = vmatpush1.msra.mxu0 0.0
        %2172 = vmatprep.mubr.f32.mxu0 0.0
        %2173 = vmatmul.mubr.f32.gmra.mrb[0].mxu0 %v2106
        %v2174 = vpop.f32.mrb[0].mxu0
        %v2175 = vadd.f32 0.0, %v2174
        %v2176 = vpop.f32.mrb[0].mxu0
        %2177 = vdwg.mxu0
        %v2178 = vadd.f32 %v2087, %v2175
        %s2179 = scalar_lea.vmem %s5, 336
        %v2180 = vld [vmem:[%s2179] sm:$0xff]
        %v2181 = vld [vmem:[%s2179 + $0x8] sm:$0xff]
        %v2182 = vld [vmem:[%s2179 + $0x10] sm:$0xff]
        %v2183 = vld [vmem:[%s2179 + $0x18] sm:$0xff]
        %v2184 = vld [vmem:[%s2179 + $0x20] sm:$0xff]
        %v2185 = vld [vmem:[%s2179 + $0x28] sm:$0xff]
        %v2186 = vld [vmem:[%s2179 + $0x30] sm:$0xff]
        %v2187 = vld [vmem:[%s2179 + $0x38] sm:$0xff]
        %v2188 = vld [vmem:[%s2179 + $0x40] sm:$0xff]
        %v2189 = vld [vmem:[%s2179 + $0x48] sm:$0xff]
        %v2190 = vld [vmem:[%s2179 + $0x50] sm:$0xff]
        %v2191 = vld [vmem:[%s2179 + $0x58] sm:$0xff]
        %v2192 = vld [vmem:[%s2179 + $0x60] sm:$0xff]
        %v2193 = vld [vmem:[%s2179 + $0x68] sm:$0xff]
        %s2194 = scalar_lea.vmem %s5, 448
        %v2195 = vld [vmem:[%s2194] sm:$0xff]
        %v2196 = vld [vmem:[%s2194 + $0x8] sm:$0xff]
        %v2197 = vld [vmem:[%s2194 + $0x10] sm:$0xff]
        %v2198 = vld [vmem:[%s2194 + $0x18] sm:$0xff]
        %v2199 = vld [vmem:[%s2194 + $0x20] sm:$0xff]
        %v2200 = vld [vmem:[%s2194 + $0x28] sm:$0xff]
        %v2201 = vld [vmem:[%s2194 + $0x30] sm:$0xff]
        %v2202 = vld [vmem:[%s2194 + $0x38] sm:$0xff]
        %v2203 = vld [vmem:[%s2194 + $0x40] sm:$0xff]
        %v2204 = vld [vmem:[%s2194 + $0x48] sm:$0xff]
        %v2205 = vld [vmem:[%s2194 + $0x50] sm:$0xff]
        %v2206 = vld [vmem:[%s2194 + $0x58] sm:$0xff]
        %v2207 = vld [vmem:[%s2194 + $0x60] sm:$0xff]
        %v2208 = vld [vmem:[%s2194 + $0x68] sm:$0xff]
        %2209 = vmatprep.subr.mxu0 0.0
        %2210 = vmatpush1.msra.mxu0 %v2195
        %2211 = vmatprep.subr.mxu0 0.0
        %2212 = vmatpush1.msra.mxu0 %v2196
        %2213 = vmatprep.subr.mxu0 0.0
        %2214 = vmatpush1.msra.mxu0 %v2197
        %2215 = vmatprep.subr.mxu0 0.0
        %2216 = vmatpush1.msra.mxu0 %v2198
        %2217 = vmatprep.subr.mxu0 0.0
        %2218 = vmatpush1.msra.mxu0 %v2199
        %2219 = vmatprep.subr.mxu0 0.0
        %2220 = vmatpush1.msra.mxu0 %v2200
        %2221 = vmatprep.subr.mxu0 0.0
        %2222 = vmatpush1.msra.mxu0 %v2201
        %2223 = vmatprep.subr.mxu0 0.0
        %2224 = vmatpush1.msra.mxu0 %v2202
        %2225 = vmatprep.subr.mxu0 0.0
        %2226 = vmatpush1.msra.mxu0 %v2203
        %2227 = vmatprep.subr.mxu0 0.0
        %2228 = vmatpush1.msra.mxu0 %v2204
        %2229 = vmatprep.subr.mxu0 0.0
        %2230 = vmatpush1.msra.mxu0 %v2205
        %2231 = vmatprep.subr.mxu0 0.0
        %2232 = vmatpush1.msra.mxu0 %v2206
        %2233 = vmatprep.subr.mxu0 0.0
        %2234 = vmatpush1.msra.mxu0 %v2207
        %2235 = vmatprep.subr.mxu0 0.0
        %2236 = vmatpush1.msra.mxu0 %v2208
        %2237 = vmatprep.subr.mxu0 0.0
        %2238 = vmatpush1.msra.mxu0 0.0
        %2239 = vmatprep.subr.mxu0 0.0
        %2240 = vmatpush1.msra.mxu0 0.0
        %2241 = vmatprep.subr.mxu0 0.0
        %2242 = vmatpush1.msra.mxu0 0.0
        %2243 = vmatprep.subr.mxu0 0.0
        %2244 = vmatpush1.msra.mxu0 0.0
        %2245 = vmatprep.subr.mxu0 0.0
        %2246 = vmatpush1.msra.mxu0 0.0
        %2247 = vmatprep.subr.mxu0 0.0
        %2248 = vmatpush1.msra.mxu0 0.0
        %2249 = vmatprep.subr.mxu0 0.0
        %2250 = vmatpush1.msra.mxu0 0.0
        %2251 = vmatprep.subr.mxu0 0.0
        %2252 = vmatpush1.msra.mxu0 0.0
        %2253 = vmatprep.subr.mxu0 0.0
        %2254 = vmatpush1.msra.mxu0 0.0
        %2255 = vmatprep.subr.mxu0 0.0
        %2256 = vmatpush1.msra.mxu0 0.0
        %2257 = vmatprep.subr.mxu0 0.0
        %2258 = vmatpush1.msra.mxu0 0.0
        %2259 = vmatprep.subr.mxu0 0.0
        %2260 = vmatpush1.msra.mxu0 0.0
        %2261 = vmatprep.subr.mxu0 0.0
        %2262 = vmatpush1.msra.mxu0 0.0
        %2263 = vmatprep.subr.mxu0 0.0
        %2264 = vmatpush1.msra.mxu0 0.0
        %2265 = vmatprep.subr.mxu0 0.0
        %2266 = vmatpush1.msra.mxu0 0.0
        %2267 = vmatprep.subr.mxu0 0.0
        %2268 = vmatpush1.msra.mxu0 0.0
        %2269 = vmatprep.subr.mxu0 0.0
        %2270 = vmatpush1.msra.mxu0 0.0
        %2271 = vmatprep.subr.mxu0 0.0
        %2272 = vmatpush1.msra.mxu0 0.0
        %2273 = vmatprep.mubr.f32.mxu0 0.0
        %2274 = vmatmul.mubr.f32.gmra.mrb[0].mxu0 %v1945
        %v2275 = vpop.f32.mrb[0].mxu0
        %v2276 = vadd.f32 0.0, %v2275
        %v2277 = vpop.f32.mrb[0].mxu0
        %2278 = vdwg.mxu0
        %2279 = vmatprep.subr.mxu0 0.0
        %2280 = vmatpush1.msra.mxu0 %v2180
        %2281 = vmatprep.subr.mxu0 0.0
        %2282 = vmatpush1.msra.mxu0 %v2181
        %2283 = vmatprep.subr.mxu0 0.0
        %2284 = vmatpush1.msra.mxu0 %v2182
        %2285 = vmatprep.subr.mxu0 0.0
        %2286 = vmatpush1.msra.mxu0 %v2183
        %2287 = vmatprep.subr.mxu0 0.0
        %2288 = vmatpush1.msra.mxu0 %v2184
        %2289 = vmatprep.subr.mxu0 0.0
        %2290 = vmatpush1.msra.mxu0 %v2185
        %2291 = vmatprep.subr.mxu0 0.0
        %2292 = vmatpush1.msra.mxu0 %v2186
        %2293 = vmatprep.subr.mxu0 0.0
        %2294 = vmatpush1.msra.mxu0 %v2187
        %2295 = vmatprep.subr.mxu0 0.0
        %2296 = vmatpush1.msra.mxu0 %v2188
        %2297 = vmatprep.subr.mxu0 0.0
        %2298 = vmatpush1.msra.mxu0 %v2189
        %2299 = vmatprep.subr.mxu0 0.0
        %2300 = vmatpush1.msra.mxu0 %v2190
        %2301 = vmatprep.subr.mxu0 0.0
        %2302 = vmatpush1.msra.mxu0 %v2191
        %2303 = vmatprep.subr.mxu0 0.0
        %2304 = vmatpush1.msra.mxu0 %v2192
        %2305 = vmatprep.subr.mxu0 0.0
        %2306 = vmatpush1.msra.mxu0 %v2193
        %2307 = vmatprep.subr.mxu0 0.0
        %2308 = vmatpush1.msra.mxu0 0.0
        %2309 = vmatprep.subr.mxu0 0.0
        %2310 = vmatpush1.msra.mxu0 0.0
        %2311 = vmatprep.subr.mxu0 0.0
        %2312 = vmatpush1.msra.mxu0 0.0
        %2313 = vmatprep.subr.mxu0 0.0
        %2314 = vmatpush1.msra.mxu0 0.0
        %2315 = vmatprep.subr.mxu0 0.0
        %2316 = vmatpush1.msra.mxu0 0.0
        %2317 = vmatprep.subr.mxu0 0.0
        %2318 = vmatpush1.msra.mxu0 0.0
        %2319 = vmatprep.subr.mxu0 0.0
        %2320 = vmatpush1.msra.mxu0 0.0
        %2321 = vmatprep.subr.mxu0 0.0
        %2322 = vmatpush1.msra.mxu0 0.0
        %2323 = vmatprep.subr.mxu0 0.0
        %2324 = vmatpush1.msra.mxu0 0.0
        %2325 = vmatprep.subr.mxu0 0.0
        %2326 = vmatpush1.msra.mxu0 0.0
        %2327 = vmatprep.subr.mxu0 0.0
        %2328 = vmatpush1.msra.mxu0 0.0
        %2329 = vmatprep.subr.mxu0 0.0
        %2330 = vmatpush1.msra.mxu0 0.0
        %2331 = vmatprep.subr.mxu0 0.0
        %2332 = vmatpush1.msra.mxu0 0.0
        %2333 = vmatprep.subr.mxu0 0.0
        %2334 = vmatpush1.msra.mxu0 0.0
        %2335 = vmatprep.subr.mxu0 0.0
        %2336 = vmatpush1.msra.mxu0 0.0
        %2337 = vmatprep.subr.mxu0 0.0
        %2338 = vmatpush1.msra.mxu0 0.0
        %2339 = vmatprep.subr.mxu0 0.0
        %2340 = vmatpush1.msra.mxu0 0.0
        %2341 = vmatprep.subr.mxu0 0.0
        %2342 = vmatpush1.msra.mxu0 0.0
        %2343 = vmatprep.mubr.f32.mxu0 0.0
        %2344 = vmatmul.mubr.f32.gmra.mrb[0].mxu0 %v2018
        %v2345 = vpop.f32.mrb[0].mxu0
        %v2346 = vadd.f32 %v2276, %v2345
        %v2347 = vpop.f32.mrb[0].mxu0
        %2348 = vdwg.mxu0
        %s2349 = scalar_lea.vmem %s5, 560
        %v2350 = vld [vmem:[%s2349] sm:$0xff]
        %v2351 = vld [vmem:[%s2349 + $0x8] sm:$0xff]
        %v2352 = vld [vmem:[%s2349 + $0x10] sm:$0xff]
        %v2353 = vld [vmem:[%s2349 + $0x18] sm:$0xff]
        %v2354 = vld [vmem:[%s2349 + $0x20] sm:$0xff]
        %v2355 = vld [vmem:[%s2349 + $0x28] sm:$0xff]
        %v2356 = vld [vmem:[%s2349 + $0x30] sm:$0xff]
        %v2357 = vld [vmem:[%s2349 + $0x38] sm:$0xff]
        %v2358 = vld [vmem:[%s2349 + $0x40] sm:$0xff]
        %v2359 = vld [vmem:[%s2349 + $0x48] sm:$0xff]
        %v2360 = vld [vmem:[%s2349 + $0x50] sm:$0xff]
        %v2361 = vld [vmem:[%s2349 + $0x58] sm:$0xff]
        %v2362 = vld [vmem:[%s2349 + $0x60] sm:$0xff]
        %v2363 = vld [vmem:[%s2349 + $0x68] sm:$0xff]
        %2364 = vmatprep.subr.mxu0 0.0
        %2365 = vmatpush1.msra.mxu0 %v2350
        %2366 = vmatprep.subr.mxu0 0.0
        %2367 = vmatpush1.msra.mxu0 %v2351
        %2368 = vmatprep.subr.mxu0 0.0
        %2369 = vmatpush1.msra.mxu0 %v2352
        %2370 = vmatprep.subr.mxu0 0.0
        %2371 = vmatpush1.msra.mxu0 %v2353
        %2372 = vmatprep.subr.mxu0 0.0
        %2373 = vmatpush1.msra.mxu0 %v2354
        %2374 = vmatprep.subr.mxu0 0.0
        %2375 = vmatpush1.msra.mxu0 %v2355
        %2376 = vmatprep.subr.mxu0 0.0
        %2377 = vmatpush1.msra.mxu0 %v2356
        %2378 = vmatprep.subr.mxu0 0.0
        %2379 = vmatpush1.msra.mxu0 %v2357
        %2380 = vmatprep.subr.mxu0 0.0
        %2381 = vmatpush1.msra.mxu0 %v2358
        %2382 = vmatprep.subr.mxu0 0.0
        %2383 = vmatpush1.msra.mxu0 %v2359
        %2384 = vmatprep.subr.mxu0 0.0
        %2385 = vmatpush1.msra.mxu0 %v2360
        %2386 = vmatprep.subr.mxu0 0.0
        %2387 = vmatpush1.msra.mxu0 %v2361
        %2388 = vmatprep.subr.mxu0 0.0
        %2389 = vmatpush1.msra.mxu0 %v2362
        %2390 = vmatprep.subr.mxu0 0.0
        %2391 = vmatpush1.msra.mxu0 %v2363
        %2392 = vmatprep.subr.mxu0 0.0
        %2393 = vmatpush1.msra.mxu0 0.0
        %2394 = vmatprep.subr.mxu0 0.0
        %2395 = vmatpush1.msra.mxu0 0.0
        %2396 = vmatprep.subr.mxu0 0.0
        %2397 = vmatpush1.msra.mxu0 0.0
        %2398 = vmatprep.subr.mxu0 0.0
        %2399 = vmatpush1.msra.mxu0 0.0
        %2400 = vmatprep.subr.mxu0 0.0
        %2401 = vmatpush1.msra.mxu0 0.0
        %2402 = vmatprep.subr.mxu0 0.0
        %2403 = vmatpush1.msra.mxu0 0.0
        %2404 = vmatprep.subr.mxu0 0.0
        %2405 = vmatpush1.msra.mxu0 0.0
        %2406 = vmatprep.subr.mxu0 0.0
        %2407 = vmatpush1.msra.mxu0 0.0
        %2408 = vmatprep.subr.mxu0 0.0
        %2409 = vmatpush1.msra.mxu0 0.0
        %2410 = vmatprep.subr.mxu0 0.0
        %2411 = vmatpush1.msra.mxu0 0.0
        %2412 = vmatprep.subr.mxu0 0.0
        %2413 = vmatpush1.msra.mxu0 0.0
        %2414 = vmatprep.subr.mxu0 0.0
        %2415 = vmatpush1.msra.mxu0 0.0
        %2416 = vmatprep.subr.mxu0 0.0
        %2417 = vmatpush1.msra.mxu0 0.0
        %2418 = vmatprep.subr.mxu0 0.0
        %2419 = vmatpush1.msra.mxu0 0.0
        %2420 = vmatprep.subr.mxu0 0.0
        %2421 = vmatpush1.msra.mxu0 0.0
        %2422 = vmatprep.subr.mxu0 0.0
        %2423 = vmatpush1.msra.mxu0 0.0
        %2424 = vmatprep.subr.mxu0 0.0
        %2425 = vmatpush1.msra.mxu0 0.0
        %2426 = vmatprep.subr.mxu0 0.0
        %2427 = vmatpush1.msra.mxu0 0.0
        %2428 = vmatprep.mubr.f32.mxu0 0.0
        %2429 = vmatmul.mubr.f32.gmra.mrb[0].mxu0 %v2106
        %v2430 = vpop.f32.mrb[0].mxu0
        %v2431 = vadd.f32 0.0, %v2430
        %v2432 = vpop.f32.mrb[0].mxu0
        %2433 = vdwg.mxu0
        %v2434 = vadd.f32 %v2346, %v2431
        %v2435 = vmax.f32 %v2178, %v2434
        %s2436 = scalar_lea.vmem [#allocation3], 3
        %v2437 = vld [vmem:[%s2436] ss:$2 sm:$0x3f]
        %2438 = vmatprep.subr.mxu0 0.0
        %2439 = vmatpush1.msra.mxu0 %v1930
        %2440 = vmatprep.subr.mxu0 0.0
        %2441 = vmatpush1.msra.mxu0 %v1931
        %2442 = vmatprep.subr.mxu0 0.0
        %2443 = vmatpush1.msra.mxu0 %v1932
        %2444 = vmatprep.subr.mxu0 0.0
        %2445 = vmatpush1.msra.mxu0 %v1933
        %2446 = vmatprep.subr.mxu0 0.0
        %2447 = vmatpush1.msra.mxu0 %v1934
        %2448 = vmatprep.subr.mxu0 0.0
        %2449 = vmatpush1.msra.mxu0 %v1935
        %2450 = vmatprep.subr.mxu0 0.0
        %2451 = vmatpush1.msra.mxu0 %v1936
        %2452 = vmatprep.subr.mxu0 0.0
        %2453 = vmatpush1.msra.mxu0 %v1937
        %2454 = vmatprep.subr.mxu0 0.0
        %2455 = vmatpush1.msra.mxu0 %v1938
        %2456 = vmatprep.subr.mxu0 0.0
        %2457 = vmatpush1.msra.mxu0 %v1939
        %2458 = vmatprep.subr.mxu0 0.0
        %2459 = vmatpush1.msra.mxu0 %v1940
        %2460 = vmatprep.subr.mxu0 0.0
        %2461 = vmatpush1.msra.mxu0 %v1941
        %2462 = vmatprep.subr.mxu0 0.0
        %2463 = vmatpush1.msra.mxu0 %v1942
        %2464 = vmatprep.subr.mxu0 0.0
        %2465 = vmatpush1.msra.mxu0 %v1943
        %2466 = vmatprep.subr.mxu0 0.0
        %2467 = vmatpush1.msra.mxu0 0.0
        %2468 = vmatprep.subr.mxu0 0.0
        %2469 = vmatpush1.msra.mxu0 0.0
        %2470 = vmatprep.subr.mxu0 0.0
        %2471 = vmatpush1.msra.mxu0 0.0
        %2472 = vmatprep.subr.mxu0 0.0
        %2473 = vmatpush1.msra.mxu0 0.0
        %2474 = vmatprep.subr.mxu0 0.0
        %2475 = vmatpush1.msra.mxu0 0.0
        %2476 = vmatprep.subr.mxu0 0.0
        %2477 = vmatpush1.msra.mxu0 0.0
        %2478 = vmatprep.subr.mxu0 0.0
        %2479 = vmatpush1.msra.mxu0 0.0
        %2480 = vmatprep.subr.mxu0 0.0
        %2481 = vmatpush1.msra.mxu0 0.0
        %2482 = vmatprep.subr.mxu0 0.0
        %2483 = vmatpush1.msra.mxu0 0.0
        %2484 = vmatprep.subr.mxu0 0.0
        %2485 = vmatpush1.msra.mxu0 0.0
        %2486 = vmatprep.subr.mxu0 0.0
        %2487 = vmatpush1.msra.mxu0 0.0
        %2488 = vmatprep.subr.mxu0 0.0
        %2489 = vmatpush1.msra.mxu0 0.0
        %2490 = vmatprep.subr.mxu0 0.0
        %2491 = vmatpush1.msra.mxu0 0.0
        %2492 = vmatprep.subr.mxu0 0.0
        %2493 = vmatpush1.msra.mxu0 0.0
        %2494 = vmatprep.subr.mxu0 0.0
        %2495 = vmatpush1.msra.mxu0 0.0
        %2496 = vmatprep.subr.mxu0 0.0
        %2497 = vmatpush1.msra.mxu0 0.0
        %2498 = vmatprep.subr.mxu0 0.0
        %2499 = vmatpush1.msra.mxu0 0.0
        %2500 = vmatprep.subr.mxu0 0.0
        %2501 = vmatpush1.msra.mxu0 0.0
        %2502 = vmatprep.mubr.f32.mxu0 0.0
        %2503 = vmatmul.mubr.f32.gmra.mrb[0].mxu0 %v2106
        %v2504 = vpop.f32.mrb[0].mxu0
        %v2505 = vadd.f32 0.0, %v2504
        %v2506 = vpop.f32.mrb[0].mxu0
        %2507 = vdwg.mxu0
        %2508 = vmatprep.subr.mxu0 0.0
        %2509 = vmatpush1.msra.mxu0 %v1915
        %2510 = vmatprep.subr.mxu0 0.0
        %2511 = vmatpush1.msra.mxu0 %v1916
        %2512 = vmatprep.subr.mxu0 0.0
        %2513 = vmatpush1.msra.mxu0 %v1917
        %2514 = vmatprep.subr.mxu0 0.0
        %2515 = vmatpush1.msra.mxu0 %v1918
        %2516 = vmatprep.subr.mxu0 0.0
        %2517 = vmatpush1.msra.mxu0 %v1919
        %2518 = vmatprep.subr.mxu0 0.0
        %2519 = vmatpush1.msra.mxu0 %v1920
        %2520 = vmatprep.subr.mxu0 0.0
        %2521 = vmatpush1.msra.mxu0 %v1921
        %2522 = vmatprep.subr.mxu0 0.0
        %2523 = vmatpush1.msra.mxu0 %v1922
        %2524 = vmatprep.subr.mxu0 0.0
        %2525 = vmatpush1.msra.mxu0 %v1923
        %2526 = vmatprep.subr.mxu0 0.0
        %2527 = vmatpush1.msra.mxu0 %v1924
        %2528 = vmatprep.subr.mxu0 0.0
        %2529 = vmatpush1.msra.mxu0 %v1925
        %2530 = vmatprep.subr.mxu0 0.0
        %2531 = vmatpush1.msra.mxu0 %v1926
        %2532 = vmatprep.subr.mxu0 0.0
        %2533 = vmatpush1.msra.mxu0 %v1927
        %2534 = vmatprep.subr.mxu0 0.0
        %2535 = vmatpush1.msra.mxu0 %v1928
        %2536 = vmatprep.subr.mxu0 0.0
        %2537 = vmatpush1.msra.mxu0 0.0
        %2538 = vmatprep.subr.mxu0 0.0
        %2539 = vmatpush1.msra.mxu0 0.0
        %2540 = vmatprep.subr.mxu0 0.0
        %2541 = vmatpush1.msra.mxu0 0.0
        %2542 = vmatprep.subr.mxu0 0.0
        %2543 = vmatpush1.msra.mxu0 0.0
        %2544 = vmatprep.subr.mxu0 0.0
        %2545 = vmatpush1.msra.mxu0 0.0
        %2546 = vmatprep.subr.mxu0 0.0
        %2547 = vmatpush1.msra.mxu0 0.0
        %2548 = vmatprep.subr.mxu0 0.0
        %2549 = vmatpush1.msra.mxu0 0.0
        %2550 = vmatprep.subr.mxu0 0.0
        %2551 = vmatpush1.msra.mxu0 0.0
        %2552 = vmatprep.subr.mxu0 0.0
        %2553 = vmatpush1.msra.mxu0 0.0
        %2554 = vmatprep.subr.mxu0 0.0
        %2555 = vmatpush1.msra.mxu0 0.0
        %2556 = vmatprep.subr.mxu0 0.0
        %2557 = vmatpush1.msra.mxu0 0.0
        %2558 = vmatprep.subr.mxu0 0.0
        %2559 = vmatpush1.msra.mxu0 0.0
        %2560 = vmatprep.subr.mxu0 0.0
        %2561 = vmatpush1.msra.mxu0 0.0
        %2562 = vmatprep.subr.mxu0 0.0
        %2563 = vmatpush1.msra.mxu0 0.0
        %2564 = vmatprep.subr.mxu0 0.0
        %2565 = vmatpush1.msra.mxu0 0.0
        %2566 = vmatprep.subr.mxu0 0.0
        %2567 = vmatpush1.msra.mxu0 0.0
        %2568 = vmatprep.subr.mxu0 0.0
        %2569 = vmatpush1.msra.mxu0 0.0
        %2570 = vmatprep.subr.mxu0 0.0
        %2571 = vmatpush1.msra.mxu0 0.0
        %2572 = vmatprep.mubr.f32.mxu0 0.0
        %2573 = vmatmul.mubr.f32.gmra.mrb[0].mxu0 %v1945
        %v2574 = vpop.f32.mrb[0].mxu0
        %v2575 = vadd.f32 %v2505, %v2574
        %v2576 = vpop.f32.mrb[0].mxu0
        %2577 = vdwg.mxu0
        %v2579 = vsel %vm1906, %v2437, 0
        %2581 = vmatprep.subr.mxu0 0.0
        %2582 = vmatpush1.msra.mxu0 %v2091
        %2583 = vmatprep.subr.mxu0 0.0
        %2584 = vmatpush1.msra.mxu0 %v2092
        %2585 = vmatprep.subr.mxu0 0.0
        %2586 = vmatpush1.msra.mxu0 %v2093
        %2587 = vmatprep.subr.mxu0 0.0
        %2588 = vmatpush1.msra.mxu0 %v2094
        %2589 = vmatprep.subr.mxu0 0.0
        %2590 = vmatpush1.msra.mxu0 %v2095
        %2591 = vmatprep.subr.mxu0 0.0
        %2592 = vmatpush1.msra.mxu0 %v2096
        %2593 = vmatprep.subr.mxu0 0.0
        %2594 = vmatpush1.msra.mxu0 %v2097
        %2595 = vmatprep.subr.mxu0 0.0
        %2596 = vmatpush1.msra.mxu0 %v2098
        %2597 = vmatprep.subr.mxu0 0.0
        %2598 = vmatpush1.msra.mxu0 %v2099
        %2599 = vmatprep.subr.mxu0 0.0
        %2600 = vmatpush1.msra.mxu0 %v2100
        %2601 = vmatprep.subr.mxu0 0.0
        %2602 = vmatpush1.msra.mxu0 %v2101
        %2603 = vmatprep.subr.mxu0 0.0
        %2604 = vmatpush1.msra.mxu0 %v2102
        %2605 = vmatprep.subr.mxu0 0.0
        %2606 = vmatpush1.msra.mxu0 %v2103
        %2607 = vmatprep.subr.mxu0 0.0
        %2608 = vmatpush1.msra.mxu0 %v2104
        %2609 = vmatprep.subr.mxu0 0.0
        %2610 = vmatpush1.msra.mxu0 0.0
        %2611 = vmatprep.subr.mxu0 0.0
        %2612 = vmatpush1.msra.mxu0 0.0
        %2613 = vmatprep.subr.mxu0 0.0
        %2614 = vmatpush1.msra.mxu0 0.0
        %2615 = vmatprep.subr.mxu0 0.0
        %2616 = vmatpush1.msra.mxu0 0.0
        %2617 = vmatprep.subr.mxu0 0.0
        %2618 = vmatpush1.msra.mxu0 0.0
        %2619 = vmatprep.subr.mxu0 0.0
        %2620 = vmatpush1.msra.mxu0 0.0
        %2621 = vmatprep.subr.mxu0 0.0
        %2622 = vmatpush1.msra.mxu0 0.0
        %2623 = vmatprep.subr.mxu0 0.0
        %2624 = vmatpush1.msra.mxu0 0.0
        %2625 = vmatprep.subr.mxu0 0.0
        %2626 = vmatpush1.msra.mxu0 0.0
        %2627 = vmatprep.subr.mxu0 0.0
        %2628 = vmatpush1.msra.mxu0 0.0
        %2629 = vmatprep.subr.mxu0 0.0
        %2630 = vmatpush1.msra.mxu0 0.0
        %2631 = vmatprep.subr.mxu0 0.0
        %2632 = vmatpush1.msra.mxu0 0.0
        %2633 = vmatprep.subr.mxu0 0.0
        %2634 = vmatpush1.msra.mxu0 0.0
        %2635 = vmatprep.subr.mxu0 0.0
        %2636 = vmatpush1.msra.mxu0 0.0
        %2637 = vmatprep.subr.mxu0 0.0
        %2638 = vmatpush1.msra.mxu0 0.0
        %2639 = vmatprep.subr.mxu0 0.0
        %2640 = vmatpush1.msra.mxu0 0.0
        %2641 = vmatprep.subr.mxu0 0.0
        %2642 = vmatpush1.msra.mxu0 0.0
        %2643 = vmatprep.subr.mxu0 0.0
        %2644 = vmatpush1.msra.mxu0 0.0
        %2645 = vmatprep.mubr.f32.mxu0 0.0
        %2646 = vmatmul.mubr.f32.gmra.mrb[0].mxu0 %v2579
        %v2647 = vpop.f32.mrb[0].mxu0
        %v2648 = vadd.f32 0.0, %v2647
        %v2649 = vpop.f32.mrb[0].mxu0
        %2650 = vdwg.mxu0
        %v2651 = vadd.f32 %v2575, %v2648
        %v2652 = vmax.f32 %v2435, %v2651
        %2653 = vmatprep.subr.mxu0 0.0
        %2654 = vmatpush1.msra.mxu0 %v2195
        %2655 = vmatprep.subr.mxu0 0.0
        %2656 = vmatpush1.msra.mxu0 %v2196
        %2657 = vmatprep.subr.mxu0 0.0
        %2658 = vmatpush1.msra.mxu0 %v2197
        %2659 = vmatprep.subr.mxu0 0.0
        %2660 = vmatpush1.msra.mxu0 %v2198
        %2661 = vmatprep.subr.mxu0 0.0
        %2662 = vmatpush1.msra.mxu0 %v2199
        %2663 = vmatprep.subr.mxu0 0.0
        %2664 = vmatpush1.msra.mxu0 %v2200
        %2665 = vmatprep.subr.mxu0 0.0
        %2666 = vmatpush1.msra.mxu0 %v2201
        %2667 = vmatprep.subr.mxu0 0.0
        %2668 = vmatpush1.msra.mxu0 %v2202
        %2669 = vmatprep.subr.mxu0 0.0
        %2670 = vmatpush1.msra.mxu0 %v2203
        %2671 = vmatprep.subr.mxu0 0.0
        %2672 = vmatpush1.msra.mxu0 %v2204
        %2673 = vmatprep.subr.mxu0 0.0
        %2674 = vmatpush1.msra.mxu0 %v2205
        %2675 = vmatprep.subr.mxu0 0.0
        %2676 = vmatpush1.msra.mxu0 %v2206
        %2677 = vmatprep.subr.mxu0 0.0
        %2678 = vmatpush1.msra.mxu0 %v2207
        %2679 = vmatprep.subr.mxu0 0.0
        %2680 = vmatpush1.msra.mxu0 %v2208
        %2681 = vmatprep.subr.mxu0 0.0
        %2682 = vmatpush1.msra.mxu0 0.0
        %2683 = vmatprep.subr.mxu0 0.0
        %2684 = vmatpush1.msra.mxu0 0.0
        %2685 = vmatprep.subr.mxu0 0.0
        %2686 = vmatpush1.msra.mxu0 0.0
        %2687 = vmatprep.subr.mxu0 0.0
        %2688 = vmatpush1.msra.mxu0 0.0
        %2689 = vmatprep.subr.mxu0 0.0
        %2690 = vmatpush1.msra.mxu0 0.0
        %2691 = vmatprep.subr.mxu0 0.0
        %2692 = vmatpush1.msra.mxu0 0.0
        %2693 = vmatprep.subr.mxu0 0.0
        %2694 = vmatpush1.msra.mxu0 0.0
        %2695 = vmatprep.subr.mxu0 0.0
        %2696 = vmatpush1.msra.mxu0 0.0
        %2697 = vmatprep.subr.mxu0 0.0
        %2698 = vmatpush1.msra.mxu0 0.0
        %2699 = vmatprep.subr.mxu0 0.0
        %2700 = vmatpush1.msra.mxu0 0.0
        %2701 = vmatprep.subr.mxu0 0.0
        %2702 = vmatpush1.msra.mxu0 0.0
        %2703 = vmatprep.subr.mxu0 0.0
        %2704 = vmatpush1.msra.mxu0 0.0
        %2705 = vmatprep.subr.mxu0 0.0
        %2706 = vmatpush1.msra.mxu0 0.0
        %2707 = vmatprep.subr.mxu0 0.0
        %2708 = vmatpush1.msra.mxu0 0.0
        %2709 = vmatprep.subr.mxu0 0.0
        %2710 = vmatpush1.msra.mxu0 0.0
        %2711 = vmatprep.subr.mxu0 0.0
        %2712 = vmatpush1.msra.mxu0 0.0
        %2713 = vmatprep.subr.mxu0 0.0
        %2714 = vmatpush1.msra.mxu0 0.0
        %2715 = vmatprep.subr.mxu0 0.0
        %2716 = vmatpush1.msra.mxu0 0.0
        %2717 = vmatprep.mubr.f32.mxu0 0.0
        %2718 = vmatmul.mubr.f32.gmra.mrb[0].mxu0 %v2106
        %v2719 = vpop.f32.mrb[0].mxu0
        %v2720 = vadd.f32 0.0, %v2719
        %v2721 = vpop.f32.mrb[0].mxu0
        %2722 = vdwg.mxu0
        %2723 = vmatprep.subr.mxu0 0.0
        %2724 = vmatpush1.msra.mxu0 %v2180
        %2725 = vmatprep.subr.mxu0 0.0
        %2726 = vmatpush1.msra.mxu0 %v2181
        %2727 = vmatprep.subr.mxu0 0.0
        %2728 = vmatpush1.msra.mxu0 %v2182
        %2729 = vmatprep.subr.mxu0 0.0
        %2730 = vmatpush1.msra.mxu0 %v2183
        %2731 = vmatprep.subr.mxu0 0.0
        %2732 = vmatpush1.msra.mxu0 %v2184
        %2733 = vmatprep.subr.mxu0 0.0
        %2734 = vmatpush1.msra.mxu0 %v2185
        %2735 = vmatprep.subr.mxu0 0.0
        %2736 = vmatpush1.msra.mxu0 %v2186
        %2737 = vmatprep.subr.mxu0 0.0
        %2738 = vmatpush1.msra.mxu0 %v2187
        %2739 = vmatprep.subr.mxu0 0.0
        %2740 = vmatpush1.msra.mxu0 %v2188
        %2741 = vmatprep.subr.mxu0 0.0
        %2742 = vmatpush1.msra.mxu0 %v2189
        %2743 = vmatprep.subr.mxu0 0.0
        %2744 = vmatpush1.msra.mxu0 %v2190
        %2745 = vmatprep.subr.mxu0 0.0
        %2746 = vmatpush1.msra.mxu0 %v2191
        %2747 = vmatprep.subr.mxu0 0.0
        %2748 = vmatpush1.msra.mxu0 %v2192
        %2749 = vmatprep.subr.mxu0 0.0
        %2750 = vmatpush1.msra.mxu0 %v2193
        %2751 = vmatprep.subr.mxu0 0.0
        %2752 = vmatpush1.msra.mxu0 0.0
        %2753 = vmatprep.subr.mxu0 0.0
        %2754 = vmatpush1.msra.mxu0 0.0
        %2755 = vmatprep.subr.mxu0 0.0
        %2756 = vmatpush1.msra.mxu0 0.0
        %2757 = vmatprep.subr.mxu0 0.0
        %2758 = vmatpush1.msra.mxu0 0.0
        %2759 = vmatprep.subr.mxu0 0.0
        %2760 = vmatpush1.msra.mxu0 0.0
        %2761 = vmatprep.subr.mxu0 0.0
        %2762 = vmatpush1.msra.mxu0 0.0
        %2763 = vmatprep.subr.mxu0 0.0
        %2764 = vmatpush1.msra.mxu0 0.0
        %2765 = vmatprep.subr.mxu0 0.0
        %2766 = vmatpush1.msra.mxu0 0.0
        %2767 = vmatprep.subr.mxu0 0.0
        %2768 = vmatpush1.msra.mxu0 0.0
        %2769 = vmatprep.subr.mxu0 0.0
        %2770 = vmatpush1.msra.mxu0 0.0
        %2771 = vmatprep.subr.mxu0 0.0
        %2772 = vmatpush1.msra.mxu0 0.0
        %2773 = vmatprep.subr.mxu0 0.0
        %2774 = vmatpush1.msra.mxu0 0.0
        %2775 = vmatprep.subr.mxu0 0.0
        %2776 = vmatpush1.msra.mxu0 0.0
        %2777 = vmatprep.subr.mxu0 0.0
        %2778 = vmatpush1.msra.mxu0 0.0
        %2779 = vmatprep.subr.mxu0 0.0
        %2780 = vmatpush1.msra.mxu0 0.0
        %2781 = vmatprep.subr.mxu0 0.0
        %2782 = vmatpush1.msra.mxu0 0.0
        %2783 = vmatprep.subr.mxu0 0.0
        %2784 = vmatpush1.msra.mxu0 0.0
        %2785 = vmatprep.subr.mxu0 0.0
        %2786 = vmatpush1.msra.mxu0 0.0
        %2787 = vmatprep.mubr.f32.mxu0 0.0
        %2788 = vmatmul.mubr.f32.gmra.mrb[0].mxu0 %v1945
        %v2789 = vpop.f32.mrb[0].mxu0
        %v2790 = vadd.f32 %v2720, %v2789
        %v2791 = vpop.f32.mrb[0].mxu0
        %2792 = vdwg.mxu0
        %2793 = vmatprep.subr.mxu0 0.0
        %2794 = vmatpush1.msra.mxu0 %v2350
        %2795 = vmatprep.subr.mxu0 0.0
        %2796 = vmatpush1.msra.mxu0 %v2351
        %2797 = vmatprep.subr.mxu0 0.0
        %2798 = vmatpush1.msra.mxu0 %v2352
        %2799 = vmatprep.subr.mxu0 0.0
        %2800 = vmatpush1.msra.mxu0 %v2353
        %2801 = vmatprep.subr.mxu0 0.0
        %2802 = vmatpush1.msra.mxu0 %v2354
        %2803 = vmatprep.subr.mxu0 0.0
        %2804 = vmatpush1.msra.mxu0 %v2355
        %2805 = vmatprep.subr.mxu0 0.0
        %2806 = vmatpush1.msra.mxu0 %v2356
        %2807 = vmatprep.subr.mxu0 0.0
        %2808 = vmatpush1.msra.mxu0 %v2357
        %2809 = vmatprep.subr.mxu0 0.0
        %2810 = vmatpush1.msra.mxu0 %v2358
        %2811 = vmatprep.subr.mxu0 0.0
        %2812 = vmatpush1.msra.mxu0 %v2359
        %2813 = vmatprep.subr.mxu0 0.0
        %2814 = vmatpush1.msra.mxu0 %v2360
        %2815 = vmatprep.subr.mxu0 0.0
        %2816 = vmatpush1.msra.mxu0 %v2361
        %2817 = vmatprep.subr.mxu0 0.0
        %2818 = vmatpush1.msra.mxu0 %v2362
        %2819 = vmatprep.subr.mxu0 0.0
        %2820 = vmatpush1.msra.mxu0 %v2363
        %2821 = vmatprep.subr.mxu0 0.0
        %2822 = vmatpush1.msra.mxu0 0.0
        %2823 = vmatprep.subr.mxu0 0.0
        %2824 = vmatpush1.msra.mxu0 0.0
        %2825 = vmatprep.subr.mxu0 0.0
        %2826 = vmatpush1.msra.mxu0 0.0
        %2827 = vmatprep.subr.mxu0 0.0
        %2828 = vmatpush1.msra.mxu0 0.0
        %2829 = vmatprep.subr.mxu0 0.0
        %2830 = vmatpush1.msra.mxu0 0.0
        %2831 = vmatprep.subr.mxu0 0.0
        %2832 = vmatpush1.msra.mxu0 0.0
        %2833 = vmatprep.subr.mxu0 0.0
        %2834 = vmatpush1.msra.mxu0 0.0
        %2835 = vmatprep.subr.mxu0 0.0
        %2836 = vmatpush1.msra.mxu0 0.0
        %2837 = vmatprep.subr.mxu0 0.0
        %2838 = vmatpush1.msra.mxu0 0.0
        %2839 = vmatprep.subr.mxu0 0.0
        %2840 = vmatpush1.msra.mxu0 0.0
        %2841 = vmatprep.subr.mxu0 0.0
        %2842 = vmatpush1.msra.mxu0 0.0
        %2843 = vmatprep.subr.mxu0 0.0
        %2844 = vmatpush1.msra.mxu0 0.0
        %2845 = vmatprep.subr.mxu0 0.0
        %2846 = vmatpush1.msra.mxu0 0.0
        %2847 = vmatprep.subr.mxu0 0.0
        %2848 = vmatpush1.msra.mxu0 0.0
        %2849 = vmatprep.subr.mxu0 0.0
        %2850 = vmatpush1.msra.mxu0 0.0
        %2851 = vmatprep.subr.mxu0 0.0
        %2852 = vmatpush1.msra.mxu0 0.0
        %2853 = vmatprep.subr.mxu0 0.0
        %2854 = vmatpush1.msra.mxu0 0.0
        %2855 = vmatprep.subr.mxu0 0.0
        %2856 = vmatpush1.msra.mxu0 0.0
        %2857 = vmatprep.mubr.f32.mxu0 0.0
        %2858 = vmatmul.mubr.f32.gmra.mrb[0].mxu0 %v2579
        %v2859 = vpop.f32.mrb[0].mxu0
        %v2860 = vadd.f32 0.0, %v2859
        %v2861 = vpop.f32.mrb[0].mxu0
        %2862 = vdwg.mxu0
        %v2863 = vadd.f32 %v2790, %v2860
        %v2864 = vmax.f32 %v2652, %v2863
        %v2865 = vld [vmem:[%s6] sm:$0x1]
        %v2867 = vlaneseq
        %v2868 = vshrl.u32 %v2867, 7
        %v2869 = vsub.s32 0, %v2868
        %v2870 = vrot.slane %v2865, %v2869
        %v2872 = vadd.f32 %v2864, %v2870
        %vm2873 = vcmp.gt.f32.partialorder %v2872, 0.0
        %v2874 = vmul.f32 %v2872, 0.1
        %v2875 = vsel %vm2873, %v2872, %v2874
        %vm2876 = vcmask 783360
        %2877 = vst.msk [vmem:[#allocation4] sm:$0x3f] %vm2876, %v2875
        %v2878 = vld [vmem:[#allocation4] ss:$2 sm:$0x3]
        %s2879 = scalar_lea.vmem [#allocation4], 1
        %v2880 = vld [vmem:[%s2879] ss:$2 sm:$0x3]
        %s2881 = scalar_lea.vmem [#allocation4], 2
        %v2882 = vld [vmem:[%s2881] ss:$2 sm:$0x3]
        %v2883 = vld [vmem:[%s7] sm:$0xff]
        %v2884 = vld [vmem:[%s7 + $0x8] sm:$0xff]
        %v2885 = vld [vmem:[%s7 + $0x10] sm:$0xff]
        %v2886 = vld [vmem:[%s7 + $0x18] sm:$0xff]
        %v2887 = vld [vmem:[%s7 + $0x20] sm:$0xff]
        %v2888 = vld [vmem:[%s7 + $0x28] sm:$0xff]
        %v2889 = vld [vmem:[%s7 + $0x30] sm:$0xff]
        %v2890 = vld [vmem:[%s7 + $0x38] sm:$0xff]
        %v2891 = vld [vmem:[%s7 + $0x40] sm:$0xff]
        %v2892 = vld [vmem:[%s7 + $0x48] sm:$0xff]
        %v2893 = vld [vmem:[%s7 + $0x50] sm:$0xff]
        %v2894 = vld [vmem:[%s7 + $0x58] sm:$0xff]
        %s2895 = scalar_lea.vmem %s7, 96
        %v2896 = vld [vmem:[%s2895] sm:$0xff]
        %v2897 = vld [vmem:[%s2895 + $0x8] sm:$0xff]
        %v2898 = vld [vmem:[%s2895 + $0x10] sm:$0xff]
        %v2899 = vld [vmem:[%s2895 + $0x18] sm:$0xff]
        %v2900 = vld [vmem:[%s2895 + $0x20] sm:$0xff]
        %v2901 = vld [vmem:[%s2895 + $0x28] sm:$0xff]
        %v2902 = vld [vmem:[%s2895 + $0x30] sm:$0xff]
        %v2903 = vld [vmem:[%s2895 + $0x38] sm:$0xff]
        %v2904 = vld [vmem:[%s2895 + $0x40] sm:$0xff]
        %v2905 = vld [vmem:[%s2895 + $0x48] sm:$0xff]
        %v2906 = vld [vmem:[%s2895 + $0x50] sm:$0xff]
        %v2907 = vld [vmem:[%s2895 + $0x58] sm:$0xff]
        %vm2908 = vcmask 785408
        %v2910 = vsel %vm2908, %v2880, 0
        %2912 = vmatprep.subr.mxu0 0.0
        %2913 = vmatpush1.msra.mxu0 %v2896
        %2914 = vmatprep.subr.mxu0 0.0
        %2915 = vmatpush1.msra.mxu0 %v2897
        %2916 = vmatprep.subr.mxu0 0.0
        %2917 = vmatpush1.msra.mxu0 %v2898
        %2918 = vmatprep.subr.mxu0 0.0
        %2919 = vmatpush1.msra.mxu0 %v2899
        %2920 = vmatprep.subr.mxu0 0.0
        %2921 = vmatpush1.msra.mxu0 %v2900
        %2922 = vmatprep.subr.mxu0 0.0
        %2923 = vmatpush1.msra.mxu0 %v2901
        %2924 = vmatprep.subr.mxu0 0.0
        %2925 = vmatpush1.msra.mxu0 %v2902
        %2926 = vmatprep.subr.mxu0 0.0
        %2927 = vmatpush1.msra.mxu0 %v2903
        %2928 = vmatprep.subr.mxu0 0.0
        %2929 = vmatpush1.msra.mxu0 %v2904
        %2930 = vmatprep.subr.mxu0 0.0
        %2931 = vmatpush1.msra.mxu0 %v2905
        %2932 = vmatprep.subr.mxu0 0.0
        %2933 = vmatpush1.msra.mxu0 %v2906
        %2934 = vmatprep.subr.mxu0 0.0
        %2935 = vmatpush1.msra.mxu0 %v2907
        %2936 = vmatprep.subr.mxu0 0.0
        %2937 = vmatpush1.msra.mxu0 0.0
        %2938 = vmatprep.subr.mxu0 0.0
        %2939 = vmatpush1.msra.mxu0 0.0
        %2940 = vmatprep.subr.mxu0 0.0
        %2941 = vmatpush1.msra.mxu0 0.0
        %2942 = vmatprep.subr.mxu0 0.0
        %2943 = vmatpush1.msra.mxu0 0.0
        %2944 = vmatprep.subr.mxu0 0.0
        %2945 = vmatpush1.msra.mxu0 0.0
        %2946 = vmatprep.subr.mxu0 0.0
        %2947 = vmatpush1.msra.mxu0 0.0
        %2948 = vmatprep.subr.mxu0 0.0
        %2949 = vmatpush1.msra.mxu0 0.0
        %2950 = vmatprep.subr.mxu0 0.0
        %2951 = vmatpush1.msra.mxu0 0.0
        %2952 = vmatprep.subr.mxu0 0.0
        %2953 = vmatpush1.msra.mxu0 0.0
        %2954 = vmatprep.subr.mxu0 0.0
        %2955 = vmatpush1.msra.mxu0 0.0
        %2956 = vmatprep.subr.mxu0 0.0
        %2957 = vmatpush1.msra.mxu0 0.0
        %2958 = vmatprep.subr.mxu0 0.0
        %2959 = vmatpush1.msra.mxu0 0.0
        %2960 = vmatprep.subr.mxu0 0.0
        %2961 = vmatpush1.msra.mxu0 0.0
        %2962 = vmatprep.subr.mxu0 0.0
        %2963 = vmatpush1.msra.mxu0 0.0
        %2964 = vmatprep.subr.mxu0 0.0
        %2965 = vmatpush1.msra.mxu0 0.0
        %2966 = vmatprep.subr.mxu0 0.0
        %2967 = vmatpush1.msra.mxu0 0.0
        %2968 = vmatprep.subr.mxu0 0.0
        %2969 = vmatpush1.msra.mxu0 0.0
        %2970 = vmatprep.subr.mxu0 0.0
        %2971 = vmatpush1.msra.mxu0 0.0
        %2972 = vmatprep.subr.mxu0 0.0
        %2973 = vmatpush1.msra.mxu0 0.0
        %2974 = vmatprep.subr.mxu0 0.0
        %2975 = vmatpush1.msra.mxu0 0.0
        %2976 = vmatprep.mubr.f32.mxu0 0.0
        %2977 = vmatmul.mubr.f32.gmra.mrb[0].mxu0 %v2910
        %v2978 = vpop.f32.mrb[0].mxu0
        %v2979 = vadd.f32 0.0, %v2978
        %v2980 = vpop.f32.mrb[0].mxu0
        %2981 = vdwg.mxu0
        %v2983 = vsel %vm2908, %v2878, 0
        %2985 = vmatprep.subr.mxu0 0.0
        %2986 = vmatpush1.msra.mxu0 %v2883
        %2987 = vmatprep.subr.mxu0 0.0
        %2988 = vmatpush1.msra.mxu0 %v2884
        %2989 = vmatprep.subr.mxu0 0.0
        %2990 = vmatpush1.msra.mxu0 %v2885
        %2991 = vmatprep.subr.mxu0 0.0
        %2992 = vmatpush1.msra.mxu0 %v2886
        %2993 = vmatprep.subr.mxu0 0.0
        %2994 = vmatpush1.msra.mxu0 %v2887
        %2995 = vmatprep.subr.mxu0 0.0
        %2996 = vmatpush1.msra.mxu0 %v2888
        %2997 = vmatprep.subr.mxu0 0.0
        %2998 = vmatpush1.msra.mxu0 %v2889
        %2999 = vmatprep.subr.mxu0 0.0
        %3000 = vmatpush1.msra.mxu0 %v2890
        %3001 = vmatprep.subr.mxu0 0.0
        %3002 = vmatpush1.msra.mxu0 %v2891
        %3003 = vmatprep.subr.mxu0 0.0
        %3004 = vmatpush1.msra.mxu0 %v2892
        %3005 = vmatprep.subr.mxu0 0.0
        %3006 = vmatpush1.msra.mxu0 %v2893
        %3007 = vmatprep.subr.mxu0 0.0
        %3008 = vmatpush1.msra.mxu0 %v2894
        %3009 = vmatprep.subr.mxu0 0.0
        %3010 = vmatpush1.msra.mxu0 0.0
        %3011 = vmatprep.subr.mxu0 0.0
        %3012 = vmatpush1.msra.mxu0 0.0
        %3013 = vmatprep.subr.mxu0 0.0
        %3014 = vmatpush1.msra.mxu0 0.0
        %3015 = vmatprep.subr.mxu0 0.0
        %3016 = vmatpush1.msra.mxu0 0.0
        %3017 = vmatprep.subr.mxu0 0.0
        %3018 = vmatpush1.msra.mxu0 0.0
        %3019 = vmatprep.subr.mxu0 0.0
        %3020 = vmatpush1.msra.mxu0 0.0
        %3021 = vmatprep.subr.mxu0 0.0
        %3022 = vmatpush1.msra.mxu0 0.0
        %3023 = vmatprep.subr.mxu0 0.0
        %3024 = vmatpush1.msra.mxu0 0.0
        %3025 = vmatprep.subr.mxu0 0.0
        %3026 = vmatpush1.msra.mxu0 0.0
        %3027 = vmatprep.subr.mxu0 0.0
        %3028 = vmatpush1.msra.mxu0 0.0
        %3029 = vmatprep.subr.mxu0 0.0
        %3030 = vmatpush1.msra.mxu0 0.0
        %3031 = vmatprep.subr.mxu0 0.0
        %3032 = vmatpush1.msra.mxu0 0.0
        %3033 = vmatprep.subr.mxu0 0.0
        %3034 = vmatpush1.msra.mxu0 0.0
        %3035 = vmatprep.subr.mxu0 0.0
        %3036 = vmatpush1.msra.mxu0 0.0
        %3037 = vmatprep.subr.mxu0 0.0
        %3038 = vmatpush1.msra.mxu0 0.0
        %3039 = vmatprep.subr.mxu0 0.0
        %3040 = vmatpush1.msra.mxu0 0.0
        %3041 = vmatprep.subr.mxu0 0.0
        %3042 = vmatpush1.msra.mxu0 0.0
        %3043 = vmatprep.subr.mxu0 0.0
        %3044 = vmatpush1.msra.mxu0 0.0
        %3045 = vmatprep.subr.mxu0 0.0
        %3046 = vmatpush1.msra.mxu0 0.0
        %3047 = vmatprep.subr.mxu0 0.0
        %3048 = vmatpush1.msra.mxu0 0.0
        %3049 = vmatprep.mubr.f32.mxu0 0.0
        %3050 = vmatmul.mubr.f32.gmra.mrb[0].mxu0 %v2983
        %v3051 = vpop.f32.mrb[0].mxu0
        %v3052 = vadd.f32 %v2979, %v3051
        %v3053 = vpop.f32.mrb[0].mxu0
        %3054 = vdwg.mxu0
        %s3055 = scalar_lea.vmem %s7, 192
        %v3056 = vld [vmem:[%s3055] sm:$0xff]
        %v3057 = vld [vmem:[%s3055 + $0x8] sm:$0xff]
        %v3058 = vld [vmem:[%s3055 + $0x10] sm:$0xff]
        %v3059 = vld [vmem:[%s3055 + $0x18] sm:$0xff]
        %v3060 = vld [vmem:[%s3055 + $0x20] sm:$0xff]
        %v3061 = vld [vmem:[%s3055 + $0x28] sm:$0xff]
        %v3062 = vld [vmem:[%s3055 + $0x30] sm:$0xff]
        %v3063 = vld [vmem:[%s3055 + $0x38] sm:$0xff]
        %v3064 = vld [vmem:[%s3055 + $0x40] sm:$0xff]
        %v3065 = vld [vmem:[%s3055 + $0x48] sm:$0xff]
        %v3066 = vld [vmem:[%s3055 + $0x50] sm:$0xff]
        %v3067 = vld [vmem:[%s3055 + $0x58] sm:$0xff]
        %v3069 = vsel %vm2908, %v2882, 0
        %3071 = vmatprep.subr.mxu0 0.0
        %3072 = vmatpush1.msra.mxu0 %v3056
        %3073 = vmatprep.subr.mxu0 0.0
        %3074 = vmatpush1.msra.mxu0 %v3057
        %3075 = vmatprep.subr.mxu0 0.0
        %3076 = vmatpush1.msra.mxu0 %v3058
        %3077 = vmatprep.subr.mxu0 0.0
        %3078 = vmatpush1.msra.mxu0 %v3059
        %3079 = vmatprep.subr.mxu0 0.0
        %3080 = vmatpush1.msra.mxu0 %v3060
        %3081 = vmatprep.subr.mxu0 0.0
        %3082 = vmatpush1.msra.mxu0 %v3061
        %3083 = vmatprep.subr.mxu0 0.0
        %3084 = vmatpush1.msra.mxu0 %v3062
        %3085 = vmatprep.subr.mxu0 0.0
        %3086 = vmatpush1.msra.mxu0 %v3063
        %3087 = vmatprep.subr.mxu0 0.0
        %3088 = vmatpush1.msra.mxu0 %v3064
        %3089 = vmatprep.subr.mxu0 0.0
        %3090 = vmatpush1.msra.mxu0 %v3065
        %3091 = vmatprep.subr.mxu0 0.0
        %3092 = vmatpush1.msra.mxu0 %v3066
        %3093 = vmatprep.subr.mxu0 0.0
        %3094 = vmatpush1.msra.mxu0 %v3067
        %3095 = vmatprep.subr.mxu0 0.0
        %3096 = vmatpush1.msra.mxu0 0.0
        %3097 = vmatprep.subr.mxu0 0.0
        %3098 = vmatpush1.msra.mxu0 0.0
        %3099 = vmatprep.subr.mxu0 0.0
        %3100 = vmatpush1.msra.mxu0 0.0
        %3101 = vmatprep.subr.mxu0 0.0
        %3102 = vmatpush1.msra.mxu0 0.0
        %3103 = vmatprep.subr.mxu0 0.0
        %3104 = vmatpush1.msra.mxu0 0.0
        %3105 = vmatprep.subr.mxu0 0.0
        %3106 = vmatpush1.msra.mxu0 0.0
        %3107 = vmatprep.subr.mxu0 0.0
        %3108 = vmatpush1.msra.mxu0 0.0
        %3109 = vmatprep.subr.mxu0 0.0
        %3110 = vmatpush1.msra.mxu0 0.0
        %3111 = vmatprep.subr.mxu0 0.0
        %3112 = vmatpush1.msra.mxu0 0.0
        %3113 = vmatprep.subr.mxu0 0.0
        %3114 = vmatpush1.msra.mxu0 0.0
        %3115 = vmatprep.subr.mxu0 0.0
        %3116 = vmatpush1.msra.mxu0 0.0
        %3117 = vmatprep.subr.mxu0 0.0
        %3118 = vmatpush1.msra.mxu0 0.0
        %3119 = vmatprep.subr.mxu0 0.0
        %3120 = vmatpush1.msra.mxu0 0.0
        %3121 = vmatprep.subr.mxu0 0.0
        %3122 = vmatpush1.msra.mxu0 0.0
        %3123 = vmatprep.subr.mxu0 0.0
        %3124 = vmatpush1.msra.mxu0 0.0
        %3125 = vmatprep.subr.mxu0 0.0
        %3126 = vmatpush1.msra.mxu0 0.0
        %3127 = vmatprep.subr.mxu0 0.0
        %3128 = vmatpush1.msra.mxu0 0.0
        %3129 = vmatprep.subr.mxu0 0.0
        %3130 = vmatpush1.msra.mxu0 0.0
        %3131 = vmatprep.subr.mxu0 0.0
        %3132 = vmatpush1.msra.mxu0 0.0
        %3133 = vmatprep.subr.mxu0 0.0
        %3134 = vmatpush1.msra.mxu0 0.0
        %3135 = vmatprep.mubr.f32.mxu0 0.0
        %3136 = vmatmul.mubr.f32.gmra.mrb[0].mxu0 %v3069
        %v3137 = vpop.f32.mrb[0].mxu0
        %v3138 = vadd.f32 0.0, %v3137
        %v3139 = vpop.f32.mrb[0].mxu0
        %3140 = vdwg.mxu0
        %v3141 = vadd.f32 %v3052, %v3138
        %s3142 = scalar_lea.vmem %s7, 288
        %v3143 = vld [vmem:[%s3142] sm:$0xff]
        %v3144 = vld [vmem:[%s3142 + $0x8] sm:$0xff]
        %v3145 = vld [vmem:[%s3142 + $0x10] sm:$0xff]
        %v3146 = vld [vmem:[%s3142 + $0x18] sm:$0xff]
        %v3147 = vld [vmem:[%s3142 + $0x20] sm:$0xff]
        %v3148 = vld [vmem:[%s3142 + $0x28] sm:$0xff]
        %v3149 = vld [vmem:[%s3142 + $0x30] sm:$0xff]
        %v3150 = vld [vmem:[%s3142 + $0x38] sm:$0xff]
        %v3151 = vld [vmem:[%s3142 + $0x40] sm:$0xff]
        %v3152 = vld [vmem:[%s3142 + $0x48] sm:$0xff]
        %v3153 = vld [vmem:[%s3142 + $0x50] sm:$0xff]
        %v3154 = vld [vmem:[%s3142 + $0x58] sm:$0xff]
        %s3155 = scalar_lea.vmem %s7, 384
        %v3156 = vld [vmem:[%s3155] sm:$0xff]
        %v3157 = vld [vmem:[%s3155 + $0x8] sm:$0xff]
        %v3158 = vld [vmem:[%s3155 + $0x10] sm:$0xff]
        %v3159 = vld [vmem:[%s3155 + $0x18] sm:$0xff]
        %v3160 = vld [vmem:[%s3155 + $0x20] sm:$0xff]
        %v3161 = vld [vmem:[%s3155 + $0x28] sm:$0xff]
        %v3162 = vld [vmem:[%s3155 + $0x30] sm:$0xff]
        %v3163 = vld [vmem:[%s3155 + $0x38] sm:$0xff]
        %v3164 = vld [vmem:[%s3155 + $0x40] sm:$0xff]
        %v3165 = vld [vmem:[%s3155 + $0x48] sm:$0xff]
        %v3166 = vld [vmem:[%s3155 + $0x50] sm:$0xff]
        %v3167 = vld [vmem:[%s3155 + $0x58] sm:$0xff]
        %3168 = vmatprep.subr.mxu0 0.0
        %3169 = vmatpush1.msra.mxu0 %v3156
        %3170 = vmatprep.subr.mxu0 0.0
        %3171 = vmatpush1.msra.mxu0 %v3157
        %3172 = vmatprep.subr.mxu0 0.0
        %3173 = vmatpush1.msra.mxu0 %v3158
        %3174 = vmatprep.subr.mxu0 0.0
        %3175 = vmatpush1.msra.mxu0 %v3159
        %3176 = vmatprep.subr.mxu0 0.0
        %3177 = vmatpush1.msra.mxu0 %v3160
        %3178 = vmatprep.subr.mxu0 0.0
        %3179 = vmatpush1.msra.mxu0 %v3161
        %3180 = vmatprep.subr.mxu0 0.0
        %3181 = vmatpush1.msra.mxu0 %v3162
        %3182 = vmatprep.subr.mxu0 0.0
        %3183 = vmatpush1.msra.mxu0 %v3163
        %3184 = vmatprep.subr.mxu0 0.0
        %3185 = vmatpush1.msra.mxu0 %v3164
        %3186 = vmatprep.subr.mxu0 0.0
        %3187 = vmatpush1.msra.mxu0 %v3165
        %3188 = vmatprep.subr.mxu0 0.0
        %3189 = vmatpush1.msra.mxu0 %v3166
        %3190 = vmatprep.subr.mxu0 0.0
        %3191 = vmatpush1.msra.mxu0 %v3167
        %3192 = vmatprep.subr.mxu0 0.0
        %3193 = vmatpush1.msra.mxu0 0.0
        %3194 = vmatprep.subr.mxu0 0.0
        %3195 = vmatpush1.msra.mxu0 0.0
        %3196 = vmatprep.subr.mxu0 0.0
        %3197 = vmatpush1.msra.mxu0 0.0
        %3198 = vmatprep.subr.mxu0 0.0
        %3199 = vmatpush1.msra.mxu0 0.0
        %3200 = vmatprep.subr.mxu0 0.0
        %3201 = vmatpush1.msra.mxu0 0.0
        %3202 = vmatprep.subr.mxu0 0.0
        %3203 = vmatpush1.msra.mxu0 0.0
        %3204 = vmatprep.subr.mxu0 0.0
        %3205 = vmatpush1.msra.mxu0 0.0
        %3206 = vmatprep.subr.mxu0 0.0
        %3207 = vmatpush1.msra.mxu0 0.0
        %3208 = vmatprep.subr.mxu0 0.0
        %3209 = vmatpush1.msra.mxu0 0.0
        %3210 = vmatprep.subr.mxu0 0.0
        %3211 = vmatpush1.msra.mxu0 0.0
        %3212 = vmatprep.subr.mxu0 0.0
        %3213 = vmatpush1.msra.mxu0 0.0
        %3214 = vmatprep.subr.mxu0 0.0
        %3215 = vmatpush1.msra.mxu0 0.0
        %3216 = vmatprep.subr.mxu0 0.0
        %3217 = vmatpush1.msra.mxu0 0.0
        %3218 = vmatprep.subr.mxu0 0.0
        %3219 = vmatpush1.msra.mxu0 0.0
        %3220 = vmatprep.subr.mxu0 0.0
        %3221 = vmatpush1.msra.mxu0 0.0
        %3222 = vmatprep.subr.mxu0 0.0
        %3223 = vmatpush1.msra.mxu0 0.0
        %3224 = vmatprep.subr.mxu0 0.0
        %3225 = vmatpush1.msra.mxu0 0.0
        %3226 = vmatprep.subr.mxu0 0.0
        %3227 = vmatpush1.msra.mxu0 0.0
        %3228 = vmatprep.subr.mxu0 0.0
        %3229 = vmatpush1.msra.mxu0 0.0
        %3230 = vmatprep.subr.mxu0 0.0
        %3231 = vmatpush1.msra.mxu0 0.0
        %3232 = vmatprep.mubr.f32.mxu0 0.0
        %3233 = vmatmul.mubr.f32.gmra.mrb[0].mxu0 %v2910
        %v3234 = vpop.f32.mrb[0].mxu0
        %v3235 = vadd.f32 0.0, %v3234
        %v3236 = vpop.f32.mrb[0].mxu0
        %3237 = vdwg.mxu0
        %3238 = vmatprep.subr.mxu0 0.0
        %3239 = vmatpush1.msra.mxu0 %v3143
        %3240 = vmatprep.subr.mxu0 0.0
        %3241 = vmatpush1.msra.mxu0 %v3144
        %3242 = vmatprep.subr.mxu0 0.0
        %3243 = vmatpush1.msra.mxu0 %v3145
        %3244 = vmatprep.subr.mxu0 0.0
        %3245 = vmatpush1.msra.mxu0 %v3146
        %3246 = vmatprep.subr.mxu0 0.0
        %3247 = vmatpush1.msra.mxu0 %v3147
        %3248 = vmatprep.subr.mxu0 0.0
        %3249 = vmatpush1.msra.mxu0 %v3148
        %3250 = vmatprep.subr.mxu0 0.0
        %3251 = vmatpush1.msra.mxu0 %v3149
        %3252 = vmatprep.subr.mxu0 0.0
        %3253 = vmatpush1.msra.mxu0 %v3150
        %3254 = vmatprep.subr.mxu0 0.0
        %3255 = vmatpush1.msra.mxu0 %v3151
        %3256 = vmatprep.subr.mxu0 0.0
        %3257 = vmatpush1.msra.mxu0 %v3152
        %3258 = vmatprep.subr.mxu0 0.0
        %3259 = vmatpush1.msra.mxu0 %v3153
        %3260 = vmatprep.subr.mxu0 0.0
        %3261 = vmatpush1.msra.mxu0 %v3154
        %3262 = vmatprep.subr.mxu0 0.0
        %3263 = vmatpush1.msra.mxu0 0.0
        %3264 = vmatprep.subr.mxu0 0.0
        %3265 = vmatpush1.msra.mxu0 0.0
        %3266 = vmatprep.subr.mxu0 0.0
        %3267 = vmatpush1.msra.mxu0 0.0
        %3268 = vmatprep.subr.mxu0 0.0
        %3269 = vmatpush1.msra.mxu0 0.0
        %3270 = vmatprep.subr.mxu0 0.0
        %3271 = vmatpush1.msra.mxu0 0.0
        %3272 = vmatprep.subr.mxu0 0.0
        %3273 = vmatpush1.msra.mxu0 0.0
        %3274 = vmatprep.subr.mxu0 0.0
        %3275 = vmatpush1.msra.mxu0 0.0
        %3276 = vmatprep.subr.mxu0 0.0
        %3277 = vmatpush1.msra.mxu0 0.0
        %3278 = vmatprep.subr.mxu0 0.0
        %3279 = vmatpush1.msra.mxu0 0.0
        %3280 = vmatprep.subr.mxu0 0.0
        %3281 = vmatpush1.msra.mxu0 0.0
        %3282 = vmatprep.subr.mxu0 0.0
        %3283 = vmatpush1.msra.mxu0 0.0
        %3284 = vmatprep.subr.mxu0 0.0
        %3285 = vmatpush1.msra.mxu0 0.0
        %3286 = vmatprep.subr.mxu0 0.0
        %3287 = vmatpush1.msra.mxu0 0.0
        %3288 = vmatprep.subr.mxu0 0.0
        %3289 = vmatpush1.msra.mxu0 0.0
        %3290 = vmatprep.subr.mxu0 0.0
        %3291 = vmatpush1.msra.mxu0 0.0
        %3292 = vmatprep.subr.mxu0 0.0
        %3293 = vmatpush1.msra.mxu0 0.0
        %3294 = vmatprep.subr.mxu0 0.0
        %3295 = vmatpush1.msra.mxu0 0.0
        %3296 = vmatprep.subr.mxu0 0.0
        %3297 = vmatpush1.msra.mxu0 0.0
        %3298 = vmatprep.subr.mxu0 0.0
        %3299 = vmatpush1.msra.mxu0 0.0
        %3300 = vmatprep.subr.mxu0 0.0
        %3301 = vmatpush1.msra.mxu0 0.0
        %3302 = vmatprep.mubr.f32.mxu0 0.0
        %3303 = vmatmul.mubr.f32.gmra.mrb[0].mxu0 %v2983
        %v3304 = vpop.f32.mrb[0].mxu0
        %v3305 = vadd.f32 %v3235, %v3304
        %v3306 = vpop.f32.mrb[0].mxu0
        %3307 = vdwg.mxu0
        %s3308 = scalar_lea.vmem %s7, 480
        %v3309 = vld [vmem:[%s3308] sm:$0xff]
        %v3310 = vld [vmem:[%s3308 + $0x8] sm:$0xff]
        %v3311 = vld [vmem:[%s3308 + $0x10] sm:$0xff]
        %v3312 = vld [vmem:[%s3308 + $0x18] sm:$0xff]
        %v3313 = vld [vmem:[%s3308 + $0x20] sm:$0xff]
        %v3314 = vld [vmem:[%s3308 + $0x28] sm:$0xff]
        %v3315 = vld [vmem:[%s3308 + $0x30] sm:$0xff]
        %v3316 = vld [vmem:[%s3308 + $0x38] sm:$0xff]
        %v3317 = vld [vmem:[%s3308 + $0x40] sm:$0xff]
        %v3318 = vld [vmem:[%s3308 + $0x48] sm:$0xff]
        %v3319 = vld [vmem:[%s3308 + $0x50] sm:$0xff]
        %v3320 = vld [vmem:[%s3308 + $0x58] sm:$0xff]
        %3321 = vmatprep.subr.mxu0 0.0
        %3322 = vmatpush1.msra.mxu0 %v3309
        %3323 = vmatprep.subr.mxu0 0.0
        %3324 = vmatpush1.msra.mxu0 %v3310
        %3325 = vmatprep.subr.mxu0 0.0
        %3326 = vmatpush1.msra.mxu0 %v3311
        %3327 = vmatprep.subr.mxu0 0.0
        %3328 = vmatpush1.msra.mxu0 %v3312
        %3329 = vmatprep.subr.mxu0 0.0
        %3330 = vmatpush1.msra.mxu0 %v3313
        %3331 = vmatprep.subr.mxu0 0.0
        %3332 = vmatpush1.msra.mxu0 %v3314
        %3333 = vmatprep.subr.mxu0 0.0
        %3334 = vmatpush1.msra.mxu0 %v3315
        %3335 = vmatprep.subr.mxu0 0.0
        %3336 = vmatpush1.msra.mxu0 %v3316
        %3337 = vmatprep.subr.mxu0 0.0
        %3338 = vmatpush1.msra.mxu0 %v3317
        %3339 = vmatprep.subr.mxu0 0.0
        %3340 = vmatpush1.msra.mxu0 %v3318
        %3341 = vmatprep.subr.mxu0 0.0
        %3342 = vmatpush1.msra.mxu0 %v3319
        %3343 = vmatprep.subr.mxu0 0.0
        %3344 = vmatpush1.msra.mxu0 %v3320
        %3345 = vmatprep.subr.mxu0 0.0
        %3346 = vmatpush1.msra.mxu0 0.0
        %3347 = vmatprep.subr.mxu0 0.0
        %3348 = vmatpush1.msra.mxu0 0.0
        %3349 = vmatprep.subr.mxu0 0.0
        %3350 = vmatpush1.msra.mxu0 0.0
        %3351 = vmatprep.subr.mxu0 0.0
        %3352 = vmatpush1.msra.mxu0 0.0
        %3353 = vmatprep.subr.mxu0 0.0
        %3354 = vmatpush1.msra.mxu0 0.0
        %3355 = vmatprep.subr.mxu0 0.0
        %3356 = vmatpush1.msra.mxu0 0.0
        %3357 = vmatprep.subr.mxu0 0.0
        %3358 = vmatpush1.msra.mxu0 0.0
        %3359 = vmatprep.subr.mxu0 0.0
        %3360 = vmatpush1.msra.mxu0 0.0
        %3361 = vmatprep.subr.mxu0 0.0
        %3362 = vmatpush1.msra.mxu0 0.0
        %3363 = vmatprep.subr.mxu0 0.0
        %3364 = vmatpush1.msra.mxu0 0.0
        %3365 = vmatprep.subr.mxu0 0.0
        %3366 = vmatpush1.msra.mxu0 0.0
        %3367 = vmatprep.subr.mxu0 0.0
        %3368 = vmatpush1.msra.mxu0 0.0
        %3369 = vmatprep.subr.mxu0 0.0
        %3370 = vmatpush1.msra.mxu0 0.0
        %3371 = vmatprep.subr.mxu0 0.0
        %3372 = vmatpush1.msra.mxu0 0.0
        %3373 = vmatprep.subr.mxu0 0.0
        %3374 = vmatpush1.msra.mxu0 0.0
        %3375 = vmatprep.subr.mxu0 0.0
        %3376 = vmatpush1.msra.mxu0 0.0
        %3377 = vmatprep.subr.mxu0 0.0
        %3378 = vmatpush1.msra.mxu0 0.0
        %3379 = vmatprep.subr.mxu0 0.0
        %3380 = vmatpush1.msra.mxu0 0.0
        %3381 = vmatprep.subr.mxu0 0.0
        %3382 = vmatpush1.msra.mxu0 0.0
        %3383 = vmatprep.subr.mxu0 0.0
        %3384 = vmatpush1.msra.mxu0 0.0
        %3385 = vmatprep.mubr.f32.mxu0 0.0
        %3386 = vmatmul.mubr.f32.gmra.mrb[0].mxu0 %v3069
        %v3387 = vpop.f32.mrb[0].mxu0
        %v3388 = vadd.f32 0.0, %v3387
        %v3389 = vpop.f32.mrb[0].mxu0
        %3390 = vdwg.mxu0
        %v3391 = vadd.f32 %v3305, %v3388
        %v3392 = vmax.f32 %v3141, %v3391
        %s3393 = scalar_lea.vmem [#allocation4], 3
        %v3394 = vld [vmem:[%s3393] ss:$2 sm:$0x3]
        %3395 = vmatprep.subr.mxu0 0.0
        %3396 = vmatpush1.msra.mxu0 %v2896
        %3397 = vmatprep.subr.mxu0 0.0
        %3398 = vmatpush1.msra.mxu0 %v2897
        %3399 = vmatprep.subr.mxu0 0.0
        %3400 = vmatpush1.msra.mxu0 %v2898
        %3401 = vmatprep.subr.mxu0 0.0
        %3402 = vmatpush1.msra.mxu0 %v2899
        %3403 = vmatprep.subr.mxu0 0.0
        %3404 = vmatpush1.msra.mxu0 %v2900
        %3405 = vmatprep.subr.mxu0 0.0
        %3406 = vmatpush1.msra.mxu0 %v2901
        %3407 = vmatprep.subr.mxu0 0.0
        %3408 = vmatpush1.msra.mxu0 %v2902
        %3409 = vmatprep.subr.mxu0 0.0
        %3410 = vmatpush1.msra.mxu0 %v2903
        %3411 = vmatprep.subr.mxu0 0.0
        %3412 = vmatpush1.msra.mxu0 %v2904
        %3413 = vmatprep.subr.mxu0 0.0
        %3414 = vmatpush1.msra.mxu0 %v2905
        %3415 = vmatprep.subr.mxu0 0.0
        %3416 = vmatpush1.msra.mxu0 %v2906
        %3417 = vmatprep.subr.mxu0 0.0
        %3418 = vmatpush1.msra.mxu0 %v2907
        %3419 = vmatprep.subr.mxu0 0.0
        %3420 = vmatpush1.msra.mxu0 0.0
        %3421 = vmatprep.subr.mxu0 0.0
        %3422 = vmatpush1.msra.mxu0 0.0
        %3423 = vmatprep.subr.mxu0 0.0
        %3424 = vmatpush1.msra.mxu0 0.0
        %3425 = vmatprep.subr.mxu0 0.0
        %3426 = vmatpush1.msra.mxu0 0.0
        %3427 = vmatprep.subr.mxu0 0.0
        %3428 = vmatpush1.msra.mxu0 0.0
        %3429 = vmatprep.subr.mxu0 0.0
        %3430 = vmatpush1.msra.mxu0 0.0
        %3431 = vmatprep.subr.mxu0 0.0
        %3432 = vmatpush1.msra.mxu0 0.0
        %3433 = vmatprep.subr.mxu0 0.0
        %3434 = vmatpush1.msra.mxu0 0.0
        %3435 = vmatprep.subr.mxu0 0.0
        %3436 = vmatpush1.msra.mxu0 0.0
        %3437 = vmatprep.subr.mxu0 0.0
        %3438 = vmatpush1.msra.mxu0 0.0
        %3439 = vmatprep.subr.mxu0 0.0
        %3440 = vmatpush1.msra.mxu0 0.0
        %3441 = vmatprep.subr.mxu0 0.0
        %3442 = vmatpush1.msra.mxu0 0.0
        %3443 = vmatprep.subr.mxu0 0.0
        %3444 = vmatpush1.msra.mxu0 0.0
        %3445 = vmatprep.subr.mxu0 0.0
        %3446 = vmatpush1.msra.mxu0 0.0
        %3447 = vmatprep.subr.mxu0 0.0
        %3448 = vmatpush1.msra.mxu0 0.0
        %3449 = vmatprep.subr.mxu0 0.0
        %3450 = vmatpush1.msra.mxu0 0.0
        %3451 = vmatprep.subr.mxu0 0.0
        %3452 = vmatpush1.msra.mxu0 0.0
        %3453 = vmatprep.subr.mxu0 0.0
        %3454 = vmatpush1.msra.mxu0 0.0
        %3455 = vmatprep.subr.mxu0 0.0
        %3456 = vmatpush1.msra.mxu0 0.0
        %3457 = vmatprep.subr.mxu0 0.0
        %3458 = vmatpush1.msra.mxu0 0.0
        %3459 = vmatprep.mubr.f32.mxu0 0.0
        %3460 = vmatmul.mubr.f32.gmra.mrb[0].mxu0 %v3069
        %v3461 = vpop.f32.mrb[0].mxu0
        %v3462 = vadd.f32 0.0, %v3461
        %v3463 = vpop.f32.mrb[0].mxu0
        %3464 = vdwg.mxu0
        %3465 = vmatprep.subr.mxu0 0.0
        %3466 = vmatpush1.msra.mxu0 %v2883
        %3467 = vmatprep.subr.mxu0 0.0
        %3468 = vmatpush1.msra.mxu0 %v2884
        %3469 = vmatprep.subr.mxu0 0.0
        %3470 = vmatpush1.msra.mxu0 %v2885
        %3471 = vmatprep.subr.mxu0 0.0
        %3472 = vmatpush1.msra.mxu0 %v2886
        %3473 = vmatprep.subr.mxu0 0.0
        %3474 = vmatpush1.msra.mxu0 %v2887
        %3475 = vmatprep.subr.mxu0 0.0
        %3476 = vmatpush1.msra.mxu0 %v2888
        %3477 = vmatprep.subr.mxu0 0.0
        %3478 = vmatpush1.msra.mxu0 %v2889
        %3479 = vmatprep.subr.mxu0 0.0
        %3480 = vmatpush1.msra.mxu0 %v2890
        %3481 = vmatprep.subr.mxu0 0.0
        %3482 = vmatpush1.msra.mxu0 %v2891
        %3483 = vmatprep.subr.mxu0 0.0
        %3484 = vmatpush1.msra.mxu0 %v2892
        %3485 = vmatprep.subr.mxu0 0.0
        %3486 = vmatpush1.msra.mxu0 %v2893
        %3487 = vmatprep.subr.mxu0 0.0
        %3488 = vmatpush1.msra.mxu0 %v2894
        %3489 = vmatprep.subr.mxu0 0.0
        %3490 = vmatpush1.msra.mxu0 0.0
        %3491 = vmatprep.subr.mxu0 0.0
        %3492 = vmatpush1.msra.mxu0 0.0
        %3493 = vmatprep.subr.mxu0 0.0
        %3494 = vmatpush1.msra.mxu0 0.0
        %3495 = vmatprep.subr.mxu0 0.0
        %3496 = vmatpush1.msra.mxu0 0.0
        %3497 = vmatprep.subr.mxu0 0.0
        %3498 = vmatpush1.msra.mxu0 0.0
        %3499 = vmatprep.subr.mxu0 0.0
        %3500 = vmatpush1.msra.mxu0 0.0
        %3501 = vmatprep.subr.mxu0 0.0
        %3502 = vmatpush1.msra.mxu0 0.0
        %3503 = vmatprep.subr.mxu0 0.0
        %3504 = vmatpush1.msra.mxu0 0.0
        %3505 = vmatprep.subr.mxu0 0.0
        %3506 = vmatpush1.msra.mxu0 0.0
        %3507 = vmatprep.subr.mxu0 0.0
        %3508 = vmatpush1.msra.mxu0 0.0
        %3509 = vmatprep.subr.mxu0 0.0
        %3510 = vmatpush1.msra.mxu0 0.0
        %3511 = vmatprep.subr.mxu0 0.0
        %3512 = vmatpush1.msra.mxu0 0.0
        %3513 = vmatprep.subr.mxu0 0.0
        %3514 = vmatpush1.msra.mxu0 0.0
        %3515 = vmatprep.subr.mxu0 0.0
        %3516 = vmatpush1.msra.mxu0 0.0
        %3517 = vmatprep.subr.mxu0 0.0
        %3518 = vmatpush1.msra.mxu0 0.0
        %3519 = vmatprep.subr.mxu0 0.0
        %3520 = vmatpush1.msra.mxu0 0.0
        %3521 = vmatprep.subr.mxu0 0.0
        %3522 = vmatpush1.msra.mxu0 0.0
        %3523 = vmatprep.subr.mxu0 0.0
        %3524 = vmatpush1.msra.mxu0 0.0
        %3525 = vmatprep.subr.mxu0 0.0
        %3526 = vmatpush1.msra.mxu0 0.0
        %3527 = vmatprep.subr.mxu0 0.0
        %3528 = vmatpush1.msra.mxu0 0.0
        %3529 = vmatprep.mubr.f32.mxu0 0.0
        %3530 = vmatmul.mubr.f32.gmra.mrb[0].mxu0 %v2910
        %v3531 = vpop.f32.mrb[0].mxu0
        %v3532 = vadd.f32 %v3462, %v3531
        %v3533 = vpop.f32.mrb[0].mxu0
        %3534 = vdwg.mxu0
        %v3536 = vsel %vm2908, %v3394, 0
        %3538 = vmatprep.subr.mxu0 0.0
        %3539 = vmatpush1.msra.mxu0 %v3056
        %3540 = vmatprep.subr.mxu0 0.0
        %3541 = vmatpush1.msra.mxu0 %v3057
        %3542 = vmatprep.subr.mxu0 0.0
        %3543 = vmatpush1.msra.mxu0 %v3058
        %3544 = vmatprep.subr.mxu0 0.0
        %3545 = vmatpush1.msra.mxu0 %v3059
        %3546 = vmatprep.subr.mxu0 0.0
        %3547 = vmatpush1.msra.mxu0 %v3060
        %3548 = vmatprep.subr.mxu0 0.0
        %3549 = vmatpush1.msra.mxu0 %v3061
        %3550 = vmatprep.subr.mxu0 0.0
        %3551 = vmatpush1.msra.mxu0 %v3062
        %3552 = vmatprep.subr.mxu0 0.0
        %3553 = vmatpush1.msra.mxu0 %v3063
        %3554 = vmatprep.subr.mxu0 0.0
        %3555 = vmatpush1.msra.mxu0 %v3064
        %3556 = vmatprep.subr.mxu0 0.0
        %3557 = vmatpush1.msra.mxu0 %v3065
        %3558 = vmatprep.subr.mxu0 0.0
        %3559 = vmatpush1.msra.mxu0 %v3066
        %3560 = vmatprep.subr.mxu0 0.0
        %3561 = vmatpush1.msra.mxu0 %v3067
        %3562 = vmatprep.subr.mxu0 0.0
        %3563 = vmatpush1.msra.mxu0 0.0
        %3564 = vmatprep.subr.mxu0 0.0
        %3565 = vmatpush1.msra.mxu0 0.0
        %3566 = vmatprep.subr.mxu0 0.0
        %3567 = vmatpush1.msra.mxu0 0.0
        %3568 = vmatprep.subr.mxu0 0.0
        %3569 = vmatpush1.msra.mxu0 0.0
        %3570 = vmatprep.subr.mxu0 0.0
        %3571 = vmatpush1.msra.mxu0 0.0
        %3572 = vmatprep.subr.mxu0 0.0
        %3573 = vmatpush1.msra.mxu0 0.0
        %3574 = vmatprep.subr.mxu0 0.0
        %3575 = vmatpush1.msra.mxu0 0.0
        %3576 = vmatprep.subr.mxu0 0.0
        %3577 = vmatpush1.msra.mxu0 0.0
        %3578 = vmatprep.subr.mxu0 0.0
        %3579 = vmatpush1.msra.mxu0 0.0
        %3580 = vmatprep.subr.mxu0 0.0
        %3581 = vmatpush1.msra.mxu0 0.0
        %3582 = vmatprep.subr.mxu0 0.0
        %3583 = vmatpush1.msra.mxu0 0.0
        %3584 = vmatprep.subr.mxu0 0.0
        %3585 = vmatpush1.msra.mxu0 0.0
        %3586 = vmatprep.subr.mxu0 0.0
        %3587 = vmatpush1.msra.mxu0 0.0
        %3588 = vmatprep.subr.mxu0 0.0
        %3589 = vmatpush1.msra.mxu0 0.0
        %3590 = vmatprep.subr.mxu0 0.0
        %3591 = vmatpush1.msra.mxu0 0.0
        %3592 = vmatprep.subr.mxu0 0.0
        %3593 = vmatpush1.msra.mxu0 0.0
        %3594 = vmatprep.subr.mxu0 0.0
        %3595 = vmatpush1.msra.mxu0 0.0
        %3596 = vmatprep.subr.mxu0 0.0
        %3597 = vmatpush1.msra.mxu0 0.0
        %3598 = vmatprep.subr.mxu0 0.0
        %3599 = vmatpush1.msra.mxu0 0.0
        %3600 = vmatprep.subr.mxu0 0.0
        %3601 = vmatpush1.msra.mxu0 0.0
        %3602 = vmatprep.mubr.f32.mxu0 0.0
        %3603 = vmatmul.mubr.f32.gmra.mrb[0].mxu0 %v3536
        %v3604 = vpop.f32.mrb[0].mxu0
        %v3605 = vadd.f32 0.0, %v3604
        %v3606 = vpop.f32.mrb[0].mxu0
        %3607 = vdwg.mxu0
        %v3608 = vadd.f32 %v3532, %v3605
        %v3609 = vmax.f32 %v3392, %v3608
        %3610 = vmatprep.subr.mxu0 0.0
        %3611 = vmatpush1.msra.mxu0 %v3156
        %3612 = vmatprep.subr.mxu0 0.0
        %3613 = vmatpush1.msra.mxu0 %v3157
        %3614 = vmatprep.subr.mxu0 0.0
        %3615 = vmatpush1.msra.mxu0 %v3158
        %3616 = vmatprep.subr.mxu0 0.0
        %3617 = vmatpush1.msra.mxu0 %v3159
        %3618 = vmatprep.subr.mxu0 0.0
        %3619 = vmatpush1.msra.mxu0 %v3160
        %3620 = vmatprep.subr.mxu0 0.0
        %3621 = vmatpush1.msra.mxu0 %v3161
        %3622 = vmatprep.subr.mxu0 0.0
        %3623 = vmatpush1.msra.mxu0 %v3162
        %3624 = vmatprep.subr.mxu0 0.0
        %3625 = vmatpush1.msra.mxu0 %v3163
        %3626 = vmatprep.subr.mxu0 0.0
        %3627 = vmatpush1.msra.mxu0 %v3164
        %3628 = vmatprep.subr.mxu0 0.0
        %3629 = vmatpush1.msra.mxu0 %v3165
        %3630 = vmatprep.subr.mxu0 0.0
        %3631 = vmatpush1.msra.mxu0 %v3166
        %3632 = vmatprep.subr.mxu0 0.0
        %3633 = vmatpush1.msra.mxu0 %v3167
        %3634 = vmatprep.subr.mxu0 0.0
        %3635 = vmatpush1.msra.mxu0 0.0
        %3636 = vmatprep.subr.mxu0 0.0
        %3637 = vmatpush1.msra.mxu0 0.0
        %3638 = vmatprep.subr.mxu0 0.0
        %3639 = vmatpush1.msra.mxu0 0.0
        %3640 = vmatprep.subr.mxu0 0.0
        %3641 = vmatpush1.msra.mxu0 0.0
        %3642 = vmatprep.subr.mxu0 0.0
        %3643 = vmatpush1.msra.mxu0 0.0
        %3644 = vmatprep.subr.mxu0 0.0
        %3645 = vmatpush1.msra.mxu0 0.0
        %3646 = vmatprep.subr.mxu0 0.0
        %3647 = vmatpush1.msra.mxu0 0.0
        %3648 = vmatprep.subr.mxu0 0.0
        %3649 = vmatpush1.msra.mxu0 0.0
        %3650 = vmatprep.subr.mxu0 0.0
        %3651 = vmatpush1.msra.mxu0 0.0
        %3652 = vmatprep.subr.mxu0 0.0
        %3653 = vmatpush1.msra.mxu0 0.0
        %3654 = vmatprep.subr.mxu0 0.0
        %3655 = vmatpush1.msra.mxu0 0.0
        %3656 = vmatprep.subr.mxu0 0.0
        %3657 = vmatpush1.msra.mxu0 0.0
        %3658 = vmatprep.subr.mxu0 0.0
        %3659 = vmatpush1.msra.mxu0 0.0
        %3660 = vmatprep.subr.mxu0 0.0
        %3661 = vmatpush1.msra.mxu0 0.0
        %3662 = vmatprep.subr.mxu0 0.0
        %3663 = vmatpush1.msra.mxu0 0.0
        %3664 = vmatprep.subr.mxu0 0.0
        %3665 = vmatpush1.msra.mxu0 0.0
        %3666 = vmatprep.subr.mxu0 0.0
        %3667 = vmatpush1.msra.mxu0 0.0
        %3668 = vmatprep.subr.mxu0 0.0
        %3669 = vmatpush1.msra.mxu0 0.0
        %3670 = vmatprep.subr.mxu0 0.0
        %3671 = vmatpush1.msra.mxu0 0.0
        %3672 = vmatprep.subr.mxu0 0.0
        %3673 = vmatpush1.msra.mxu0 0.0
        %3674 = vmatprep.mubr.f32.mxu0 0.0
        %3675 = vmatmul.mubr.f32.gmra.mrb[0].mxu0 %v3069
        %v3676 = vpop.f32.mrb[0].mxu0
        %v3677 = vadd.f32 0.0, %v3676
        %v3678 = vpop.f32.mrb[0].mxu0
        %3679 = vdwg.mxu0
        %3680 = vmatprep.subr.mxu0 0.0
        %3681 = vmatpush1.msra.mxu0 %v3143
        %3682 = vmatprep.subr.mxu0 0.0
        %3683 = vmatpush1.msra.mxu0 %v3144
        %3684 = vmatprep.subr.mxu0 0.0
        %3685 = vmatpush1.msra.mxu0 %v3145
        %3686 = vmatprep.subr.mxu0 0.0
        %3687 = vmatpush1.msra.mxu0 %v3146
        %3688 = vmatprep.subr.mxu0 0.0
        %3689 = vmatpush1.msra.mxu0 %v3147
        %3690 = vmatprep.subr.mxu0 0.0
        %3691 = vmatpush1.msra.mxu0 %v3148
        %3692 = vmatprep.subr.mxu0 0.0
        %3693 = vmatpush1.msra.mxu0 %v3149
        %3694 = vmatprep.subr.mxu0 0.0
        %3695 = vmatpush1.msra.mxu0 %v3150
        %3696 = vmatprep.subr.mxu0 0.0
        %3697 = vmatpush1.msra.mxu0 %v3151
        %3698 = vmatprep.subr.mxu0 0.0
        %3699 = vmatpush1.msra.mxu0 %v3152
        %3700 = vmatprep.subr.mxu0 0.0
        %3701 = vmatpush1.msra.mxu0 %v3153
        %3702 = vmatprep.subr.mxu0 0.0
        %3703 = vmatpush1.msra.mxu0 %v3154
        %3704 = vmatprep.subr.mxu0 0.0
        %3705 = vmatpush1.msra.mxu0 0.0
        %3706 = vmatprep.subr.mxu0 0.0
        %3707 = vmatpush1.msra.mxu0 0.0
        %3708 = vmatprep.subr.mxu0 0.0
        %3709 = vmatpush1.msra.mxu0 0.0
        %3710 = vmatprep.subr.mxu0 0.0
        %3711 = vmatpush1.msra.mxu0 0.0
        %3712 = vmatprep.subr.mxu0 0.0
        %3713 = vmatpush1.msra.mxu0 0.0
        %3714 = vmatprep.subr.mxu0 0.0
        %3715 = vmatpush1.msra.mxu0 0.0
        %3716 = vmatprep.subr.mxu0 0.0
        %3717 = vmatpush1.msra.mxu0 0.0
        %3718 = vmatprep.subr.mxu0 0.0
        %3719 = vmatpush1.msra.mxu0 0.0
        %3720 = vmatprep.subr.mxu0 0.0
        %3721 = vmatpush1.msra.mxu0 0.0
        %3722 = vmatprep.subr.mxu0 0.0
        %3723 = vmatpush1.msra.mxu0 0.0
        %3724 = vmatprep.subr.mxu0 0.0
        %3725 = vmatpush1.msra.mxu0 0.0
        %3726 = vmatprep.subr.mxu0 0.0
        %3727 = vmatpush1.msra.mxu0 0.0
        %3728 = vmatprep.subr.mxu0 0.0
        %3729 = vmatpush1.msra.mxu0 0.0
        %3730 = vmatprep.subr.mxu0 0.0
        %3731 = vmatpush1.msra.mxu0 0.0
        %3732 = vmatprep.subr.mxu0 0.0
        %3733 = vmatpush1.msra.mxu0 0.0
        %3734 = vmatprep.subr.mxu0 0.0
        %3735 = vmatpush1.msra.mxu0 0.0
        %3736 = vmatprep.subr.mxu0 0.0
        %3737 = vmatpush1.msra.mxu0 0.0
        %3738 = vmatprep.subr.mxu0 0.0
        %3739 = vmatpush1.msra.mxu0 0.0
        %3740 = vmatprep.subr.mxu0 0.0
        %3741 = vmatpush1.msra.mxu0 0.0
        %3742 = vmatprep.subr.mxu0 0.0
        %3743 = vmatpush1.msra.mxu0 0.0
        %3744 = vmatprep.mubr.f32.mxu0 0.0
        %3745 = vmatmul.mubr.f32.gmra.mrb[0].mxu0 %v2910
        %v3746 = vpop.f32.mrb[0].mxu0
        %v3747 = vadd.f32 %v3677, %v3746
        %v3748 = vpop.f32.mrb[0].mxu0
        %3749 = vdwg.mxu0
        %3750 = vmatprep.subr.mxu0 0.0
        %3751 = vmatpush1.msra.mxu0 %v3309
        %3752 = vmatprep.subr.mxu0 0.0
        %3753 = vmatpush1.msra.mxu0 %v3310
        %3754 = vmatprep.subr.mxu0 0.0
        %3755 = vmatpush1.msra.mxu0 %v3311
        %3756 = vmatprep.subr.mxu0 0.0
        %3757 = vmatpush1.msra.mxu0 %v3312
        %3758 = vmatprep.subr.mxu0 0.0
        %3759 = vmatpush1.msra.mxu0 %v3313
        %3760 = vmatprep.subr.mxu0 0.0
        %3761 = vmatpush1.msra.mxu0 %v3314
        %3762 = vmatprep.subr.mxu0 0.0
        %3763 = vmatpush1.msra.mxu0 %v3315
        %3764 = vmatprep.subr.mxu0 0.0
        %3765 = vmatpush1.msra.mxu0 %v3316
        %3766 = vmatprep.subr.mxu0 0.0
        %3767 = vmatpush1.msra.mxu0 %v3317
        %3768 = vmatprep.subr.mxu0 0.0
        %3769 = vmatpush1.msra.mxu0 %v3318
        %3770 = vmatprep.subr.mxu0 0.0
        %3771 = vmatpush1.msra.mxu0 %v3319
        %3772 = vmatprep.subr.mxu0 0.0
        %3773 = vmatpush1.msra.mxu0 %v3320
        %3774 = vmatprep.subr.mxu0 0.0
        %3775 = vmatpush1.msra.mxu0 0.0
        %3776 = vmatprep.subr.mxu0 0.0
        %3777 = vmatpush1.msra.mxu0 0.0
        %3778 = vmatprep.subr.mxu0 0.0
        %3779 = vmatpush1.msra.mxu0 0.0
        %3780 = vmatprep.subr.mxu0 0.0
        %3781 = vmatpush1.msra.mxu0 0.0
        %3782 = vmatprep.subr.mxu0 0.0
        %3783 = vmatpush1.msra.mxu0 0.0
        %3784 = vmatprep.subr.mxu0 0.0
        %3785 = vmatpush1.msra.mxu0 0.0
        %3786 = vmatprep.subr.mxu0 0.0
        %3787 = vmatpush1.msra.mxu0 0.0
        %3788 = vmatprep.subr.mxu0 0.0
        %3789 = vmatpush1.msra.mxu0 0.0
        %3790 = vmatprep.subr.mxu0 0.0
        %3791 = vmatpush1.msra.mxu0 0.0
        %3792 = vmatprep.subr.mxu0 0.0
        %3793 = vmatpush1.msra.mxu0 0.0
        %3794 = vmatprep.subr.mxu0 0.0
        %3795 = vmatpush1.msra.mxu0 0.0
        %3796 = vmatprep.subr.mxu0 0.0
        %3797 = vmatpush1.msra.mxu0 0.0
        %3798 = vmatprep.subr.mxu0 0.0
        %3799 = vmatpush1.msra.mxu0 0.0
        %3800 = vmatprep.subr.mxu0 0.0
        %3801 = vmatpush1.msra.mxu0 0.0
        %3802 = vmatprep.subr.mxu0 0.0
        %3803 = vmatpush1.msra.mxu0 0.0
        %3804 = vmatprep.subr.mxu0 0.0
        %3805 = vmatpush1.msra.mxu0 0.0
        %3806 = vmatprep.subr.mxu0 0.0
        %3807 = vmatpush1.msra.mxu0 0.0
        %3808 = vmatprep.subr.mxu0 0.0
        %3809 = vmatpush1.msra.mxu0 0.0
        %3810 = vmatprep.subr.mxu0 0.0
        %3811 = vmatpush1.msra.mxu0 0.0
        %3812 = vmatprep.subr.mxu0 0.0
        %3813 = vmatpush1.msra.mxu0 0.0
        %3814 = vmatprep.mubr.f32.mxu0 0.0
        %3815 = vmatmul.mubr.f32.gmra.mrb[0].mxu0 %v3536
        %v3816 = vpop.f32.mrb[0].mxu0
        %v3817 = vadd.f32 0.0, %v3816
        %v3818 = vpop.f32.mrb[0].mxu0
        %3819 = vdwg.mxu0
        %v3820 = vadd.f32 %v3747, %v3817
        %v3821 = vmax.f32 %v3609, %v3820
        %v3822 = vld [vmem:[%s8] sm:$0x1]
        %v3824 = vlaneseq
        %v3825 = vshrl.u32 %v3824, 7
        %v3826 = vsub.s32 0, %v3825
        %v3827 = vrot.slane %v3822, %v3826
        %v3829 = vadd.f32 %v3821, %v3827
        %vm3830 = vcmp.gt.f32.partialorder %v3829, 0.0
        %v3831 = vmul.f32 %v3829, 0.1
        %v3832 = vsel %vm3830, %v3829, %v3831
        %v3833 = vld [vmem:[%s9] sm:$0xff]
        %v3834 = vld [vmem:[%s9 + $0x8] sm:$0xff]
        %v3835 = vld [vmem:[%s9 + $0x10] sm:$0xff]
        %v3836 = vld [vmem:[%s9 + $0x18] sm:$0xff]
        %v3837 = vld [vmem:[%s9 + $0x20] sm:$0xff]
        %v3838 = vld [vmem:[%s9 + $0x28] sm:$0xff]
        %v3839 = vld [vmem:[%s9 + $0x30] sm:$0xff]
        %v3840 = vld [vmem:[%s9 + $0x38] sm:$0xff]
        %s3841 = scalar_lea.vmem %s9, 64
        %v3842 = vld [vmem:[%s3841] sm:$0xff]
        %v3843 = vld [vmem:[%s3841 + $0x8] sm:$0xff]
        %v3844 = vld [vmem:[%s3841 + $0x10] sm:$0xff]
        %v3845 = vld [vmem:[%s3841 + $0x18] sm:$0xff]
        %v3846 = vld [vmem:[%s3841 + $0x20] sm:$0xff]
        %v3847 = vld [vmem:[%s3841 + $0x28] sm:$0xff]
        %v3848 = vld [vmem:[%s3841 + $0x30] sm:$0xff]
        %v3849 = vld [vmem:[%s3841 + $0x38] sm:$0xff]
        %v3851 = vrot.slane %v3832, 1
        %vm3852 = vcmask 523264
        %v3853 = vsel %vm3852, %v3851, 0
        %3855 = vmatprep.subr.mxu0 0.0
        %3856 = vmatpush1.msra.mxu0 %v3842
        %3857 = vmatprep.subr.mxu0 0.0
        %3858 = vmatpush1.msra.mxu0 %v3843
        %3859 = vmatprep.subr.mxu0 0.0
        %3860 = vmatpush1.msra.mxu0 %v3844
        %3861 = vmatprep.subr.mxu0 0.0
        %3862 = vmatpush1.msra.mxu0 %v3845
        %3863 = vmatprep.subr.mxu0 0.0
        %3864 = vmatpush1.msra.mxu0 %v3846
        %3865 = vmatprep.subr.mxu0 0.0
        %3866 = vmatpush1.msra.mxu0 %v3847
        %3867 = vmatprep.subr.mxu0 0.0
        %3868 = vmatpush1.msra.mxu0 %v3848
        %3869 = vmatprep.subr.mxu0 0.0
        %3870 = vmatpush1.msra.mxu0 %v3849
        %3871 = vmatprep.subr.mxu0 0.0
        %3872 = vmatpush1.msra.mxu0 0.0
        %3873 = vmatprep.subr.mxu0 0.0
        %3874 = vmatpush1.msra.mxu0 0.0
        %3875 = vmatprep.subr.mxu0 0.0
        %3876 = vmatpush1.msra.mxu0 0.0
        %3877 = vmatprep.subr.mxu0 0.0
        %3878 = vmatpush1.msra.mxu0 0.0
        %3879 = vmatprep.subr.mxu0 0.0
        %3880 = vmatpush1.msra.mxu0 0.0
        %3881 = vmatprep.subr.mxu0 0.0
        %3882 = vmatpush1.msra.mxu0 0.0
        %3883 = vmatprep.subr.mxu0 0.0
        %3884 = vmatpush1.msra.mxu0 0.0
        %3885 = vmatprep.subr.mxu0 0.0
        %3886 = vmatpush1.msra.mxu0 0.0
        %3887 = vmatprep.subr.mxu0 0.0
        %3888 = vmatpush1.msra.mxu0 0.0
        %3889 = vmatprep.subr.mxu0 0.0
        %3890 = vmatpush1.msra.mxu0 0.0
        %3891 = vmatprep.subr.mxu0 0.0
        %3892 = vmatpush1.msra.mxu0 0.0
        %3893 = vmatprep.subr.mxu0 0.0
        %3894 = vmatpush1.msra.mxu0 0.0
        %3895 = vmatprep.subr.mxu0 0.0
        %3896 = vmatpush1.msra.mxu0 0.0
        %3897 = vmatprep.subr.mxu0 0.0
        %3898 = vmatpush1.msra.mxu0 0.0
        %3899 = vmatprep.subr.mxu0 0.0
        %3900 = vmatpush1.msra.mxu0 0.0
        %3901 = vmatprep.subr.mxu0 0.0
        %3902 = vmatpush1.msra.mxu0 0.0
        %3903 = vmatprep.subr.mxu0 0.0
        %3904 = vmatpush1.msra.mxu0 0.0
        %3905 = vmatprep.subr.mxu0 0.0
        %3906 = vmatpush1.msra.mxu0 0.0
        %3907 = vmatprep.subr.mxu0 0.0
        %3908 = vmatpush1.msra.mxu0 0.0
        %3909 = vmatprep.subr.mxu0 0.0
        %3910 = vmatpush1.msra.mxu0 0.0
        %3911 = vmatprep.subr.mxu0 0.0
        %3912 = vmatpush1.msra.mxu0 0.0
        %3913 = vmatprep.subr.mxu0 0.0
        %3914 = vmatpush1.msra.mxu0 0.0
        %3915 = vmatprep.subr.mxu0 0.0
        %3916 = vmatpush1.msra.mxu0 0.0
        %3917 = vmatprep.subr.mxu0 0.0
        %3918 = vmatpush1.msra.mxu0 0.0
        %3919 = vmatprep.mubr.f32.mxu0 0.0
        %3920 = vmatmul.mubr.f32.gmra.mrb[0].mxu0 %v3853
        %v3921 = vpop.f32.mrb[0].mxu0
        %v3922 = vadd.f32 0.0, %v3921
        %v3923 = vpop.f32.mrb[0].mxu0
        %3924 = vdwg.mxu0
        %v3925 = vsel %vm3852, %v3832, 0
        %3927 = vmatprep.subr.mxu0 0.0
        %3928 = vmatpush1.msra.mxu0 %v3833
        %3929 = vmatprep.subr.mxu0 0.0
        %3930 = vmatpush1.msra.mxu0 %v3834
        %3931 = vmatprep.subr.mxu0 0.0
        %3932 = vmatpush1.msra.mxu0 %v3835
        %3933 = vmatprep.subr.mxu0 0.0
        %3934 = vmatpush1.msra.mxu0 %v3836
        %3935 = vmatprep.subr.mxu0 0.0
        %3936 = vmatpush1.msra.mxu0 %v3837
        %3937 = vmatprep.subr.mxu0 0.0
        %3938 = vmatpush1.msra.mxu0 %v3838
        %3939 = vmatprep.subr.mxu0 0.0
        %3940 = vmatpush1.msra.mxu0 %v3839
        %3941 = vmatprep.subr.mxu0 0.0
        %3942 = vmatpush1.msra.mxu0 %v3840
        %3943 = vmatprep.subr.mxu0 0.0
        %3944 = vmatpush1.msra.mxu0 0.0
        %3945 = vmatprep.subr.mxu0 0.0
        %3946 = vmatpush1.msra.mxu0 0.0
        %3947 = vmatprep.subr.mxu0 0.0
        %3948 = vmatpush1.msra.mxu0 0.0
        %3949 = vmatprep.subr.mxu0 0.0
        %3950 = vmatpush1.msra.mxu0 0.0
        %3951 = vmatprep.subr.mxu0 0.0
        %3952 = vmatpush1.msra.mxu0 0.0
        %3953 = vmatprep.subr.mxu0 0.0
        %3954 = vmatpush1.msra.mxu0 0.0
        %3955 = vmatprep.subr.mxu0 0.0
        %3956 = vmatpush1.msra.mxu0 0.0
        %3957 = vmatprep.subr.mxu0 0.0
        %3958 = vmatpush1.msra.mxu0 0.0
        %3959 = vmatprep.subr.mxu0 0.0
        %3960 = vmatpush1.msra.mxu0 0.0
        %3961 = vmatprep.subr.mxu0 0.0
        %3962 = vmatpush1.msra.mxu0 0.0
        %3963 = vmatprep.subr.mxu0 0.0
        %3964 = vmatpush1.msra.mxu0 0.0
        %3965 = vmatprep.subr.mxu0 0.0
        %3966 = vmatpush1.msra.mxu0 0.0
        %3967 = vmatprep.subr.mxu0 0.0
        %3968 = vmatpush1.msra.mxu0 0.0
        %3969 = vmatprep.subr.mxu0 0.0
        %3970 = vmatpush1.msra.mxu0 0.0
        %3971 = vmatprep.subr.mxu0 0.0
        %3972 = vmatpush1.msra.mxu0 0.0
        %3973 = vmatprep.subr.mxu0 0.0
        %3974 = vmatpush1.msra.mxu0 0.0
        %3975 = vmatprep.subr.mxu0 0.0
        %3976 = vmatpush1.msra.mxu0 0.0
        %3977 = vmatprep.subr.mxu0 0.0
        %3978 = vmatpush1.msra.mxu0 0.0
        %3979 = vmatprep.subr.mxu0 0.0
        %3980 = vmatpush1.msra.mxu0 0.0
        %3981 = vmatprep.subr.mxu0 0.0
        %3982 = vmatpush1.msra.mxu0 0.0
        %3983 = vmatprep.subr.mxu0 0.0
        %3984 = vmatpush1.msra.mxu0 0.0
        %3985 = vmatprep.subr.mxu0 0.0
        %3986 = vmatpush1.msra.mxu0 0.0
        %3987 = vmatprep.subr.mxu0 0.0
        %3988 = vmatpush1.msra.mxu0 0.0
        %3989 = vmatprep.subr.mxu0 0.0
        %3990 = vmatpush1.msra.mxu0 0.0
        %3991 = vmatprep.mubr.f32.mxu0 0.0
        %3992 = vmatmul.mubr.f32.gmra.mrb[0].mxu0 %v3925
        %v3993 = vpop.f32.mrb[0].mxu0
        %v3994 = vadd.f32 %v3922, %v3993
        %v3995 = vpop.f32.mrb[0].mxu0
        %3996 = vdwg.mxu0
        %v3997 = vld [vmem:[%s10] sm:$0x1]
        %v3998 = vadd.f32 %v3994, %v3997
        %vm3999 = vcmp.gt.f32.partialorder %v3998, 0.0
        %v4000 = vmul.f32 %v3998, 0.1
        %v4001 = vsel %vm3999, %v3998, %v4000
        %v4002 = vld [vmem:[%s11] sm:$0xff]
        %v4003 = vld [vmem:[%s11 + $0x8] sm:$0xff]
        %v4004 = vld [vmem:[%s11 + $0x10] sm:$0xff]
        %v4005 = vld [vmem:[%s11 + $0x18] sm:$0xff]
        %v4006 = vld [vmem:[%s11 + $0x20] sm:$0xff]
        %v4007 = vld [vmem:[%s11 + $0x28] sm:$0xff]
        %v4008 = vld [vmem:[%s11 + $0x30] sm:$0xff]
        %v4009 = vld [vmem:[%s11 + $0x38] sm:$0xff]
        %v4010 = vld [vmem:[%s12] sm:$0x1]
        %v4012 = vsel %vm3852, %v4001, 0
        %4014 = vmatprep.subr.mxu0 0.0
        %4015 = vmatpush1.msra.mxu0 %v4002
        %4016 = vmatprep.subr.mxu0 0.0
        %4017 = vmatpush1.msra.mxu0 %v4003
        %4018 = vmatprep.subr.mxu0 0.0
        %4019 = vmatpush1.msra.mxu0 %v4004
        %4020 = vmatprep.subr.mxu0 0.0
        %4021 = vmatpush1.msra.mxu0 %v4005
        %4022 = vmatprep.subr.mxu0 0.0
        %4023 = vmatpush1.msra.mxu0 %v4006
        %4024 = vmatprep.subr.mxu0 0.0
        %4025 = vmatpush1.msra.mxu0 %v4007
        %4026 = vmatprep.subr.mxu0 0.0
        %4027 = vmatpush1.msra.mxu0 %v4008
        %4028 = vmatprep.subr.mxu0 0.0
        %4029 = vmatpush1.msra.mxu0 %v4009
        %4030 = vmatprep.subr.mxu0 0.0
        %4031 = vmatpush1.msra.mxu0 0.0
        %4032 = vmatprep.subr.mxu0 0.0
        %4033 = vmatpush1.msra.mxu0 0.0
        %4034 = vmatprep.subr.mxu0 0.0
        %4035 = vmatpush1.msra.mxu0 0.0
        %4036 = vmatprep.subr.mxu0 0.0
        %4037 = vmatpush1.msra.mxu0 0.0
        %4038 = vmatprep.subr.mxu0 0.0
        %4039 = vmatpush1.msra.mxu0 0.0
        %4040 = vmatprep.subr.mxu0 0.0
        %4041 = vmatpush1.msra.mxu0 0.0
        %4042 = vmatprep.subr.mxu0 0.0
        %4043 = vmatpush1.msra.mxu0 0.0
        %4044 = vmatprep.subr.mxu0 0.0
        %4045 = vmatpush1.msra.mxu0 0.0
        %4046 = vmatprep.subr.mxu0 0.0
        %4047 = vmatpush1.msra.mxu0 0.0
        %4048 = vmatprep.subr.mxu0 0.0
        %4049 = vmatpush1.msra.mxu0 0.0
        %4050 = vmatprep.subr.mxu0 0.0
        %4051 = vmatpush1.msra.mxu0 0.0
        %4052 = vmatprep.subr.mxu0 0.0
        %4053 = vmatpush1.msra.mxu0 0.0
        %4054 = vmatprep.subr.mxu0 0.0
        %4055 = vmatpush1.msra.mxu0 0.0
        %4056 = vmatprep.subr.mxu0 0.0
        %4057 = vmatpush1.msra.mxu0 0.0
        %4058 = vmatprep.subr.mxu0 0.0
        %4059 = vmatpush1.msra.mxu0 0.0
        %4060 = vmatprep.subr.mxu0 0.0
        %4061 = vmatpush1.msra.mxu0 0.0
        %4062 = vmatprep.subr.mxu0 0.0
        %4063 = vmatpush1.msra.mxu0 0.0
        %4064 = vmatprep.subr.mxu0 0.0
        %4065 = vmatpush1.msra.mxu0 0.0
        %4066 = vmatprep.subr.mxu0 0.0
        %4067 = vmatpush1.msra.mxu0 0.0
        %4068 = vmatprep.subr.mxu0 0.0
        %4069 = vmatpush1.msra.mxu0 0.0
        %4070 = vmatprep.subr.mxu0 0.0
        %4071 = vmatpush1.msra.mxu0 0.0
        %4072 = vmatprep.subr.mxu0 0.0
        %4073 = vmatpush1.msra.mxu0 0.0
        %4074 = vmatprep.subr.mxu0 0.0
        %4075 = vmatpush1.msra.mxu0 0.0
        %4076 = vmatprep.subr.mxu0 0.0
        %4077 = vmatpush1.msra.mxu0 0.0
        %4078 = vmatprep.mubr.f32.mxu0 0.0
        %4079 = vmatmul.mubr.f32.gmra.mrb[0].mxu0 %v4012
        %v4080 = vpop.f32.mrb[0].mxu0
        %v4081 = vadd.f32 %v4010, %v4080
        %v4082 = vpop.f32.mrb[0].mxu0
        %4083 = vdwg.mxu0
        %vm4084 = vcmp.gt.f32.partialorder %v4081, 0.0
        %v4085 = vmul.f32 %v4081, 0.1
        %v4086 = vsel %vm4084, %v4081, %v4085
        %v4087 = vld [vmem:[%s13] sm:$0xff]
        %v4088 = vld [vmem:[%s13 + $0x8] sm:$0xff]
        %v4089 = vld [vmem:[%s13 + $0x10] sm:$0xff]
        %v4090 = vld [vmem:[%s13 + $0x18] sm:$0xff]
        %v4091 = vld [vmem:[%s14] sm:$0x1]
        %v4093 = vsel %vm517, %v4086, 0
        %4095 = vmatprep.subr.mxu0 0.0
        %4096 = vmatpush1.msra.mxu0 %v4087
        %4097 = vmatprep.subr.mxu0 0.0
        %4098 = vmatpush1.msra.mxu0 %v4088
        %4099 = vmatprep.subr.mxu0 0.0
        %4100 = vmatpush1.msra.mxu0 %v4089
        %4101 = vmatprep.subr.mxu0 0.0
        %4102 = vmatpush1.msra.mxu0 %v4090
        %4103 = vmatprep.subr.mxu0 0.0
        %4104 = vmatpush1.msra.mxu0 0.0
        %4105 = vmatprep.subr.mxu0 0.0
        %4106 = vmatpush1.msra.mxu0 0.0
        %4107 = vmatprep.subr.mxu0 0.0
        %4108 = vmatpush1.msra.mxu0 0.0
        %4109 = vmatprep.subr.mxu0 0.0
        %4110 = vmatpush1.msra.mxu0 0.0
        %4111 = vmatprep.subr.mxu0 0.0
        %4112 = vmatpush1.msra.mxu0 0.0
        %4113 = vmatprep.subr.mxu0 0.0
        %4114 = vmatpush1.msra.mxu0 0.0
        %4115 = vmatprep.subr.mxu0 0.0
        %4116 = vmatpush1.msra.mxu0 0.0
        %4117 = vmatprep.subr.mxu0 0.0
        %4118 = vmatpush1.msra.mxu0 0.0
        %4119 = vmatprep.subr.mxu0 0.0
        %4120 = vmatpush1.msra.mxu0 0.0
        %4121 = vmatprep.subr.mxu0 0.0
        %4122 = vmatpush1.msra.mxu0 0.0
        %4123 = vmatprep.subr.mxu0 0.0
        %4124 = vmatpush1.msra.mxu0 0.0
        %4125 = vmatprep.subr.mxu0 0.0
        %4126 = vmatpush1.msra.mxu0 0.0
        %4127 = vmatprep.subr.mxu0 0.0
        %4128 = vmatpush1.msra.mxu0 0.0
        %4129 = vmatprep.subr.mxu0 0.0
        %4130 = vmatpush1.msra.mxu0 0.0
        %4131 = vmatprep.subr.mxu0 0.0
        %4132 = vmatpush1.msra.mxu0 0.0
        %4133 = vmatprep.subr.mxu0 0.0
        %4134 = vmatpush1.msra.mxu0 0.0
        %4135 = vmatprep.subr.mxu0 0.0
        %4136 = vmatpush1.msra.mxu0 0.0
        %4137 = vmatprep.subr.mxu0 0.0
        %4138 = vmatpush1.msra.mxu0 0.0
        %4139 = vmatprep.subr.mxu0 0.0
        %4140 = vmatpush1.msra.mxu0 0.0
        %4141 = vmatprep.subr.mxu0 0.0
        %4142 = vmatpush1.msra.mxu0 0.0
        %4143 = vmatprep.subr.mxu0 0.0
        %4144 = vmatpush1.msra.mxu0 0.0
        %4145 = vmatprep.subr.mxu0 0.0
        %4146 = vmatpush1.msra.mxu0 0.0
        %4147 = vmatprep.subr.mxu0 0.0
        %4148 = vmatpush1.msra.mxu0 0.0
        %4149 = vmatprep.subr.mxu0 0.0
        %4150 = vmatpush1.msra.mxu0 0.0
        %4151 = vmatprep.subr.mxu0 0.0
        %4152 = vmatpush1.msra.mxu0 0.0
        %4153 = vmatprep.subr.mxu0 0.0
        %4154 = vmatpush1.msra.mxu0 0.0
        %4155 = vmatprep.subr.mxu0 0.0
        %4156 = vmatpush1.msra.mxu0 0.0
        %4157 = vmatprep.subr.mxu0 0.0
        %4158 = vmatpush1.msra.mxu0 0.0
        %4159 = vmatprep.mubr.f32.mxu0 0.0
        %4160 = vmatmul.mubr.f32.gmra.mrb[0].mxu0 %v4093
        %v4161 = vpop.f32.mrb[0].mxu0
        %v4162 = vadd.f32 %v4091, %v4161
        %v4163 = vpop.f32.mrb[0].mxu0
        %4164 = vdwg.mxu0
        %vm4165 = vcmask 8192
        %v4166 = vsel %vm4165, %v4162, -inf
        %4167 = vmax.xlane.f32.xlu0 %v4166
        %v4168 = vpop.xlane.xlu0 %4167
        %v4169 = vsub.f32 %v4162, %v4168
        %v4170 = vmul.f32 %v4169, 1.442695
        %v4171 = vpow.pop %v4170
        %v4172 = vsel %vm4165, %v4171, 0.0
        %4173 = vadd.xlane.f32.xlu0 %v4172
        %v4174 = vpop.xlane.xlu0 %4173
        %v4175 = vlog2.pop %v4174
        %v4176 = vmul.f32 %v4175, 0.6931472
        %v4177 = vadd.f32 %v4168, %v4176
        %v4178 = vsub.f32 %v4162, %v4177
        %4179 = vst.msk [vmem:[%s486] sm:$0x1] %vm4165, %v4178
        %s4180 = sand.u32 %s357, 1
        %s4181 = scalar_lea.sflag [#allocation6], %s4180
        %s4182 = sand.u32 %s357, 1
        %s4183 = scalar_lea.vmem [#allocation5], %s4182
        // Predicated region
        $region81: #{forward.1} parent=79 // pred_check
          %p4184 = pneg %p367
        $region82: #{forward.1} parent=79 // pred_check_branch
          %4186 = sbr.rel (%p4184) target = $region84
        $region83: #{forward.1} parent=79 // pred_region
          %s4188 = ssub.s32 16, 16
          %4189 = vsyncadd %s4181, %s4188
          %s4190 = smul.addr %s29, 16
          %s4191 = scalar_lea.hbm %s15, %s4190
          %s4193 = sshll.u32 %s4183, 4
          %s4194 = int_to_ptr.vmem [resolvable:$true] %s4193
          %4196 = dma.vmem_to_hbm [thread:$0]  %s4194, 16, %s4191, %s4181
        $region84: #{forward.1} parent=79 // pred_fallthru
          _
      $region80: #{forward.1} parent=5 // pred_fallthru
        _
      %p4197 = scmp.le.s32.totalorder 2, %s24
      // Predicated region
      $region85: #{forward.1} parent=5 // pred_check
        %p4198 = pneg %p4197
      $region86: #{forward.1} parent=5 // pred_check_branch
        %4200 = sbr.rel (%p4198) target = $region88
      $region87: #{forward.1} parent=5 // pred_region
        %s4201 = ssub.s32 %s24, 2
        // Predicated region
        $region89: #{forward.1} parent=87 // pred_check
          %p4202 = pneg %p373
        $region90: #{forward.1} parent=87 // pred_check_branch
          %4204 = sbr.rel (%p4202) target = $region92
        $region91: #{forward.1} parent=87 // pred_region
          %s4205 = sand.u32 %s358, 1
          %s4206 = scalar_lea.sflag [#allocation6], %s4205
          %s4207 = sand.u32 %s358, 1
          %s4208 = scalar_lea.vmem [#allocation5], %s4207
          %4209 = dma.done %s4206, 16
        $region92: #{forward.1} parent=87 // pred_fallthru
          _
      $region88: #{forward.1} parent=5 // pred_fallthru
        _
    $region6: #{forward.1} parent=1 // loop_footer
      %s28 = sadd.s32 1, %s24
    $region7: #{forward.1} parent=1 // loop_footer_branch
      %23 = sbr.rel target = $region3
    $region8: #{forward.1} parent=1 // loop_exit
      _
    %4210 = vsyncpa [#allocation6], 1
    %s4211 = scalar_lea.sflag [#allocation6], 1
    %4212 = vsyncpa %s4211, 1

</llo_original>
